<compile_context>
chip_gen: v5e
topology: v5e:2x2
jax: 0.10.0
libtpu: 0.0.40
codegen_flags: <defaults>
</compile_context>

<pallas_src>
import jax
import jax.numpy as jnp
from jax.experimental import pallas as pl
from jax.experimental.pallas import tpu as pltpu

WIDTH = 32
HID = WIDTH // 4          # 8
DEPTH = 4
NUM_CONVS = 3
LANE = 128


def _round_up(v, m):
    return (v + m - 1) // m * m


def gnn_kernel(x0_ref, ea_ref, gt_ref, st_ref, invdeg_ref,
               fc1w_ref, fc1b_ref,
               k1w_ref, k1b_ref, k2w_ref, k2b_ref, root_ref, bias_ref,
               fc2w_ref, fc2b_ref,
               out_ref,
               w_scr):
    f32 = jnp.float32
    bf16 = jnp.bfloat16

    # ---- x = fc1(x0), transposed: [W, Npad] ---------------------------------
    x = (jnp.dot(fc1w_ref[...], x0_ref[...], preferred_element_type=f32)
         + fc1b_ref[...])

    # ---- edge MLP: computed ONCE per conv layer (depth-invariant) -----------
    ea = ea_ref[...]                                                  # [3, Epad]
    for l in range(NUM_CONVS):
        h = jnp.maximum(
            jnp.dot(k1w_ref[l], ea, preferred_element_type=f32) + k1b_ref[l],
            0.0)                                                      # [HID, Epad]
        w_scr[l] = (jnp.dot(k2w_ref[l], h, preferred_element_type=f32)
                    + k2b_ref[l])                                     # [W, Epad]

    # ---- depth x conv loop, fully unrolled (12 small layers) ----------------
    for _ in range(DEPTH):
        for l in range(NUM_CONVS):
            xb = x.astype(bf16)                                       # one cast / layer
            # gather x[src] via exact 0/1 bf16 one-hot matmul (f32 accumulate)
            xj = jnp.dot(xb, gt_ref[...], preferred_element_type=f32)  # [W, Epad]
            m = (w_scr[l] * xj).astype(bf16)                           # diagonal msgs
            # scatter-sum over dst + mean (1/deg applied in f32)
            agg = (jnp.dot(m, st_ref[...], preferred_element_type=f32)
                   * invdeg_ref[...])                                  # [W, Npad]
            x = jnp.maximum(
                agg
                + jnp.dot(root_ref[l], x, preferred_element_type=f32)
                + bias_ref[l],
                0.0)

    # ---- fc2, lane-dense [1, Npad] output ------------------------------------
    out_ref[...] = (jnp.dot(fc2w_ref[...], x, preferred_element_type=f32)
                    + fc2b_ref[...])


def net_mp_diag3_forward(x, edge_index, edge_attr, params):
    f32 = jnp.float32
    bf16 = jnp.bfloat16
    N = x.shape[0]
    E = edge_attr.shape[0]
    Npad = _round_up(N, LANE)
    Epad = _round_up(E, LANE)
    src = edge_index[0]
    dst = edge_index[1]

    # ---- index glue (plain JAX): transposed / padded inputs ------------------
    x0T = jnp.zeros((3, Npad), f32).at[:, :N].set(x.T)
    eaT = jnp.zeros((3, Epad), f32).at[:, :E].set(edge_attr.T)

    e_ids = jnp.arange(E)
    # gather matrix:  Gt[n, e] = 1  iff src[e] == n   (exact 0/1 in bf16)
    Gt = jnp.zeros((Npad, Epad), bf16).at[src, e_ids].set(1.0)
    # scatter matrix: St[e, n] = 1  iff dst[e] == n   (exact 0/1 in bf16)
    St = jnp.zeros((Epad, Npad), bf16).at[e_ids, dst].set(1.0)
    deg = jnp.zeros((Npad,), f32).at[dst].add(1.0)
    inv_deg = (1.0 / jnp.maximum(deg, 1.0))[None, :]                  # [1, Npad]

    # ---- per-layer parameter stacks (3 layers, NO depth duplication) --------
    def tr(p):     # [3, a, b] -> [3, b, a]
        return jnp.transpose(p, (0, 2, 1))

    k1w = tr(params["k1_w"])       # [3, 8, 3]
    k1b = tr(params["k1_b"])       # [3, 8, 1]
    k2w = tr(params["k2_w"])       # [3, 32, 8]
    k2b = tr(params["k2_b"])       # [3, 32, 1]
    root = tr(params["root"])      # [3, 32, 32]  (= root.T per layer)
    bias = tr(params["bias"])      # [3, 32, 1]

    fc1wT = params["fc1_w"].T      # [32, 3]
    fc1bT = params["fc1_b"].T      # [32, 1]
    fc2wT = params["fc2_w"].T      # [1, 32]
    fc2b = params["fc2_b"]         # [1, 1]

    # ---- advisory cost estimate (single-pass / resident Gt & St) -------------
    n_layers = DEPTH * NUM_CONVS
    flops = (2 * WIDTH * 3 * Npad                                   # fc1
             + NUM_CONVS * 2 * (HID * 3 + WIDTH * HID) * Epad       # edge MLP (3x only)
             + n_layers * (4 * WIDTH * Npad * Epad                  # gather + scatter
                           + 2 * WIDTH * WIDTH * Npad)              # root matmul
             + 2 * WIDTH * Npad)                                    # fc2
    bytes_accessed = (2 * Npad * Epad * 2                           # Gt + St (once!)
                      + (3 * Epad + 3 * Npad + Npad + Npad) * 4     # eaT, x0T, invdeg, out
                      + (WIDTH * 3 + WIDTH
                         + NUM_CONVS * (HID * 3 + HID + WIDTH * HID + WIDTH
                                        + WIDTH * WIDTH + WIDTH)
                         + WIDTH + 1) * 4)
    cost = pl.CostEstimate(flops=int(flops), transcendentals=0,
                           bytes_accessed=int(bytes_accessed))

    vmem_space = pltpu.MemorySpace.VMEM
    n_inputs = 15

    out = pl.pallas_call(
        gnn_kernel,
        out_shape=jax.ShapeDtypeStruct((1, Npad), f32),
        in_specs=[pl.BlockSpec(memory_space=vmem_space)] * n_inputs,
        out_specs=pl.BlockSpec(memory_space=vmem_space),
        scratch_shapes=[pltpu.VMEM((NUM_CONVS, WIDTH, Epad), f32)],  # edge-MLP cache
        compiler_params=pltpu.CompilerParams(
            # 48 MiB: safe on v7x (64 MiB physical), comfortably within
            # v5e/v6e's 128 MiB; the shipped problem uses <1 MiB.
            vmem_limit_bytes=48 * 1024 * 1024),
        cost_estimate=cost,
    )(x0T, eaT, Gt, St, inv_deg,
      fc1wT, fc1bT, k1w, k1b, k2w, k2b, root, bias, fc2wT, fc2b)

    return out[0, :N][:, None]                                       # [N, 1]


def init_params(key):
    """Deterministic init mimicking torch.nn.Linear (uniform +-1/sqrt(fan_in))."""
    ks = jax.random.split(key, 32)
    it = iter(ks)

    def lin(kin, kout):
        bound = 1.0 / jnp.sqrt(jnp.float32(kin))
        w = jax.random.uniform(next(it), (kin, kout), jnp.float32, -bound, bound)
        b = jax.random.uniform(next(it), (1, kout), jnp.float32, -bound, bound)
        return w, b

    fc1_w, fc1_b = lin(3, WIDTH)
    fc2_w, fc2_b = lin(WIDTH, 1)

    k1_w, k1_b, k2_w, k2_b, root, bias = [], [], [], [], [], []
    for _ in range(NUM_CONVS):
        w1, b1 = lin(3, HID)
        w2, b2 = lin(HID, WIDTH)
        bound = 1.0 / jnp.sqrt(jnp.float32(WIDTH))
        r = jax.random.uniform(next(it), (WIDTH, WIDTH), jnp.float32, -bound, bound)
        bb = jax.random.uniform(next(it), (1, WIDTH), jnp.float32, -bound, bound)
        k1_w.append(w1); k1_b.append(b1); k2_w.append(w2); k2_b.append(b2)
        root.append(r); bias.append(bb)

    return dict(
        fc1_w=fc1_w, fc1_b=fc1_b,
        k1_w=jnp.stack(k1_w), k1_b=jnp.stack(k1_b),
        k2_w=jnp.stack(k2_w), k2_b=jnp.stack(k2_b),
        root=jnp.stack(root), bias=jnp.stack(bias),
        fc2_w=fc2_w, fc2_b=fc2_b,
    )


def reference_forward(x, edge_index, edge_attr, params):
    """Pure-JAX f32 reference (scatter-based) for correctness checking."""
    N = x.shape[0]
    src, dst = edge_index[0], edge_index[1]
    x = x @ params["fc1_w"] + params["fc1_b"][0]
    for _ in range(DEPTH):
        for l in range(NUM_CONVS):
            h = jnp.maximum(edge_attr @ params["k1_w"][l] + params["k1_b"][l, 0], 0.0)
            w = h @ params["k2_w"][l] + params["k2_b"][l, 0]
            m = w * x[src]
            s = jnp.zeros((N, WIDTH), jnp.float32).at[dst].add(m)
            cnt = jnp.zeros((N,), jnp.float32).at[dst].add(1.0)
            agg = s / jnp.maximum(cnt, 1.0)[:, None]
            x = jnp.maximum(agg + x @ params["root"][l] + params["bias"][l, 0], 0.0)
    return x @ params["fc2_w"] + params["fc2_b"][0]


if __name__ == "__main__":
    key = jax.random.PRNGKey(0)
    k_x, k_ei, k_ea, k_p = jax.random.split(key, 4)

    N_NODES = 64          # graph nodes (small synthetic graph)
    N_EDGES = 256         # directed edges

    x = jax.random.normal(k_x, (N_NODES, 3), jnp.float32)           # node features
    edge_index = jax.random.randint(k_ei, (2, N_EDGES), 0, N_NODES, jnp.int32)
    edge_attr = jax.random.normal(k_ea, (N_EDGES, 3), jnp.float32)  # edge features
    params = init_params(k_p)

    out = net_mp_diag3_forward(x, edge_index, edge_attr, params)
    out = jax.block_until_ready(out)

    ref = reference_forward(x, edge_index, edge_attr, params)
    assert out.shape == (N_NODES, 1)
    # bf16 operands on the gather/scatter matmuls (f32 accumulation, exact 0/1
    # one-hots, f32 1/deg) round only the aggregated-message path -> loose-ish
    # tolerance vs the pure-f32 reference over 12 conv layers.
    assert jnp.allclose(out, ref, rtol=5e-2, atol=5e-2), "Pallas output mismatch vs reference"

    print("KERNEL_OK")
</pallas_src>

<mosaic_0001>
module attributes {stable_mosaic.version = 11 : i64} {
  func.func @gnn_kernel(%arg0: memref<3x128xf32, #tpu.memory_space<vmem>>, %arg1: memref<3x256xf32, #tpu.memory_space<vmem>>, %arg2: memref<128x256xbf16, #tpu.memory_space<vmem>>, %arg3: memref<256x128xbf16, #tpu.memory_space<vmem>>, %arg4: memref<1x128xf32, #tpu.memory_space<vmem>>, %arg5: memref<32x3xf32, #tpu.memory_space<vmem>>, %arg6: memref<32x1xf32, #tpu.memory_space<vmem>>, %arg7: memref<3x8x3xf32, #tpu.memory_space<vmem>>, %arg8: memref<3x8x1xf32, #tpu.memory_space<vmem>>, %arg9: memref<3x32x8xf32, #tpu.memory_space<vmem>>, %arg10: memref<3x32x1xf32, #tpu.memory_space<vmem>>, %arg11: memref<3x32x32xf32, #tpu.memory_space<vmem>>, %arg12: memref<3x32x1xf32, #tpu.memory_space<vmem>>, %arg13: memref<1x32xf32, #tpu.memory_space<vmem>>, %arg14: memref<1x1xf32, #tpu.memory_space<vmem>>, %arg15: memref<1x128xf32, #tpu.memory_space<vmem>>, %arg16: memref<3x32x256xf32, #tpu.memory_space<vmem>>) attributes {dimension_semantics = [], scalar_prefetch = 0 : i64, scratch_operands = 1 : i64, tpu.core_type = #tpu.core_type<tc>} {
    %c0 = arith.constant 0 : index
    %c0_0 = arith.constant 0 : index
    %0 = vector.load %arg5[%c0, %c0_0] : memref<32x3xf32, #tpu.memory_space<vmem>>, vector<32x3xf32>
    %c0_1 = arith.constant 0 : index
    %c0_2 = arith.constant 0 : index
    %1 = vector.load %arg0[%c0_1, %c0_2] : memref<3x128xf32, #tpu.memory_space<vmem>>, vector<3x128xf32>
    %cst = arith.constant dense<0.000000e+00> : vector<32x128xf32>
    %2 = tpu.matmul %0, %1, %cst {dimension_numbers = #tpu.dot_dimension_numbers<[1], [0], [0], [1], [0, 0, 1, 1], [], []>} : vector<32x3xf32>, vector<3x128xf32>, vector<32x128xf32> -> vector<32x128xf32>
    %c0_3 = arith.constant 0 : index
    %c0_4 = arith.constant 0 : index
    %3 = vector.load %arg6[%c0_3, %c0_4] : memref<32x1xf32, #tpu.memory_space<vmem>>, vector<32x1xf32>
    %4 = vector.broadcast %3 : vector<32x1xf32> to vector<32x128xf32>
    %5 = arith.addf %2, %4 : vector<32x128xf32>
    %c0_5 = arith.constant 0 : index
    %c0_6 = arith.constant 0 : index
    %6 = vector.load %arg1[%c0_5, %c0_6] : memref<3x256xf32, #tpu.memory_space<vmem>>, vector<3x256xf32>
    %c0_7 = arith.constant 0 : index
    %c0_8 = arith.constant 0 : index
    %c0_9 = arith.constant 0 : index
    %7 = vector.load %arg7[%c0_7, %c0_8, %c0_9] : memref<3x8x3xf32, #tpu.memory_space<vmem>>, vector<1x8x3xf32>
    %8 = vector.shape_cast %7 : vector<1x8x3xf32> to vector<8x3xf32>
    %cst_10 = arith.constant dense<0.000000e+00> : vector<8x256xf32>
    %9 = tpu.matmul %8, %6, %cst_10 {dimension_numbers = #tpu.dot_dimension_numbers<[1], [0], [0], [1], [0, 0, 1, 1], [], []>} : vector<8x3xf32>, vector<3x256xf32>, vector<8x256xf32> -> vector<8x256xf32>
    %c0_11 = arith.constant 0 : index
    %c0_12 = arith.constant 0 : index
    %c0_13 = arith.constant 0 : index
    %10 = vector.load %arg8[%c0_11, %c0_12, %c0_13] : memref<3x8x1xf32, #tpu.memory_space<vmem>>, vector<1x8x1xf32>
    %11 = vector.shape_cast %10 : vector<1x8x1xf32> to vector<8x1xf32>
    %12 = vector.broadcast %11 : vector<8x1xf32> to vector<8x256xf32>
    %13 = arith.addf %9, %12 : vector<8x256xf32>
    %cst_14 = arith.constant 0.000000e+00 : f32
    %14 = vector.broadcast %cst_14 : f32 to vector<8x256xf32>
    %15 = arith.maximumf %13, %14 : vector<8x256xf32>
    %c0_15 = arith.constant 0 : index
    %c0_16 = arith.constant 0 : index
    %c0_17 = arith.constant 0 : index
    %16 = vector.load %arg9[%c0_15, %c0_16, %c0_17] : memref<3x32x8xf32, #tpu.memory_space<vmem>>, vector<1x32x8xf32>
    %17 = vector.shape_cast %16 : vector<1x32x8xf32> to vector<32x8xf32>
    %cst_18 = arith.constant dense<0.000000e+00> : vector<32x256xf32>
    %18 = tpu.matmul %17, %15, %cst_18 {dimension_numbers = #tpu.dot_dimension_numbers<[1], [0], [0], [1], [0, 0, 1, 1], [], []>} : vector<32x8xf32>, vector<8x256xf32>, vector<32x256xf32> -> vector<32x256xf32>
    %c0_19 = arith.constant 0 : index
    %c0_20 = arith.constant 0 : index
    %c0_21 = arith.constant 0 : index
    %19 = vector.load %arg10[%c0_19, %c0_20, %c0_21] : memref<3x32x1xf32, #tpu.memory_space<vmem>>, vector<1x32x1xf32>
    %20 = vector.shape_cast %19 : vector<1x32x1xf32> to vector<32x1xf32>
    %21 = vector.broadcast %20 : vector<32x1xf32> to vector<32x256xf32>
    %22 = arith.addf %18, %21 : vector<32x256xf32>
    %c0_22 = arith.constant 0 : index
    %c0_23 = arith.constant 0 : index
    %c0_24 = arith.constant 0 : index
    %23 = vector.load %arg16[%c0_22, %c0_23, %c0_24] : memref<3x32x256xf32, #tpu.memory_space<vmem>>, vector<1x32x256xf32>
    %24 = vector.shape_cast %23 : vector<1x32x256xf32> to vector<32x256xf32>
    %25 = vector.shape_cast %22 : vector<32x256xf32> to vector<1x32x256xf32>
    tpu.vector_store %arg16[%c0_22, %c0_23, %c0_24], %25 {strides = array<i32>} : memref<3x32x256xf32, #tpu.memory_space<vmem>>, vector<1x32x256xf32>,
    %c1 = arith.constant 1 : index
    %c0_25 = arith.constant 0 : index
    %c0_26 = arith.constant 0 : index
    %26 = vector.load %arg7[%c1, %c0_25, %c0_26] : memref<3x8x3xf32, #tpu.memory_space<vmem>>, vector<1x8x3xf32>
    %27 = vector.shape_cast %26 : vector<1x8x3xf32> to vector<8x3xf32>
    %cst_27 = arith.constant dense<0.000000e+00> : vector<8x256xf32>
    %28 = tpu.matmul %27, %6, %cst_27 {dimension_numbers = #tpu.dot_dimension_numbers<[1], [0], [0], [1], [0, 0, 1, 1], [], []>} : vector<8x3xf32>, vector<3x256xf32>, vector<8x256xf32> -> vector<8x256xf32>
    %c1_28 = arith.constant 1 : index
    %c0_29 = arith.constant 0 : index
    %c0_30 = arith.constant 0 : index
    %29 = vector.load %arg8[%c1_28, %c0_29, %c0_30] : memref<3x8x1xf32, #tpu.memory_space<vmem>>, vector<1x8x1xf32>
    %30 = vector.shape_cast %29 : vector<1x8x1xf32> to vector<8x1xf32>
    %31 = vector.broadcast %30 : vector<8x1xf32> to vector<8x256xf32>
    %32 = arith.addf %28, %31 : vector<8x256xf32>
    %cst_31 = arith.constant 0.000000e+00 : f32
    %33 = vector.broadcast %cst_31 : f32 to vector<8x256xf32>
    %34 = arith.maximumf %32, %33 : vector<8x256xf32>
    %c1_32 = arith.constant 1 : index
    %c0_33 = arith.constant 0 : index
    %c0_34 = arith.constant 0 : index
    %35 = vector.load %arg9[%c1_32, %c0_33, %c0_34] : memref<3x32x8xf32, #tpu.memory_space<vmem>>, vector<1x32x8xf32>
    %36 = vector.shape_cast %35 : vector<1x32x8xf32> to vector<32x8xf32>
    %cst_35 = arith.constant dense<0.000000e+00> : vector<32x256xf32>
    %37 = tpu.matmul %36, %34, %cst_35 {dimension_numbers = #tpu.dot_dimension_numbers<[1], [0], [0], [1], [0, 0, 1, 1], [], []>} : vector<32x8xf32>, vector<8x256xf32>, vector<32x256xf32> -> vector<32x256xf32>
    %c1_36 = arith.constant 1 : index
    %c0_37 = arith.constant 0 : index
    %c0_38 = arith.constant 0 : index
    %38 = vector.load %arg10[%c1_36, %c0_37, %c0_38] : memref<3x32x1xf32, #tpu.memory_space<vmem>>, vector<1x32x1xf32>
    %39 = vector.shape_cast %38 : vector<1x32x1xf32> to vector<32x1xf32>
    %40 = vector.broadcast %39 : vector<32x1xf32> to vector<32x256xf32>
    %41 = arith.addf %37, %40 : vector<32x256xf32>
    %c1_39 = arith.constant 1 : index
    %c0_40 = arith.constant 0 : index
    %c0_41 = arith.constant 0 : index
    %42 = vector.load %arg16[%c1_39, %c0_40, %c0_41] : memref<3x32x256xf32, #tpu.memory_space<vmem>>, vector<1x32x256xf32>
    %43 = vector.shape_cast %42 : vector<1x32x256xf32> to vector<32x256xf32>
    %44 = vector.shape_cast %41 : vector<32x256xf32> to vector<1x32x256xf32>
    tpu.vector_store %arg16[%c1_39, %c0_40, %c0_41], %44 {strides = array<i32>} : memref<3x32x256xf32, #tpu.memory_space<vmem>>, vector<1x32x256xf32>,
    %c2 = arith.constant 2 : index
    %c0_42 = arith.constant 0 : index
    %c0_43 = arith.constant 0 : index
    %45 = vector.load %arg7[%c2, %c0_42, %c0_43] : memref<3x8x3xf32, #tpu.memory_space<vmem>>, vector<1x8x3xf32>
    %46 = vector.shape_cast %45 : vector<1x8x3xf32> to vector<8x3xf32>
    %cst_44 = arith.constant dense<0.000000e+00> : vector<8x256xf32>
    %47 = tpu.matmul %46, %6, %cst_44 {dimension_numbers = #tpu.dot_dimension_numbers<[1], [0], [0], [1], [0, 0, 1, 1], [], []>} : vector<8x3xf32>, vector<3x256xf32>, vector<8x256xf32> -> vector<8x256xf32>
    %c2_45 = arith.constant 2 : index
    %c0_46 = arith.constant 0 : index
    %c0_47 = arith.constant 0 : index
    %48 = vector.load %arg8[%c2_45, %c0_46, %c0_47] : memref<3x8x1xf32, #tpu.memory_space<vmem>>, vector<1x8x1xf32>
    %49 = vector.shape_cast %48 : vector<1x8x1xf32> to vector<8x1xf32>
    %50 = vector.broadcast %49 : vector<8x1xf32> to vector<8x256xf32>
    %51 = arith.addf %47, %50 : vector<8x256xf32>
    %cst_48 = arith.constant 0.000000e+00 : f32
    %52 = vector.broadcast %cst_48 : f32 to vector<8x256xf32>
    %53 = arith.maximumf %51, %52 : vector<8x256xf32>
    %c2_49 = arith.constant 2 : index
    %c0_50 = arith.constant 0 : index
    %c0_51 = arith.constant 0 : index
    %54 = vector.load %arg9[%c2_49, %c0_50, %c0_51] : memref<3x32x8xf32, #tpu.memory_space<vmem>>, vector<1x32x8xf32>
    %55 = vector.shape_cast %54 : vector<1x32x8xf32> to vector<32x8xf32>
    %cst_52 = arith.constant dense<0.000000e+00> : vector<32x256xf32>
    %56 = tpu.matmul %55, %53, %cst_52 {dimension_numbers = #tpu.dot_dimension_numbers<[1], [0], [0], [1], [0, 0, 1, 1], [], []>} : vector<32x8xf32>, vector<8x256xf32>, vector<32x256xf32> -> vector<32x256xf32>
    %c2_53 = arith.constant 2 : index
    %c0_54 = arith.constant 0 : index
    %c0_55 = arith.constant 0 : index
    %57 = vector.load %arg10[%c2_53, %c0_54, %c0_55] : memref<3x32x1xf32, #tpu.memory_space<vmem>>, vector<1x32x1xf32>
    %58 = vector.shape_cast %57 : vector<1x32x1xf32> to vector<32x1xf32>
    %59 = vector.broadcast %58 : vector<32x1xf32> to vector<32x256xf32>
    %60 = arith.addf %56, %59 : vector<32x256xf32>
    %c2_56 = arith.constant 2 : index
    %c0_57 = arith.constant 0 : index
    %c0_58 = arith.constant 0 : index
    %61 = vector.load %arg16[%c2_56, %c0_57, %c0_58] : memref<3x32x256xf32, #tpu.memory_space<vmem>>, vector<1x32x256xf32>
    %62 = vector.shape_cast %61 : vector<1x32x256xf32> to vector<32x256xf32>
    %63 = vector.shape_cast %60 : vector<32x256xf32> to vector<1x32x256xf32>
    tpu.vector_store %arg16[%c2_56, %c0_57, %c0_58], %63 {strides = array<i32>} : memref<3x32x256xf32, #tpu.memory_space<vmem>>, vector<1x32x256xf32>,
    %64 = arith.truncf %5 : vector<32x128xf32> to vector<32x128xbf16>
    %c0_59 = arith.constant 0 : index
    %c0_60 = arith.constant 0 : index
    %65 = vector.load %arg2[%c0_59, %c0_60] : memref<128x256xbf16, #tpu.memory_space<vmem>>, vector<128x256xbf16>
    %cst_61 = arith.constant dense<0.000000e+00> : vector<32x256xf32>
    %66 = tpu.matmul %64, %65, %cst_61 {dimension_numbers = #tpu.dot_dimension_numbers<[1], [0], [0], [1], [0, 0, 1, 1], [], []>} : vector<32x128xbf16>, vector<128x256xbf16>, vector<32x256xf32> -> vector<32x256xf32>
    %c0_62 = arith.constant 0 : index
    %c0_63 = arith.constant 0 : index
    %c0_64 = arith.constant 0 : index
    %67 = vector.load %arg16[%c0_62, %c0_63, %c0_64] : memref<3x32x256xf32, #tpu.memory_space<vmem>>, vector<1x32x256xf32>
    %68 = vector.shape_cast %67 : vector<1x32x256xf32> to vector<32x256xf32>
    %69 = arith.mulf %68, %66 : vector<32x256xf32>
    %70 = arith.truncf %69 : vector<32x256xf32> to vector<32x256xbf16>
    %c0_65 = arith.constant 0 : index
    %c0_66 = arith.constant 0 : index
    %71 = vector.load %arg3[%c0_65, %c0_66] : memref<256x128xbf16, #tpu.memory_space<vmem>>, vector<256x128xbf16>
    %cst_67 = arith.constant dense<0.000000e+00> : vector<32x128xf32>
    %72 = tpu.matmul %70, %71, %cst_67 {dimension_numbers = #tpu.dot_dimension_numbers<[1], [0], [0], [1], [0, 0, 1, 1], [], []>} : vector<32x256xbf16>, vector<256x128xbf16>, vector<32x128xf32> -> vector<32x128xf32>
    %c0_68 = arith.constant 0 : index
    %c0_69 = arith.constant 0 : index
    %73 = vector.load %arg4[%c0_68, %c0_69] : memref<1x128xf32, #tpu.memory_space<vmem>>, vector<1x128xf32>
    %74 = vector.broadcast %73 : vector<1x128xf32> to vector<32x128xf32>
    %75 = arith.mulf %72, %74 : vector<32x128xf32>
    %c0_70 = arith.constant 0 : index
    %c0_71 = arith.constant 0 : index
    %c0_72 = arith.constant 0 : index
    %76 = vector.load %arg11[%c0_70, %c0_71, %c0_72] : memref<3x32x32xf32, #tpu.memory_space<vmem>>, vector<1x32x32xf32>
    %77 = vector.shape_cast %76 : vector<1x32x32xf32> to vector<32x32xf32>
    %cst_73 = arith.constant dense<0.000000e+00> : vector<32x128xf32>
    %78 = tpu.matmul %77, %5, %cst_73 {dimension_numbers = #tpu.dot_dimension_numbers<[1], [0], [0], [1], [0, 0, 1, 1], [], []>} : vector<32x32xf32>, vector<32x128xf32>, vector<32x128xf32> -> vector<32x128xf32>
    %79 = arith.addf %75, %78 : vector<32x128xf32>
    %c0_74 = arith.constant 0 : index
    %c0_75 = arith.constant 0 : index
    %c0_76 = arith.constant 0 : index
    %80 = vector.load %arg12[%c0_74, %c0_75, %c0_76] : memref<3x32x1xf32, #tpu.memory_space<vmem>>, vector<1x32x1xf32>
    %81 = vector.shape_cast %80 : vector<1x32x1xf32> to vector<32x1xf32>
    %82 = vector.broadcast %81 : vector<32x1xf32> to vector<32x128xf32>
    %83 = arith.addf %79, %82 : vector<32x128xf32>
    %cst_77 = arith.constant 0.000000e+00 : f32
    %84 = vector.broadcast %cst_77 : f32 to vector<32x128xf32>
    %85 = arith.maximumf %83, %84 : vector<32x128xf32>
    %86 = arith.truncf %85 : vector<32x128xf32> to vector<32x128xbf16>
    %c0_78 = arith.constant 0 : index
    %c0_79 = arith.constant 0 : index
    %87 = vector.load %arg2[%c0_78, %c0_79] : memref<128x256xbf16, #tpu.memory_space<vmem>>, vector<128x256xbf16>
    %cst_80 = arith.constant dense<0.000000e+00> : vector<32x256xf32>
    %88 = tpu.matmul %86, %87, %cst_80 {dimension_numbers = #tpu.dot_dimension_numbers<[1], [0], [0], [1], [0, 0, 1, 1], [], []>} : vector<32x128xbf16>, vector<128x256xbf16>, vector<32x256xf32> -> vector<32x256xf32>
    %c1_81 = arith.constant 1 : index
    %c0_82 = arith.constant 0 : index
    %c0_83 = arith.constant 0 : index
    %89 = vector.load %arg16[%c1_81, %c0_82, %c0_83] : memref<3x32x256xf32, #tpu.memory_space<vmem>>, vector<1x32x256xf32>
    %90 = vector.shape_cast %89 : vector<1x32x256xf32> to vector<32x256xf32>
    %91 = arith.mulf %90, %88 : vector<32x256xf32>
    %92 = arith.truncf %91 : vector<32x256xf32> to vector<32x256xbf16>
    %c0_84 = arith.constant 0 : index
    %c0_85 = arith.constant 0 : index
    %93 = vector.load %arg3[%c0_84, %c0_85] : memref<256x128xbf16, #tpu.memory_space<vmem>>, vector<256x128xbf16>
    %cst_86 = arith.constant dense<0.000000e+00> : vector<32x128xf32>
    %94 = tpu.matmul %92, %93, %cst_86 {dimension_numbers = #tpu.dot_dimension_numbers<[1], [0], [0], [1], [0, 0, 1, 1], [], []>} : vector<32x256xbf16>, vector<256x128xbf16>, vector<32x128xf32> -> vector<32x128xf32>
    %c0_87 = arith.constant 0 : index
    %c0_88 = arith.constant 0 : index
    %95 = vector.load %arg4[%c0_87, %c0_88] : memref<1x128xf32, #tpu.memory_space<vmem>>, vector<1x128xf32>
    %96 = vector.broadcast %95 : vector<1x128xf32> to vector<32x128xf32>
    %97 = arith.mulf %94, %96 : vector<32x128xf32>
    %c1_89 = arith.constant 1 : index
    %c0_90 = arith.constant 0 : index
    %c0_91 = arith.constant 0 : index
    %98 = vector.load %arg11[%c1_89, %c0_90, %c0_91] : memref<3x32x32xf32, #tpu.memory_space<vmem>>, vector<1x32x32xf32>
    %99 = vector.shape_cast %98 : vector<1x32x32xf32> to vector<32x32xf32>
    %cst_92 = arith.constant dense<0.000000e+00> : vector<32x128xf32>
    %100 = tpu.matmul %99, %85, %cst_92 {dimension_numbers = #tpu.dot_dimension_numbers<[1], [0], [0], [1], [0, 0, 1, 1], [], []>} : vector<32x32xf32>, vector<32x128xf32>, vector<32x128xf32> -> vector<32x128xf32>
    %101 = arith.addf %97, %100 : vector<32x128xf32>
    %c1_93 = arith.constant 1 : index
    %c0_94 = arith.constant 0 : index
    %c0_95 = arith.constant 0 : index
    %102 = vector.load %arg12[%c1_93, %c0_94, %c0_95] : memref<3x32x1xf32, #tpu.memory_space<vmem>>, vector<1x32x1xf32>
    %103 = vector.shape_cast %102 : vector<1x32x1xf32> to vector<32x1xf32>
    %104 = vector.broadcast %103 : vector<32x1xf32> to vector<32x128xf32>
    %105 = arith.addf %101, %104 : vector<32x128xf32>
    %cst_96 = arith.constant 0.000000e+00 : f32
    %106 = vector.broadcast %cst_96 : f32 to vector<32x128xf32>
    %107 = arith.maximumf %105, %106 : vector<32x128xf32>
    %108 = arith.truncf %107 : vector<32x128xf32> to vector<32x128xbf16>
    %c0_97 = arith.constant 0 : index
    %c0_98 = arith.constant 0 : index
    %109 = vector.load %arg2[%c0_97, %c0_98] : memref<128x256xbf16, #tpu.memory_space<vmem>>, vector<128x256xbf16>
    %cst_99 = arith.constant dense<0.000000e+00> : vector<32x256xf32>
    %110 = tpu.matmul %108, %109, %cst_99 {dimension_numbers = #tpu.dot_dimension_numbers<[1], [0], [0], [1], [0, 0, 1, 1], [], []>} : vector<32x128xbf16>, vector<128x256xbf16>, vector<32x256xf32> -> vector<32x256xf32>
    %c2_100 = arith.constant 2 : index
    %c0_101 = arith.constant 0 : index
    %c0_102 = arith.constant 0 : index
    %111 = vector.load %arg16[%c2_100, %c0_101, %c0_102] : memref<3x32x256xf32, #tpu.memory_space<vmem>>, vector<1x32x256xf32>
    %112 = vector.shape_cast %111 : vector<1x32x256xf32> to vector<32x256xf32>
    %113 = arith.mulf %112, %110 : vector<32x256xf32>
    %114 = arith.truncf %113 : vector<32x256xf32> to vector<32x256xbf16>
    %c0_103 = arith.constant 0 : index
    %c0_104 = arith.constant 0 : index
    %115 = vector.load %arg3[%c0_103, %c0_104] : memref<256x128xbf16, #tpu.memory_space<vmem>>, vector<256x128xbf16>
    %cst_105 = arith.constant dense<0.000000e+00> : vector<32x128xf32>
    %116 = tpu.matmul %114, %115, %cst_105 {dimension_numbers = #tpu.dot_dimension_numbers<[1], [0], [0], [1], [0, 0, 1, 1], [], []>} : vector<32x256xbf16>, vector<256x128xbf16>, vector<32x128xf32> -> vector<32x128xf32>
    %c0_106 = arith.constant 0 : index
    %c0_107 = arith.constant 0 : index
    %117 = vector.load %arg4[%c0_106, %c0_107] : memref<1x128xf32, #tpu.memory_space<vmem>>, vector<1x128xf32>
    %118 = vector.broadcast %117 : vector<1x128xf32> to vector<32x128xf32>
    %119 = arith.mulf %116, %118 : vector<32x128xf32>
    %c2_108 = arith.constant 2 : index
    %c0_109 = arith.constant 0 : index
    %c0_110 = arith.constant 0 : index
    %120 = vector.load %arg11[%c2_108, %c0_109, %c0_110] : memref<3x32x32xf32, #tpu.memory_space<vmem>>, vector<1x32x32xf32>
    %121 = vector.shape_cast %120 : vector<1x32x32xf32> to vector<32x32xf32>
    %cst_111 = arith.constant dense<0.000000e+00> : vector<32x128xf32>
    %122 = tpu.matmul %121, %107, %cst_111 {dimension_numbers = #tpu.dot_dimension_numbers<[1], [0], [0], [1], [0, 0, 1, 1], [], []>} : vector<32x32xf32>, vector<32x128xf32>, vector<32x128xf32> -> vector<32x128xf32>
    %123 = arith.addf %119, %122 : vector<32x128xf32>
    %c2_112 = arith.constant 2 : index
    %c0_113 = arith.constant 0 : index
    %c0_114 = arith.constant 0 : index
    %124 = vector.load %arg12[%c2_112, %c0_113, %c0_114] : memref<3x32x1xf32, #tpu.memory_space<vmem>>, vector<1x32x1xf32>
    %125 = vector.shape_cast %124 : vector<1x32x1xf32> to vector<32x1xf32>
    %126 = vector.broadcast %125 : vector<32x1xf32> to vector<32x128xf32>
    %127 = arith.addf %123, %126 : vector<32x128xf32>
    %cst_115 = arith.constant 0.000000e+00 : f32
    %128 = vector.broadcast %cst_115 : f32 to vector<32x128xf32>
    %129 = arith.maximumf %127, %128 : vector<32x128xf32>
    %130 = arith.truncf %129 : vector<32x128xf32> to vector<32x128xbf16>
    %c0_116 = arith.constant 0 : index
    %c0_117 = arith.constant 0 : index
    %131 = vector.load %arg2[%c0_116, %c0_117] : memref<128x256xbf16, #tpu.memory_space<vmem>>, vector<128x256xbf16>
    %cst_118 = arith.constant dense<0.000000e+00> : vector<32x256xf32>
    %132 = tpu.matmul %130, %131, %cst_118 {dimension_numbers = #tpu.dot_dimension_numbers<[1], [0], [0], [1], [0, 0, 1, 1], [], []>} : vector<32x128xbf16>, vector<128x256xbf16>, vector<32x256xf32> -> vector<32x256xf32>
    %c0_119 = arith.constant 0 : index
    %c0_120 = arith.constant 0 : index
    %c0_121 = arith.constant 0 : index
    %133 = vector.load %arg16[%c0_119, %c0_120, %c0_121] : memref<3x32x256xf32, #tpu.memory_space<vmem>>, vector<1x32x256xf32>
    %134 = vector.shape_cast %133 : vector<1x32x256xf32> to vector<32x256xf32>
    %135 = arith.mulf %134, %132 : vector<32x256xf32>
    %136 = arith.truncf %135 : vector<32x256xf32> to vector<32x256xbf16>
    %c0_122 = arith.constant 0 : index
    %c0_123 = arith.constant 0 : index
    %137 = vector.load %arg3[%c0_122, %c0_123] : memref<256x128xbf16, #tpu.memory_space<vmem>>, vector<256x128xbf16>
    %cst_124 = arith.constant dense<0.000000e+00> : vector<32x128xf32>
    %138 = tpu.matmul %136, %137, %cst_124 {dimension_numbers = #tpu.dot_dimension_numbers<[1], [0], [0], [1], [0, 0, 1, 1], [], []>} : vector<32x256xbf16>, vector<256x128xbf16>, vector<32x128xf32> -> vector<32x128xf32>
    %c0_125 = arith.constant 0 : index
    %c0_126 = arith.constant 0 : index
    %139 = vector.load %arg4[%c0_125, %c0_126] : memref<1x128xf32, #tpu.memory_space<vmem>>, vector<1x128xf32>
    %140 = vector.broadcast %139 : vector<1x128xf32> to vector<32x128xf32>
    %141 = arith.mulf %138, %140 : vector<32x128xf32>
    %c0_127 = arith.constant 0 : index
    %c0_128 = arith.constant 0 : index
    %c0_129 = arith.constant 0 : index
    %142 = vector.load %arg11[%c0_127, %c0_128, %c0_129] : memref<3x32x32xf32, #tpu.memory_space<vmem>>, vector<1x32x32xf32>
    %143 = vector.shape_cast %142 : vector<1x32x32xf32> to vector<32x32xf32>
    %cst_130 = arith.constant dense<0.000000e+00> : vector<32x128xf32>
    %144 = tpu.matmul %143, %129, %cst_130 {dimension_numbers = #tpu.dot_dimension_numbers<[1], [0], [0], [1], [0, 0, 1, 1], [], []>} : vector<32x32xf32>, vector<32x128xf32>, vector<32x128xf32> -> vector<32x128xf32>
    %145 = arith.addf %141, %144 : vector<32x128xf32>
    %c0_131 = arith.constant 0 : index
    %c0_132 = arith.constant 0 : index
    %c0_133 = arith.constant 0 : index
    %146 = vector.load %arg12[%c0_131, %c0_132, %c0_133] : memref<3x32x1xf32, #tpu.memory_space<vmem>>, vector<1x32x1xf32>
    %147 = vector.shape_cast %146 : vector<1x32x1xf32> to vector<32x1xf32>
    %148 = vector.broadcast %147 : vector<32x1xf32> to vector<32x128xf32>
    %149 = arith.addf %145, %148 : vector<32x128xf32>
    %cst_134 = arith.constant 0.000000e+00 : f32
    %150 = vector.broadcast %cst_134 : f32 to vector<32x128xf32>
    %151 = arith.maximumf %149, %150 : vector<32x128xf32>
    %152 = arith.truncf %151 : vector<32x128xf32> to vector<32x128xbf16>
    %c0_135 = arith.constant 0 : index
    %c0_136 = arith.constant 0 : index
    %153 = vector.load %arg2[%c0_135, %c0_136] : memref<128x256xbf16, #tpu.memory_space<vmem>>, vector<128x256xbf16>
    %cst_137 = arith.constant dense<0.000000e+00> : vector<32x256xf32>
    %154 = tpu.matmul %152, %153, %cst_137 {dimension_numbers = #tpu.dot_dimension_numbers<[1], [0], [0], [1], [0, 0, 1, 1], [], []>} : vector<32x128xbf16>, vector<128x256xbf16>, vector<32x256xf32> -> vector<32x256xf32>
    %c1_138 = arith.constant 1 : index
    %c0_139 = arith.constant 0 : index
    %c0_140 = arith.constant 0 : index
    %155 = vector.load %arg16[%c1_138, %c0_139, %c0_140] : memref<3x32x256xf32, #tpu.memory_space<vmem>>, vector<1x32x256xf32>
    %156 = vector.shape_cast %155 : vector<1x32x256xf32> to vector<32x256xf32>
    %157 = arith.mulf %156, %154 : vector<32x256xf32>
    %158 = arith.truncf %157 : vector<32x256xf32> to vector<32x256xbf16>
    %c0_141 = arith.constant 0 : index
    %c0_142 = arith.constant 0 : index
    %159 = vector.load %arg3[%c0_141, %c0_142] : memref<256x128xbf16, #tpu.memory_space<vmem>>, vector<256x128xbf16>
    %cst_143 = arith.constant dense<0.000000e+00> : vector<32x128xf32>
    %160 = tpu.matmul %158, %159, %cst_143 {dimension_numbers = #tpu.dot_dimension_numbers<[1], [0], [0], [1], [0, 0, 1, 1], [], []>} : vector<32x256xbf16>, vector<256x128xbf16>, vector<32x128xf32> -> vector<32x128xf32>
    %c0_144 = arith.constant 0 : index
    %c0_145 = arith.constant 0 : index
    %161 = vector.load %arg4[%c0_144, %c0_145] : memref<1x128xf32, #tpu.memory_space<vmem>>, vector<1x128xf32>
    %162 = vector.broadcast %161 : vector<1x128xf32> to vector<32x128xf32>
    %163 = arith.mulf %160, %162 : vector<32x128xf32>
    %c1_146 = arith.constant 1 : index
    %c0_147 = arith.constant 0 : index
    %c0_148 = arith.constant 0 : index
    %164 = vector.load %arg11[%c1_146, %c0_147, %c0_148] : memref<3x32x32xf32, #tpu.memory_space<vmem>>, vector<1x32x32xf32>
    %165 = vector.shape_cast %164 : vector<1x32x32xf32> to vector<32x32xf32>
    %cst_149 = arith.constant dense<0.000000e+00> : vector<32x128xf32>
    %166 = tpu.matmul %165, %151, %cst_149 {dimension_numbers = #tpu.dot_dimension_numbers<[1], [0], [0], [1], [0, 0, 1, 1], [], []>} : vector<32x32xf32>, vector<32x128xf32>, vector<32x128xf32> -> vector<32x128xf32>
    %167 = arith.addf %163, %166 : vector<32x128xf32>
    %c1_150 = arith.constant 1 : index
    %c0_151 = arith.constant 0 : index
    %c0_152 = arith.constant 0 : index
    %168 = vector.load %arg12[%c1_150, %c0_151, %c0_152] : memref<3x32x1xf32, #tpu.memory_space<vmem>>, vector<1x32x1xf32>
    %169 = vector.shape_cast %168 : vector<1x32x1xf32> to vector<32x1xf32>
    %170 = vector.broadcast %169 : vector<32x1xf32> to vector<32x128xf32>
    %171 = arith.addf %167, %170 : vector<32x128xf32>
    %cst_153 = arith.constant 0.000000e+00 : f32
    %172 = vector.broadcast %cst_153 : f32 to vector<32x128xf32>
    %173 = arith.maximumf %171, %172 : vector<32x128xf32>
    %174 = arith.truncf %173 : vector<32x128xf32> to vector<32x128xbf16>
    %c0_154 = arith.constant 0 : index
    %c0_155 = arith.constant 0 : index
    %175 = vector.load %arg2[%c0_154, %c0_155] : memref<128x256xbf16, #tpu.memory_space<vmem>>, vector<128x256xbf16>
    %cst_156 = arith.constant dense<0.000000e+00> : vector<32x256xf32>
    %176 = tpu.matmul %174, %175, %cst_156 {dimension_numbers = #tpu.dot_dimension_numbers<[1], [0], [0], [1], [0, 0, 1, 1], [], []>} : vector<32x128xbf16>, vector<128x256xbf16>, vector<32x256xf32> -> vector<32x256xf32>
    %c2_157 = arith.constant 2 : index
    %c0_158 = arith.constant 0 : index
    %c0_159 = arith.constant 0 : index
    %177 = vector.load %arg16[%c2_157, %c0_158, %c0_159] : memref<3x32x256xf32, #tpu.memory_space<vmem>>, vector<1x32x256xf32>
    %178 = vector.shape_cast %177 : vector<1x32x256xf32> to vector<32x256xf32>
    %179 = arith.mulf %178, %176 : vector<32x256xf32>
    %180 = arith.truncf %179 : vector<32x256xf32> to vector<32x256xbf16>
    %c0_160 = arith.constant 0 : index
    %c0_161 = arith.constant 0 : index
    %181 = vector.load %arg3[%c0_160, %c0_161] : memref<256x128xbf16, #tpu.memory_space<vmem>>, vector<256x128xbf16>
    %cst_162 = arith.constant dense<0.000000e+00> : vector<32x128xf32>
    %182 = tpu.matmul %180, %181, %cst_162 {dimension_numbers = #tpu.dot_dimension_numbers<[1], [0], [0], [1], [0, 0, 1, 1], [], []>} : vector<32x256xbf16>, vector<256x128xbf16>, vector<32x128xf32> -> vector<32x128xf32>
    %c0_163 = arith.constant 0 : index
    %c0_164 = arith.constant 0 : index
    %183 = vector.load %arg4[%c0_163, %c0_164] : memref<1x128xf32, #tpu.memory_space<vmem>>, vector<1x128xf32>
    %184 = vector.broadcast %183 : vector<1x128xf32> to vector<32x128xf32>
    %185 = arith.mulf %182, %184 : vector<32x128xf32>
    %c2_165 = arith.constant 2 : index
    %c0_166 = arith.constant 0 : index
    %c0_167 = arith.constant 0 : index
    %186 = vector.load %arg11[%c2_165, %c0_166, %c0_167] : memref<3x32x32xf32, #tpu.memory_space<vmem>>, vector<1x32x32xf32>
    %187 = vector.shape_cast %186 : vector<1x32x32xf32> to vector<32x32xf32>
    %cst_168 = arith.constant dense<0.000000e+00> : vector<32x128xf32>
    %188 = tpu.matmul %187, %173, %cst_168 {dimension_numbers = #tpu.dot_dimension_numbers<[1], [0], [0], [1], [0, 0, 1, 1], [], []>} : vector<32x32xf32>, vector<32x128xf32>, vector<32x128xf32> -> vector<32x128xf32>
    %189 = arith.addf %185, %188 : vector<32x128xf32>
    %c2_169 = arith.constant 2 : index
    %c0_170 = arith.constant 0 : index
    %c0_171 = arith.constant 0 : index
    %190 = vector.load %arg12[%c2_169, %c0_170, %c0_171] : memref<3x32x1xf32, #tpu.memory_space<vmem>>, vector<1x32x1xf32>
    %191 = vector.shape_cast %190 : vector<1x32x1xf32> to vector<32x1xf32>
    %192 = vector.broadcast %191 : vector<32x1xf32> to vector<32x128xf32>
    %193 = arith.addf %189, %192 : vector<32x128xf32>
    %cst_172 = arith.constant 0.000000e+00 : f32
    %194 = vector.broadcast %cst_172 : f32 to vector<32x128xf32>
    %195 = arith.maximumf %193, %194 : vector<32x128xf32>
    %196 = arith.truncf %195 : vector<32x128xf32> to vector<32x128xbf16>
    %c0_173 = arith.constant 0 : index
    %c0_174 = arith.constant 0 : index
    %197 = vector.load %arg2[%c0_173, %c0_174] : memref<128x256xbf16, #tpu.memory_space<vmem>>, vector<128x256xbf16>
    %cst_175 = arith.constant dense<0.000000e+00> : vector<32x256xf32>
    %198 = tpu.matmul %196, %197, %cst_175 {dimension_numbers = #tpu.dot_dimension_numbers<[1], [0], [0], [1], [0, 0, 1, 1], [], []>} : vector<32x128xbf16>, vector<128x256xbf16>, vector<32x256xf32> -> vector<32x256xf32>
    %c0_176 = arith.constant 0 : index
    %c0_177 = arith.constant 0 : index
    %c0_178 = arith.constant 0 : index
    %199 = vector.load %arg16[%c0_176, %c0_177, %c0_178] : memref<3x32x256xf32, #tpu.memory_space<vmem>>, vector<1x32x256xf32>
    %200 = vector.shape_cast %199 : vector<1x32x256xf32> to vector<32x256xf32>
    %201 = arith.mulf %200, %198 : vector<32x256xf32>
    %202 = arith.truncf %201 : vector<32x256xf32> to vector<32x256xbf16>
    %c0_179 = arith.constant 0 : index
    %c0_180 = arith.constant 0 : index
    %203 = vector.load %arg3[%c0_179, %c0_180] : memref<256x128xbf16, #tpu.memory_space<vmem>>, vector<256x128xbf16>
    %cst_181 = arith.constant dense<0.000000e+00> : vector<32x128xf32>
    %204 = tpu.matmul %202, %203, %cst_181 {dimension_numbers = #tpu.dot_dimension_numbers<[1], [0], [0], [1], [0, 0, 1, 1], [], []>} : vector<32x256xbf16>, vector<256x128xbf16>, vector<32x128xf32> -> vector<32x128xf32>
    %c0_182 = arith.constant 0 : index
    %c0_183 = arith.constant 0 : index
    %205 = vector.load %arg4[%c0_182, %c0_183] : memref<1x128xf32, #tpu.memory_space<vmem>>, vector<1x128xf32>
    %206 = vector.broadcast %205 : vector<1x128xf32> to vector<32x128xf32>
    %207 = arith.mulf %204, %206 : vector<32x128xf32>
    %c0_184 = arith.constant 0 : index
    %c0_185 = arith.constant 0 : index
    %c0_186 = arith.constant 0 : index
    %208 = vector.load %arg11[%c0_184, %c0_185, %c0_186] : memref<3x32x32xf32, #tpu.memory_space<vmem>>, vector<1x32x32xf32>
    %209 = vector.shape_cast %208 : vector<1x32x32xf32> to vector<32x32xf32>
    %cst_187 = arith.constant dense<0.000000e+00> : vector<32x128xf32>
    %210 = tpu.matmul %209, %195, %cst_187 {dimension_numbers = #tpu.dot_dimension_numbers<[1], [0], [0], [1], [0, 0, 1, 1], [], []>} : vector<32x32xf32>, vector<32x128xf32>, vector<32x128xf32> -> vector<32x128xf32>
    %211 = arith.addf %207, %210 : vector<32x128xf32>
    %c0_188 = arith.constant 0 : index
    %c0_189 = arith.constant 0 : index
    %c0_190 = arith.constant 0 : index
    %212 = vector.load %arg12[%c0_188, %c0_189, %c0_190] : memref<3x32x1xf32, #tpu.memory_space<vmem>>, vector<1x32x1xf32>
    %213 = vector.shape_cast %212 : vector<1x32x1xf32> to vector<32x1xf32>
    %214 = vector.broadcast %213 : vector<32x1xf32> to vector<32x128xf32>
    %215 = arith.addf %211, %214 : vector<32x128xf32>
    %cst_191 = arith.constant 0.000000e+00 : f32
    %216 = vector.broadcast %cst_191 : f32 to vector<32x128xf32>
    %217 = arith.maximumf %215, %216 : vector<32x128xf32>
    %218 = arith.truncf %217 : vector<32x128xf32> to vector<32x128xbf16>
    %c0_192 = arith.constant 0 : index
    %c0_193 = arith.constant 0 : index
    %219 = vector.load %arg2[%c0_192, %c0_193] : memref<128x256xbf16, #tpu.memory_space<vmem>>, vector<128x256xbf16>
    %cst_194 = arith.constant dense<0.000000e+00> : vector<32x256xf32>
    %220 = tpu.matmul %218, %219, %cst_194 {dimension_numbers = #tpu.dot_dimension_numbers<[1], [0], [0], [1], [0, 0, 1, 1], [], []>} : vector<32x128xbf16>, vector<128x256xbf16>, vector<32x256xf32> -> vector<32x256xf32>
    %c1_195 = arith.constant 1 : index
    %c0_196 = arith.constant 0 : index
    %c0_197 = arith.constant 0 : index
    %221 = vector.load %arg16[%c1_195, %c0_196, %c0_197] : memref<3x32x256xf32, #tpu.memory_space<vmem>>, vector<1x32x256xf32>
    %222 = vector.shape_cast %221 : vector<1x32x256xf32> to vector<32x256xf32>
    %223 = arith.mulf %222, %220 : vector<32x256xf32>
    %224 = arith.truncf %223 : vector<32x256xf32> to vector<32x256xbf16>
    %c0_198 = arith.constant 0 : index
    %c0_199 = arith.constant 0 : index
    %225 = vector.load %arg3[%c0_198, %c0_199] : memref<256x128xbf16, #tpu.memory_space<vmem>>, vector<256x128xbf16>
    %cst_200 = arith.constant dense<0.000000e+00> : vector<32x128xf32>
    %226 = tpu.matmul %224, %225, %cst_200 {dimension_numbers = #tpu.dot_dimension_numbers<[1], [0], [0], [1], [0, 0, 1, 1], [], []>} : vector<32x256xbf16>, vector<256x128xbf16>, vector<32x128xf32> -> vector<32x128xf32>
    %c0_201 = arith.constant 0 : index
    %c0_202 = arith.constant 0 : index
    %227 = vector.load %arg4[%c0_201, %c0_202] : memref<1x128xf32, #tpu.memory_space<vmem>>, vector<1x128xf32>
    %228 = vector.broadcast %227 : vector<1x128xf32> to vector<32x128xf32>
    %229 = arith.mulf %226, %228 : vector<32x128xf32>
    %c1_203 = arith.constant 1 : index
    %c0_204 = arith.constant 0 : index
    %c0_205 = arith.constant 0 : index
    %230 = vector.load %arg11[%c1_203, %c0_204, %c0_205] : memref<3x32x32xf32, #tpu.memory_space<vmem>>, vector<1x32x32xf32>
    %231 = vector.shape_cast %230 : vector<1x32x32xf32> to vector<32x32xf32>
    %cst_206 = arith.constant dense<0.000000e+00> : vector<32x128xf32>
    %232 = tpu.matmul %231, %217, %cst_206 {dimension_numbers = #tpu.dot_dimension_numbers<[1], [0], [0], [1], [0, 0, 1, 1], [], []>} : vector<32x32xf32>, vector<32x128xf32>, vector<32x128xf32> -> vector<32x128xf32>
    %233 = arith.addf %229, %232 : vector<32x128xf32>
    %c1_207 = arith.constant 1 : index
    %c0_208 = arith.constant 0 : index
    %c0_209 = arith.constant 0 : index
    %234 = vector.load %arg12[%c1_207, %c0_208, %c0_209] : memref<3x32x1xf32, #tpu.memory_space<vmem>>, vector<1x32x1xf32>
    %235 = vector.shape_cast %234 : vector<1x32x1xf32> to vector<32x1xf32>
    %236 = vector.broadcast %235 : vector<32x1xf32> to vector<32x128xf32>
    %237 = arith.addf %233, %236 : vector<32x128xf32>
    %cst_210 = arith.constant 0.000000e+00 : f32
    %238 = vector.broadcast %cst_210 : f32 to vector<32x128xf32>
    %239 = arith.maximumf %237, %238 : vector<32x128xf32>
    %240 = arith.truncf %239 : vector<32x128xf32> to vector<32x128xbf16>
    %c0_211 = arith.constant 0 : index
    %c0_212 = arith.constant 0 : index
    %241 = vector.load %arg2[%c0_211, %c0_212] : memref<128x256xbf16, #tpu.memory_space<vmem>>, vector<128x256xbf16>
    %cst_213 = arith.constant dense<0.000000e+00> : vector<32x256xf32>
    %242 = tpu.matmul %240, %241, %cst_213 {dimension_numbers = #tpu.dot_dimension_numbers<[1], [0], [0], [1], [0, 0, 1, 1], [], []>} : vector<32x128xbf16>, vector<128x256xbf16>, vector<32x256xf32> -> vector<32x256xf32>
    %c2_214 = arith.constant 2 : index
    %c0_215 = arith.constant 0 : index
    %c0_216 = arith.constant 0 : index
    %243 = vector.load %arg16[%c2_214, %c0_215, %c0_216] : memref<3x32x256xf32, #tpu.memory_space<vmem>>, vector<1x32x256xf32>
    %244 = vector.shape_cast %243 : vector<1x32x256xf32> to vector<32x256xf32>
    %245 = arith.mulf %244, %242 : vector<32x256xf32>
    %246 = arith.truncf %245 : vector<32x256xf32> to vector<32x256xbf16>
    %c0_217 = arith.constant 0 : index
    %c0_218 = arith.constant 0 : index
    %247 = vector.load %arg3[%c0_217, %c0_218] : memref<256x128xbf16, #tpu.memory_space<vmem>>, vector<256x128xbf16>
    %cst_219 = arith.constant dense<0.000000e+00> : vector<32x128xf32>
    %248 = tpu.matmul %246, %247, %cst_219 {dimension_numbers = #tpu.dot_dimension_numbers<[1], [0], [0], [1], [0, 0, 1, 1], [], []>} : vector<32x256xbf16>, vector<256x128xbf16>, vector<32x128xf32> -> vector<32x128xf32>
    %c0_220 = arith.constant 0 : index
    %c0_221 = arith.constant 0 : index
    %249 = vector.load %arg4[%c0_220, %c0_221] : memref<1x128xf32, #tpu.memory_space<vmem>>, vector<1x128xf32>
    %250 = vector.broadcast %249 : vector<1x128xf32> to vector<32x128xf32>
    %251 = arith.mulf %248, %250 : vector<32x128xf32>
    %c2_222 = arith.constant 2 : index
    %c0_223 = arith.constant 0 : index
    %c0_224 = arith.constant 0 : index
    %252 = vector.load %arg11[%c2_222, %c0_223, %c0_224] : memref<3x32x32xf32, #tpu.memory_space<vmem>>, vector<1x32x32xf32>
    %253 = vector.shape_cast %252 : vector<1x32x32xf32> to vector<32x32xf32>
    %cst_225 = arith.constant dense<0.000000e+00> : vector<32x128xf32>
    %254 = tpu.matmul %253, %239, %cst_225 {dimension_numbers = #tpu.dot_dimension_numbers<[1], [0], [0], [1], [0, 0, 1, 1], [], []>} : vector<32x32xf32>, vector<32x128xf32>, vector<32x128xf32> -> vector<32x128xf32>
    %255 = arith.addf %251, %254 : vector<32x128xf32>
    %c2_226 = arith.constant 2 : index
    %c0_227 = arith.constant 0 : index
    %c0_228 = arith.constant 0 : index
    %256 = vector.load %arg12[%c2_226, %c0_227, %c0_228] : memref<3x32x1xf32, #tpu.memory_space<vmem>>, vector<1x32x1xf32>
    %257 = vector.shape_cast %256 : vector<1x32x1xf32> to vector<32x1xf32>
    %258 = vector.broadcast %257 : vector<32x1xf32> to vector<32x128xf32>
    %259 = arith.addf %255, %258 : vector<32x128xf32>
    %cst_229 = arith.constant 0.000000e+00 : f32
    %260 = vector.broadcast %cst_229 : f32 to vector<32x128xf32>
    %261 = arith.maximumf %259, %260 : vector<32x128xf32>
    %262 = arith.truncf %261 : vector<32x128xf32> to vector<32x128xbf16>
    %c0_230 = arith.constant 0 : index
    %c0_231 = arith.constant 0 : index
    %263 = vector.load %arg2[%c0_230, %c0_231] : memref<128x256xbf16, #tpu.memory_space<vmem>>, vector<128x256xbf16>
    %cst_232 = arith.constant dense<0.000000e+00> : vector<32x256xf32>
    %264 = tpu.matmul %262, %263, %cst_232 {dimension_numbers = #tpu.dot_dimension_numbers<[1], [0], [0], [1], [0, 0, 1, 1], [], []>} : vector<32x128xbf16>, vector<128x256xbf16>, vector<32x256xf32> -> vector<32x256xf32>
    %c0_233 = arith.constant 0 : index
    %c0_234 = arith.constant 0 : index
    %c0_235 = arith.constant 0 : index
    %265 = vector.load %arg16[%c0_233, %c0_234, %c0_235] : memref<3x32x256xf32, #tpu.memory_space<vmem>>, vector<1x32x256xf32>
    %266 = vector.shape_cast %265 : vector<1x32x256xf32> to vector<32x256xf32>
    %267 = arith.mulf %266, %264 : vector<32x256xf32>
    %268 = arith.truncf %267 : vector<32x256xf32> to vector<32x256xbf16>
    %c0_236 = arith.constant 0 : index
    %c0_237 = arith.constant 0 : index
    %269 = vector.load %arg3[%c0_236, %c0_237] : memref<256x128xbf16, #tpu.memory_space<vmem>>, vector<256x128xbf16>
    %cst_238 = arith.constant dense<0.000000e+00> : vector<32x128xf32>
    %270 = tpu.matmul %268, %269, %cst_238 {dimension_numbers = #tpu.dot_dimension_numbers<[1], [0], [0], [1], [0, 0, 1, 1], [], []>} : vector<32x256xbf16>, vector<256x128xbf16>, vector<32x128xf32> -> vector<32x128xf32>
    %c0_239 = arith.constant 0 : index
    %c0_240 = arith.constant 0 : index
    %271 = vector.load %arg4[%c0_239, %c0_240] : memref<1x128xf32, #tpu.memory_space<vmem>>, vector<1x128xf32>
    %272 = vector.broadcast %271 : vector<1x128xf32> to vector<32x128xf32>
    %273 = arith.mulf %270, %272 : vector<32x128xf32>
    %c0_241 = arith.constant 0 : index
    %c0_242 = arith.constant 0 : index
    %c0_243 = arith.constant 0 : index
    %274 = vector.load %arg11[%c0_241, %c0_242, %c0_243] : memref<3x32x32xf32, #tpu.memory_space<vmem>>, vector<1x32x32xf32>
    %275 = vector.shape_cast %274 : vector<1x32x32xf32> to vector<32x32xf32>
    %cst_244 = arith.constant dense<0.000000e+00> : vector<32x128xf32>
    %276 = tpu.matmul %275, %261, %cst_244 {dimension_numbers = #tpu.dot_dimension_numbers<[1], [0], [0], [1], [0, 0, 1, 1], [], []>} : vector<32x32xf32>, vector<32x128xf32>, vector<32x128xf32> -> vector<32x128xf32>
    %277 = arith.addf %273, %276 : vector<32x128xf32>
    %c0_245 = arith.constant 0 : index
    %c0_246 = arith.constant 0 : index
    %c0_247 = arith.constant 0 : index
    %278 = vector.load %arg12[%c0_245, %c0_246, %c0_247] : memref<3x32x1xf32, #tpu.memory_space<vmem>>, vector<1x32x1xf32>
    %279 = vector.shape_cast %278 : vector<1x32x1xf32> to vector<32x1xf32>
    %280 = vector.broadcast %279 : vector<32x1xf32> to vector<32x128xf32>
    %281 = arith.addf %277, %280 : vector<32x128xf32>
    %cst_248 = arith.constant 0.000000e+00 : f32
    %282 = vector.broadcast %cst_248 : f32 to vector<32x128xf32>
    %283 = arith.maximumf %281, %282 : vector<32x128xf32>
    %284 = arith.truncf %283 : vector<32x128xf32> to vector<32x128xbf16>
    %c0_249 = arith.constant 0 : index
    %c0_250 = arith.constant 0 : index
    %285 = vector.load %arg2[%c0_249, %c0_250] : memref<128x256xbf16, #tpu.memory_space<vmem>>, vector<128x256xbf16>
    %cst_251 = arith.constant dense<0.000000e+00> : vector<32x256xf32>
    %286 = tpu.matmul %284, %285, %cst_251 {dimension_numbers = #tpu.dot_dimension_numbers<[1], [0], [0], [1], [0, 0, 1, 1], [], []>} : vector<32x128xbf16>, vector<128x256xbf16>, vector<32x256xf32> -> vector<32x256xf32>
    %c1_252 = arith.constant 1 : index
    %c0_253 = arith.constant 0 : index
    %c0_254 = arith.constant 0 : index
    %287 = vector.load %arg16[%c1_252, %c0_253, %c0_254] : memref<3x32x256xf32, #tpu.memory_space<vmem>>, vector<1x32x256xf32>
    %288 = vector.shape_cast %287 : vector<1x32x256xf32> to vector<32x256xf32>
    %289 = arith.mulf %288, %286 : vector<32x256xf32>
    %290 = arith.truncf %289 : vector<32x256xf32> to vector<32x256xbf16>
    %c0_255 = arith.constant 0 : index
    %c0_256 = arith.constant 0 : index
    %291 = vector.load %arg3[%c0_255, %c0_256] : memref<256x128xbf16, #tpu.memory_space<vmem>>, vector<256x128xbf16>
    %cst_257 = arith.constant dense<0.000000e+00> : vector<32x128xf32>
    %292 = tpu.matmul %290, %291, %cst_257 {dimension_numbers = #tpu.dot_dimension_numbers<[1], [0], [0], [1], [0, 0, 1, 1], [], []>} : vector<32x256xbf16>, vector<256x128xbf16>, vector<32x128xf32> -> vector<32x128xf32>
    %c0_258 = arith.constant 0 : index
    %c0_259 = arith.constant 0 : index
    %293 = vector.load %arg4[%c0_258, %c0_259] : memref<1x128xf32, #tpu.memory_space<vmem>>, vector<1x128xf32>
    %294 = vector.broadcast %293 : vector<1x128xf32> to vector<32x128xf32>
    %295 = arith.mulf %292, %294 : vector<32x128xf32>
    %c1_260 = arith.constant 1 : index
    %c0_261 = arith.constant 0 : index
    %c0_262 = arith.constant 0 : index
    %296 = vector.load %arg11[%c1_260, %c0_261, %c0_262] : memref<3x32x32xf32, #tpu.memory_space<vmem>>, vector<1x32x32xf32>
    %297 = vector.shape_cast %296 : vector<1x32x32xf32> to vector<32x32xf32>
    %cst_263 = arith.constant dense<0.000000e+00> : vector<32x128xf32>
    %298 = tpu.matmul %297, %283, %cst_263 {dimension_numbers = #tpu.dot_dimension_numbers<[1], [0], [0], [1], [0, 0, 1, 1], [], []>} : vector<32x32xf32>, vector<32x128xf32>, vector<32x128xf32> -> vector<32x128xf32>
    %299 = arith.addf %295, %298 : vector<32x128xf32>
    %c1_264 = arith.constant 1 : index
    %c0_265 = arith.constant 0 : index
    %c0_266 = arith.constant 0 : index
    %300 = vector.load %arg12[%c1_264, %c0_265, %c0_266] : memref<3x32x1xf32, #tpu.memory_space<vmem>>, vector<1x32x1xf32>
    %301 = vector.shape_cast %300 : vector<1x32x1xf32> to vector<32x1xf32>
    %302 = vector.broadcast %301 : vector<32x1xf32> to vector<32x128xf32>
    %303 = arith.addf %299, %302 : vector<32x128xf32>
    %cst_267 = arith.constant 0.000000e+00 : f32
    %304 = vector.broadcast %cst_267 : f32 to vector<32x128xf32>
    %305 = arith.maximumf %303, %304 : vector<32x128xf32>
    %306 = arith.truncf %305 : vector<32x128xf32> to vector<32x128xbf16>
    %c0_268 = arith.constant 0 : index
    %c0_269 = arith.constant 0 : index
    %307 = vector.load %arg2[%c0_268, %c0_269] : memref<128x256xbf16, #tpu.memory_space<vmem>>, vector<128x256xbf16>
    %cst_270 = arith.constant dense<0.000000e+00> : vector<32x256xf32>
    %308 = tpu.matmul %306, %307, %cst_270 {dimension_numbers = #tpu.dot_dimension_numbers<[1], [0], [0], [1], [0, 0, 1, 1], [], []>} : vector<32x128xbf16>, vector<128x256xbf16>, vector<32x256xf32> -> vector<32x256xf32>
    %c2_271 = arith.constant 2 : index
    %c0_272 = arith.constant 0 : index
    %c0_273 = arith.constant 0 : index
    %309 = vector.load %arg16[%c2_271, %c0_272, %c0_273] : memref<3x32x256xf32, #tpu.memory_space<vmem>>, vector<1x32x256xf32>
    %310 = vector.shape_cast %309 : vector<1x32x256xf32> to vector<32x256xf32>
    %311 = arith.mulf %310, %308 : vector<32x256xf32>
    %312 = arith.truncf %311 : vector<32x256xf32> to vector<32x256xbf16>
    %c0_274 = arith.constant 0 : index
    %c0_275 = arith.constant 0 : index
    %313 = vector.load %arg3[%c0_274, %c0_275] : memref<256x128xbf16, #tpu.memory_space<vmem>>, vector<256x128xbf16>
    %cst_276 = arith.constant dense<0.000000e+00> : vector<32x128xf32>
    %314 = tpu.matmul %312, %313, %cst_276 {dimension_numbers = #tpu.dot_dimension_numbers<[1], [0], [0], [1], [0, 0, 1, 1], [], []>} : vector<32x256xbf16>, vector<256x128xbf16>, vector<32x128xf32> -> vector<32x128xf32>
    %c0_277 = arith.constant 0 : index
    %c0_278 = arith.constant 0 : index
    %315 = vector.load %arg4[%c0_277, %c0_278] : memref<1x128xf32, #tpu.memory_space<vmem>>, vector<1x128xf32>
    %316 = vector.broadcast %315 : vector<1x128xf32> to vector<32x128xf32>
    %317 = arith.mulf %314, %316 : vector<32x128xf32>
    %c2_279 = arith.constant 2 : index
    %c0_280 = arith.constant 0 : index
    %c0_281 = arith.constant 0 : index
    %318 = vector.load %arg11[%c2_279, %c0_280, %c0_281] : memref<3x32x32xf32, #tpu.memory_space<vmem>>, vector<1x32x32xf32>
    %319 = vector.shape_cast %318 : vector<1x32x32xf32> to vector<32x32xf32>
    %cst_282 = arith.constant dense<0.000000e+00> : vector<32x128xf32>
    %320 = tpu.matmul %319, %305, %cst_282 {dimension_numbers = #tpu.dot_dimension_numbers<[1], [0], [0], [1], [0, 0, 1, 1], [], []>} : vector<32x32xf32>, vector<32x128xf32>, vector<32x128xf32> -> vector<32x128xf32>
    %321 = arith.addf %317, %320 : vector<32x128xf32>
    %c2_283 = arith.constant 2 : index
    %c0_284 = arith.constant 0 : index
    %c0_285 = arith.constant 0 : index
    %322 = vector.load %arg12[%c2_283, %c0_284, %c0_285] : memref<3x32x1xf32, #tpu.memory_space<vmem>>, vector<1x32x1xf32>
    %323 = vector.shape_cast %322 : vector<1x32x1xf32> to vector<32x1xf32>
    %324 = vector.broadcast %323 : vector<32x1xf32> to vector<32x128xf32>
    %325 = arith.addf %321, %324 : vector<32x128xf32>
    %cst_286 = arith.constant 0.000000e+00 : f32
    %326 = vector.broadcast %cst_286 : f32 to vector<32x128xf32>
    %327 = arith.maximumf %325, %326 : vector<32x128xf32>
    %c0_287 = arith.constant 0 : index
    %c0_288 = arith.constant 0 : index
    %328 = vector.load %arg13[%c0_287, %c0_288] : memref<1x32xf32, #tpu.memory_space<vmem>>, vector<1x32xf32>
    %cst_289 = arith.constant dense<0.000000e+00> : vector<1x128xf32>
    %329 = tpu.matmul %328, %327, %cst_289 {dimension_numbers = #tpu.dot_dimension_numbers<[1], [0], [0], [1], [0, 0, 1, 1], [], []>} : vector<1x32xf32>, vector<32x128xf32>, vector<1x128xf32> -> vector<1x128xf32>
    %c0_290 = arith.constant 0 : index
    %c0_291 = arith.constant 0 : index
    %330 = vector.load %arg14[%c0_290, %c0_291] : memref<1x1xf32, #tpu.memory_space<vmem>>, vector<1x1xf32>
    %331 = vector.broadcast %330 : vector<1x1xf32> to vector<1x128xf32>
    %332 = arith.addf %329, %331 : vector<1x128xf32>
    %c0_292 = arith.constant 0 : index
    %c0_293 = arith.constant 0 : index
    %333 = vector.load %arg15[%c0_292, %c0_293] : memref<1x128xf32, #tpu.memory_space<vmem>>, vector<1x128xf32>
    tpu.vector_store %arg15[%c0_292, %c0_293], %332 {strides = array<i32>} : memref<1x128xf32, #tpu.memory_space<vmem>>, vector<1x128xf32>,
    return
  }
}

</mosaic_0001>

<llo_original>
// kernel: tpu_custom_call.1
$region0: #{tpu_custom_call.1}
  #allocation0 [shape = 'u32[]', space=smem, size = 0x4, offset = 0x4, fixed_abs, tag = 'smem constant byte address 0x4 - core index']
  #allocation1 [shape = 'u32[72,128]{1,0:T(1,128)}', space=vmem, size = 0x9000, scoped, tag = 'internal scratch']
  #allocation2 [shape = 'f32[3,32,256]{2,1,0:T(8,128)}', space=vmem, size = 0x18000, scoped, tag = 'scratch operand']
  #allocation3 [shape = 'f32[1,1]{1,0:T(1,128)S(1)}', space=vmem, size = 0x200, scoped, tag = 'scoped memory for tpu_custom_call.1']
  %s0 = inlined_call_operand.vmem [shape: f32[3,128], index: 0, kind: input, shape index: {}]
  %s1 = inlined_call_operand.vmem [shape: f32[3,256], index: 1, kind: input, shape index: {}]
  %s2 = inlined_call_operand.vmem [shape: bf16[128,256], index: 2, kind: input, shape index: {}]
  %s3 = inlined_call_operand.vmem [shape: bf16[256,128], index: 3, kind: input, shape index: {}]
  %s4 = inlined_call_operand.vmem [shape: f32[1,128], index: 4, kind: input, shape index: {}]
  %s5 = inlined_call_operand.vmem [shape: f32[32,3], index: 5, kind: input, shape index: {}]
  %s6 = inlined_call_operand.vmem [shape: f32[32,1], index: 6, kind: input, shape index: {}]
  %s7 = inlined_call_operand.vmem [shape: f32[3,8,3], index: 7, kind: input, shape index: {}]
  %s8 = inlined_call_operand.vmem [shape: f32[3,8,1], index: 8, kind: input, shape index: {}]
  %s9 = inlined_call_operand.vmem [shape: f32[3,32,8], index: 9, kind: input, shape index: {}]
  %s10 = inlined_call_operand.vmem [shape: f32[3,32,1], index: 10, kind: input, shape index: {}]
  %s11 = inlined_call_operand.hbm [shape: f32[3,32,32], index: 11, kind: input, shape index: {}]
  %s12 = inlined_call_operand.vmem [shape: f32[3,32,1], index: 12, kind: input, shape index: {}]
  %s13 = inlined_call_operand.vmem [shape: f32[1,32], index: 13, kind: input, shape index: {}]
  %s14 = inlined_call_operand.<no memory space> [shape: f32[1,1], index: 14, kind: input, shape index: {}]
  %s15 = inlined_call_operand.hbm [shape: f32[1,128], index: 15, kind: output, shape index: {}]
  %s16 = sld [smem:[#allocation0]]
  $region74: #{tpu_custom_call.1} parent=0
    _
  %s18 = ssub.s32 1, %s16
  %s19 = scalar_select 0, %s18, %s16
  %v20 = vstv %s14
  %21 = vst [vmem:[#allocation3] sm:$0x1] %v20
  $region1: #{tpu_custom_call.1} parent=0
    #allocation4 [shape = 'u8[49152]{0}', space=vmem, size = 0xc000, scoped, tag = 'input window, operand 11, single buffered']
    #allocation5 [shape = 's32[1]{0}', space=sflag, size = 0x4, scoped, tag = 'scoped memory for tpu_custom_call.1']
    #allocation6 [shape = 's32[1]{0}', space=sflag, size = 0x4, scoped, tag = 'scoped memory for tpu_custom_call.1']
    #allocation7 [shape = 'u8[512]{0}', space=vmem, size = 0x400, scoped, tag = 'output window, operand 0, single buffered']
    %22 = vsyncpa [#allocation5], 0
    %23 = vsyncpa [#allocation6], 0
    // Predicated region
    $region2: #{tpu_custom_call.1} parent=1 // pred_check
      _
    $region3: #{tpu_custom_call.1} parent=1 // pred_check_branch
      %25 = sbr.rel (0) target = $region5
    $region4: #{tpu_custom_call.1} parent=1 // pred_region
      _
    $region5: #{tpu_custom_call.1} parent=1 // pred_fallthru
      _
    // Predicated region
    $region6: #{tpu_custom_call.1} parent=1 // pred_check
      _
    $region7: #{tpu_custom_call.1} parent=1 // pred_check_branch
      %27 = sbr.rel (0) target = $region9
    $region8: #{tpu_custom_call.1} parent=1 // pred_region
      _
    $region9: #{tpu_custom_call.1} parent=1 // pred_fallthru
      _
    // Predicated region
    $region10: #{tpu_custom_call.1} parent=1 // pred_check
      _
    $region11: #{tpu_custom_call.1} parent=1 // pred_check_branch
      %29 = sbr.rel (0) target = $region13
    $region12: #{tpu_custom_call.1} parent=1 // pred_region
      _
    $region13: #{tpu_custom_call.1} parent=1 // pred_fallthru
      _
    // Predicated region
    $region14: #{tpu_custom_call.1} parent=1 // pred_check
      _
    $region15: #{tpu_custom_call.1} parent=1 // pred_check_branch
      %31 = sbr.rel (0) target = $region17
    $region16: #{tpu_custom_call.1} parent=1 // pred_region
      _
    $region17: #{tpu_custom_call.1} parent=1 // pred_fallthru
      _
    // Predicated region
    $region18: #{tpu_custom_call.1} parent=1 // pred_check
      _
    $region19: #{tpu_custom_call.1} parent=1 // pred_check_branch
      %33 = sbr.rel (0) target = $region21
    $region20: #{tpu_custom_call.1} parent=1 // pred_region
      _
    $region21: #{tpu_custom_call.1} parent=1 // pred_fallthru
      _
    // Predicated region
    $region22: #{tpu_custom_call.1} parent=1 // pred_check
      _
    $region23: #{tpu_custom_call.1} parent=1 // pred_check_branch
      %35 = sbr.rel (0) target = $region25
    $region24: #{tpu_custom_call.1} parent=1 // pred_region
      _
    $region25: #{tpu_custom_call.1} parent=1 // pred_fallthru
      _
    // Predicated region
    $region26: #{tpu_custom_call.1} parent=1 // pred_check
      _
    $region27: #{tpu_custom_call.1} parent=1 // pred_check_branch
      %37 = sbr.rel (0) target = $region29
    $region28: #{tpu_custom_call.1} parent=1 // pred_region
      _
    $region29: #{tpu_custom_call.1} parent=1 // pred_fallthru
      _
    // Predicated region
    $region30: #{tpu_custom_call.1} parent=1 // pred_check
      _
    $region31: #{tpu_custom_call.1} parent=1 // pred_check_branch
      %39 = sbr.rel (0) target = $region33
    $region32: #{tpu_custom_call.1} parent=1 // pred_region
      _
    $region33: #{tpu_custom_call.1} parent=1 // pred_fallthru
      _
    // Predicated region
    $region34: #{tpu_custom_call.1} parent=1 // pred_check
      _
    $region35: #{tpu_custom_call.1} parent=1 // pred_check_branch
      %41 = sbr.rel (0) target = $region37
    $region36: #{tpu_custom_call.1} parent=1 // pred_region
      _
    $region37: #{tpu_custom_call.1} parent=1 // pred_fallthru
      _
    // Predicated region
    $region38: #{tpu_custom_call.1} parent=1 // pred_check
      _
    $region39: #{tpu_custom_call.1} parent=1 // pred_check_branch
      %43 = sbr.rel (0) target = $region41
    $region40: #{tpu_custom_call.1} parent=1 // pred_region
      _
    $region41: #{tpu_custom_call.1} parent=1 // pred_fallthru
      _
    // Predicated region
    $region42: #{tpu_custom_call.1} parent=1 // pred_check
      _
    $region43: #{tpu_custom_call.1} parent=1 // pred_check_branch
      %45 = sbr.rel (0) target = $region45
    $region44: #{tpu_custom_call.1} parent=1 // pred_region
      _
    $region45: #{tpu_custom_call.1} parent=1 // pred_fallthru
      _
    // Predicated region
    $region46: #{tpu_custom_call.1} parent=1 // pred_check
      _
    $region47: #{tpu_custom_call.1} parent=1 // pred_check_branch
      %47 = sbr.rel (0) target = $region49
    $region48: #{tpu_custom_call.1} parent=1 // pred_region
      %49 = vsyncadd [#allocation5], 0
      %s50 = sshll.u32 %s11, 4
      %s51 = int_to_ptr.hbm [resolvable:$true] %s50
      %s52 = sshll.u32 [#allocation4], 4
      %s53 = int_to_ptr.vmem [resolvable:$true] %s52
      %58 = dma.hbm_to_vmem [thread:$0]  %s51, 1536, %s53, [#allocation5], 128, 128, 8
    $region49: #{tpu_custom_call.1} parent=1 // pred_fallthru
      _
    // Predicated region
    $region50: #{tpu_custom_call.1} parent=1 // pred_check
      _
    $region51: #{tpu_custom_call.1} parent=1 // pred_check_branch
      %60 = sbr.rel (0) target = $region53
    $region52: #{tpu_custom_call.1} parent=1 // pred_region
      _
    $region53: #{tpu_custom_call.1} parent=1 // pred_fallthru
      _
    // Predicated region
    $region54: #{tpu_custom_call.1} parent=1 // pred_check
      _
    $region55: #{tpu_custom_call.1} parent=1 // pred_check_branch
      %62 = sbr.rel (0) target = $region57
    $region56: #{tpu_custom_call.1} parent=1 // pred_region
      _
    $region57: #{tpu_custom_call.1} parent=1 // pred_fallthru
      _
    // Predicated region
    $region58: #{tpu_custom_call.1} parent=1 // pred_check
      _
    $region59: #{tpu_custom_call.1} parent=1 // pred_check_branch
      %64 = sbr.rel (0) target = $region61
    $region60: #{tpu_custom_call.1} parent=1 // pred_region
      _
    $region61: #{tpu_custom_call.1} parent=1 // pred_fallthru
      _
    // Predicated region
    $region62: #{tpu_custom_call.1} parent=1 // pred_check
      _
    $region63: #{tpu_custom_call.1} parent=1 // pred_check_branch
      %66 = sbr.rel (0) target = $region65
    $region64: #{tpu_custom_call.1} parent=1 // pred_region
      %68 = dma.done [#allocation5], 1536
    $region65: #{tpu_custom_call.1} parent=1 // pred_fallthru
      _
    %v69 = vld [vmem:[%s5] sm:$0xff]
    %v70 = vld [vmem:[%s5 + $0x8] sm:$0xff]
    %v71 = vld [vmem:[%s5 + $0x10] sm:$0xff]
    %v72 = vld [vmem:[%s5 + $0x18] sm:$0xff]
    %v73 = vld [vmem:[%s0] sm:$0x7]
    %v74 = vld [vmem:[%s6] sm:$0xff]
    %v75 = vld [vmem:[%s6 + $0x8] sm:$0xff]
    %v76 = vld [vmem:[%s6 + $0x10] sm:$0xff]
    %v77 = vld [vmem:[%s6 + $0x18] sm:$0xff]
    %79 = vset.pattern.permute.xlu0 0
    %80 = vperm.xlu0 %79, %v74
    %v81 = vpop.permute.xlu0 %80
    %84 = vset.pattern.permute.xlu0 0
    %85 = vperm.xlu0 %84, %v75
    %v86 = vpop.permute.xlu0 %85
    %89 = vset.pattern.permute.xlu0 0
    %90 = vperm.xlu0 %89, %v76
    %v91 = vpop.permute.xlu0 %90
    %94 = vset.pattern.permute.xlu0 0
    %95 = vperm.xlu0 %94, %v77
    %v96 = vpop.permute.xlu0 %95
    %vm98 = vcmask 23552
    %v100 = vsel %vm98, %v69, 0
    %v103 = vsel %vm98, %v70, 0
    %v106 = vsel %vm98, %v71, 0
    %v109 = vsel %vm98, %v72, 0
    %vm111 = vcmask 1042432
    %v113 = vsel %vm111, %v73, 0
    %115 = vmatpush.msra.mxu0 0.0
    %116 = vmatpush.msra.mxu0 0.0
    %117 = vmatpush.msra.mxu0 0.0
    %118 = vmatpush.msra.mxu0 0.0
    %119 = vmatpush.msra.mxu0 0.0
    %120 = vmatpush.msra.mxu0 0.0
    %121 = vmatpush.msra.mxu0 0.0
    %122 = vmatpush.msra.mxu0 0.0
    %123 = vmatpush.msra.mxu0 0.0
    %124 = vmatpush.msra.mxu0 0.0
    %125 = vmatpush.msra.mxu0 0.0
    %126 = vmatpush.msra.mxu0 0.0
    %127 = vmatpush.msra.mxu0 0.0
    %128 = vmatpush.msra.mxu0 0.0
    %129 = vmatpush.msra.mxu0 0.0
    %130 = vmatpush.msra.mxu0 %v113
    %131 = vmatmul.f32.gmra.mxu0 %v100
    %v132 = vpop.f32.mrf.mxu0
    %v133 = vadd.f32 %v81, %v132
    %134 = vmatmul.f32.gmra.mxu0 %v103
    %v135 = vpop.f32.mrf.mxu0
    %v136 = vadd.f32 %v86, %v135
    %137 = vmatmul.f32.gmra.mxu0 %v106
    %v138 = vpop.f32.mrf.mxu0
    %v139 = vadd.f32 %v91, %v138
    %140 = vmatmul.f32.gmra.mxu0 %v109
    %v141 = vpop.f32.mrf.mxu0
    %v142 = vadd.f32 %v96, %v141
    %143 = vdwg.mxu0
    %v144 = vld [vmem:[%s1] sm:$0x77]
    %v145 = vld [vmem:[%s7] sm:$0xff]
    %v146 = vld [vmem:[%s8] sm:$0xff]
    %148 = vset.pattern.permute.xlu0 0
    %149 = vperm.xlu0 %148, %v146
    %v150 = vpop.permute.xlu0 %149
    %153 = vst [vmem:[#allocation1] ss:$2 sm:$0xff] %v144
    %v154 = vld.sshfl [vmem:[#allocation1] sm:$0xff pattern:$0x75316420]
    %v155 = vld.sshfl [vmem:[#allocation1 + $0x8] sm:$0xff pattern:$0x75316420]
    %v157 = vsel %vm98, %v145, 0
    %v159 = vsel %vm111, %v154, 0
    %v161 = vsel %vm111, %v155, 0
    %163 = vmatpush.msra.mxu0 0.0
    %164 = vmatpush.msra.mxu0 0.0
    %165 = vmatpush.msra.mxu0 0.0
    %166 = vmatpush.msra.mxu0 0.0
    %167 = vmatpush.msra.mxu0 0.0
    %168 = vmatpush.msra.mxu0 0.0
    %169 = vmatpush.msra.mxu0 0.0
    %170 = vmatpush.msra.mxu0 0.0
    %171 = vmatpush.msra.mxu0 0.0
    %172 = vmatpush.msra.mxu0 0.0
    %173 = vmatpush.msra.mxu0 0.0
    %174 = vmatpush.msra.mxu0 0.0
    %175 = vmatpush.msra.mxu0 0.0
    %176 = vmatpush.msra.mxu0 0.0
    %177 = vmatpush.msra.mxu0 0.0
    %178 = vmatpush.msra.mxu0 %v159
    %179 = vmatmul.f32.gmra.mxu0 %v157
    %v180 = vpop.f32.mrf.mxu0
    %v181 = vadd.f32 %v150, %v180
    %182 = vdwg.mxu0
    %183 = vmatpush.msra.mxu0 0.0
    %184 = vmatpush.msra.mxu0 0.0
    %185 = vmatpush.msra.mxu0 0.0
    %186 = vmatpush.msra.mxu0 0.0
    %187 = vmatpush.msra.mxu0 0.0
    %188 = vmatpush.msra.mxu0 0.0
    %189 = vmatpush.msra.mxu0 0.0
    %190 = vmatpush.msra.mxu0 0.0
    %191 = vmatpush.msra.mxu0 0.0
    %192 = vmatpush.msra.mxu0 0.0
    %193 = vmatpush.msra.mxu0 0.0
    %194 = vmatpush.msra.mxu0 0.0
    %195 = vmatpush.msra.mxu0 0.0
    %196 = vmatpush.msra.mxu0 0.0
    %197 = vmatpush.msra.mxu0 0.0
    %198 = vmatpush.msra.mxu0 %v161
    %199 = vmatmul.f32.gmra.mxu0 %v157
    %v200 = vpop.f32.mrf.mxu0
    %v201 = vadd.f32 %v150, %v200
    %202 = vdwg.mxu0
    %v203 = vmax.f32 %v181, 0.0
    %v204 = vmax.f32 %v201, 0.0
    %v205 = vld [vmem:[%s9] sm:$0xff]
    %v206 = vld [vmem:[%s9 + $0x8] sm:$0xff]
    %v207 = vld [vmem:[%s9 + $0x10] sm:$0xff]
    %v208 = vld [vmem:[%s9 + $0x18] sm:$0xff]
    %v209 = vld [vmem:[%s10] sm:$0xff]
    %v210 = vld [vmem:[%s10 + $0x8] sm:$0xff]
    %v211 = vld [vmem:[%s10 + $0x10] sm:$0xff]
    %v212 = vld [vmem:[%s10 + $0x18] sm:$0xff]
    %214 = vset.pattern.permute.xlu0 0
    %215 = vperm.xlu0 %214, %v209
    %v216 = vpop.permute.xlu0 %215
    %219 = vset.pattern.permute.xlu0 0
    %220 = vperm.xlu0 %219, %v210
    %v221 = vpop.permute.xlu0 %220
    %224 = vset.pattern.permute.xlu0 0
    %225 = vperm.xlu0 %224, %v211
    %v226 = vpop.permute.xlu0 %225
    %229 = vset.pattern.permute.xlu0 0
    %230 = vperm.xlu0 %229, %v212
    %v231 = vpop.permute.xlu0 %230
    %vm233 = vcmask 64512
    %v235 = vsel %vm233, %v205, 0
    %v238 = vsel %vm233, %v206, 0
    %v241 = vsel %vm233, %v207, 0
    %v244 = vsel %vm233, %v208, 0
    %246 = vmatpush.msra.mxu0 0.0
    %247 = vmatpush.msra.mxu0 0.0
    %248 = vmatpush.msra.mxu0 0.0
    %249 = vmatpush.msra.mxu0 0.0
    %250 = vmatpush.msra.mxu0 0.0
    %251 = vmatpush.msra.mxu0 0.0
    %252 = vmatpush.msra.mxu0 0.0
    %253 = vmatpush.msra.mxu0 0.0
    %254 = vmatpush.msra.mxu0 0.0
    %255 = vmatpush.msra.mxu0 0.0
    %256 = vmatpush.msra.mxu0 0.0
    %257 = vmatpush.msra.mxu0 0.0
    %258 = vmatpush.msra.mxu0 0.0
    %259 = vmatpush.msra.mxu0 0.0
    %260 = vmatpush.msra.mxu0 0.0
    %261 = vmatpush.msra.mxu0 %v203
    %262 = vmatmul.f32.gmra.mxu0 %v235
    %v263 = vpop.f32.mrf.mxu0
    %v264 = vadd.f32 %v216, %v263
    %265 = vmatmul.f32.gmra.mxu0 %v238
    %v266 = vpop.f32.mrf.mxu0
    %v267 = vadd.f32 %v221, %v266
    %268 = vmatmul.f32.gmra.mxu0 %v241
    %v269 = vpop.f32.mrf.mxu0
    %v270 = vadd.f32 %v226, %v269
    %271 = vmatmul.f32.gmra.mxu0 %v244
    %v272 = vpop.f32.mrf.mxu0
    %v273 = vadd.f32 %v231, %v272
    %274 = vdwg.mxu0
    %275 = vmatpush.msra.mxu0 0.0
    %276 = vmatpush.msra.mxu0 0.0
    %277 = vmatpush.msra.mxu0 0.0
    %278 = vmatpush.msra.mxu0 0.0
    %279 = vmatpush.msra.mxu0 0.0
    %280 = vmatpush.msra.mxu0 0.0
    %281 = vmatpush.msra.mxu0 0.0
    %282 = vmatpush.msra.mxu0 0.0
    %283 = vmatpush.msra.mxu0 0.0
    %284 = vmatpush.msra.mxu0 0.0
    %285 = vmatpush.msra.mxu0 0.0
    %286 = vmatpush.msra.mxu0 0.0
    %287 = vmatpush.msra.mxu0 0.0
    %288 = vmatpush.msra.mxu0 0.0
    %289 = vmatpush.msra.mxu0 0.0
    %290 = vmatpush.msra.mxu0 %v204
    %291 = vmatmul.f32.gmra.mxu0 %v235
    %v292 = vpop.f32.mrf.mxu0
    %v293 = vadd.f32 %v216, %v292
    %294 = vmatmul.f32.gmra.mxu0 %v238
    %v295 = vpop.f32.mrf.mxu0
    %v296 = vadd.f32 %v221, %v295
    %297 = vmatmul.f32.gmra.mxu0 %v241
    %v298 = vpop.f32.mrf.mxu0
    %v299 = vadd.f32 %v226, %v298
    %300 = vmatmul.f32.gmra.mxu0 %v244
    %v301 = vpop.f32.mrf.mxu0
    %v302 = vadd.f32 %v231, %v301
    %303 = vdwg.mxu0
    %304 = vst [vmem:[#allocation2] sm:$0xff] %v264
    %305 = vst [vmem:[#allocation2 + $0x8] sm:$0xff] %v293
    %306 = vst [vmem:[#allocation2 + $0x10] sm:$0xff] %v267
    %307 = vst [vmem:[#allocation2 + $0x18] sm:$0xff] %v296
    %308 = vst [vmem:[#allocation2 + $0x20] sm:$0xff] %v270
    %309 = vst [vmem:[#allocation2 + $0x28] sm:$0xff] %v299
    %310 = vst [vmem:[#allocation2 + $0x30] sm:$0xff] %v273
    %311 = vst [vmem:[#allocation2 + $0x38] sm:$0xff] %v302
    %s312 = scalar_lea.vmem %s7, 8
    %v313 = vld [vmem:[%s312] sm:$0xff]
    %s314 = scalar_lea.vmem %s8, 8
    %v315 = vld [vmem:[%s314] sm:$0xff]
    %317 = vset.pattern.permute.xlu0 0
    %318 = vperm.xlu0 %317, %v315
    %v319 = vpop.permute.xlu0 %318
    %321 = vst [vmem:[#allocation1] ss:$2 sm:$0xff] %v144
    %v322 = vld.sshfl [vmem:[#allocation1] sm:$0xff pattern:$0x75316420]
    %v323 = vld.sshfl [vmem:[#allocation1 + $0x8] sm:$0xff pattern:$0x75316420]
    %v325 = vsel %vm98, %v313, 0
    %v327 = vsel %vm111, %v322, 0
    %v329 = vsel %vm111, %v323, 0
    %331 = vmatpush.msra.mxu0 0.0
    %332 = vmatpush.msra.mxu0 0.0
    %333 = vmatpush.msra.mxu0 0.0
    %334 = vmatpush.msra.mxu0 0.0
    %335 = vmatpush.msra.mxu0 0.0
    %336 = vmatpush.msra.mxu0 0.0
    %337 = vmatpush.msra.mxu0 0.0
    %338 = vmatpush.msra.mxu0 0.0
    %339 = vmatpush.msra.mxu0 0.0
    %340 = vmatpush.msra.mxu0 0.0
    %341 = vmatpush.msra.mxu0 0.0
    %342 = vmatpush.msra.mxu0 0.0
    %343 = vmatpush.msra.mxu0 0.0
    %344 = vmatpush.msra.mxu0 0.0
    %345 = vmatpush.msra.mxu0 0.0
    %346 = vmatpush.msra.mxu0 %v327
    %347 = vmatmul.f32.gmra.mxu0 %v325
    %v348 = vpop.f32.mrf.mxu0
    %v349 = vadd.f32 %v319, %v348
    %350 = vdwg.mxu0
    %351 = vmatpush.msra.mxu0 0.0
    %352 = vmatpush.msra.mxu0 0.0
    %353 = vmatpush.msra.mxu0 0.0
    %354 = vmatpush.msra.mxu0 0.0
    %355 = vmatpush.msra.mxu0 0.0
    %356 = vmatpush.msra.mxu0 0.0
    %357 = vmatpush.msra.mxu0 0.0
    %358 = vmatpush.msra.mxu0 0.0
    %359 = vmatpush.msra.mxu0 0.0
    %360 = vmatpush.msra.mxu0 0.0
    %361 = vmatpush.msra.mxu0 0.0
    %362 = vmatpush.msra.mxu0 0.0
    %363 = vmatpush.msra.mxu0 0.0
    %364 = vmatpush.msra.mxu0 0.0
    %365 = vmatpush.msra.mxu0 0.0
    %366 = vmatpush.msra.mxu0 %v329
    %367 = vmatmul.f32.gmra.mxu0 %v325
    %v368 = vpop.f32.mrf.mxu0
    %v369 = vadd.f32 %v319, %v368
    %370 = vdwg.mxu0
    %v371 = vmax.f32 %v349, 0.0
    %v372 = vmax.f32 %v369, 0.0
    %s373 = scalar_lea.vmem %s9, 32
    %v374 = vld [vmem:[%s373] sm:$0xff]
    %v375 = vld [vmem:[%s373 + $0x8] sm:$0xff]
    %v376 = vld [vmem:[%s373 + $0x10] sm:$0xff]
    %v377 = vld [vmem:[%s373 + $0x18] sm:$0xff]
    %s378 = scalar_lea.vmem %s10, 32
    %v379 = vld [vmem:[%s378] sm:$0xff]
    %v380 = vld [vmem:[%s378 + $0x8] sm:$0xff]
    %v381 = vld [vmem:[%s378 + $0x10] sm:$0xff]
    %v382 = vld [vmem:[%s378 + $0x18] sm:$0xff]
    %384 = vset.pattern.permute.xlu0 0
    %385 = vperm.xlu0 %384, %v379
    %v386 = vpop.permute.xlu0 %385
    %389 = vset.pattern.permute.xlu0 0
    %390 = vperm.xlu0 %389, %v380
    %v391 = vpop.permute.xlu0 %390
    %394 = vset.pattern.permute.xlu0 0
    %395 = vperm.xlu0 %394, %v381
    %v396 = vpop.permute.xlu0 %395
    %399 = vset.pattern.permute.xlu0 0
    %400 = vperm.xlu0 %399, %v382
    %v401 = vpop.permute.xlu0 %400
    %v404 = vsel %vm233, %v374, 0
    %v407 = vsel %vm233, %v375, 0
    %v410 = vsel %vm233, %v376, 0
    %v413 = vsel %vm233, %v377, 0
    %415 = vmatpush.msra.mxu0 0.0
    %416 = vmatpush.msra.mxu0 0.0
    %417 = vmatpush.msra.mxu0 0.0
    %418 = vmatpush.msra.mxu0 0.0
    %419 = vmatpush.msra.mxu0 0.0
    %420 = vmatpush.msra.mxu0 0.0
    %421 = vmatpush.msra.mxu0 0.0
    %422 = vmatpush.msra.mxu0 0.0
    %423 = vmatpush.msra.mxu0 0.0
    %424 = vmatpush.msra.mxu0 0.0
    %425 = vmatpush.msra.mxu0 0.0
    %426 = vmatpush.msra.mxu0 0.0
    %427 = vmatpush.msra.mxu0 0.0
    %428 = vmatpush.msra.mxu0 0.0
    %429 = vmatpush.msra.mxu0 0.0
    %430 = vmatpush.msra.mxu0 %v371
    %431 = vmatmul.f32.gmra.mxu0 %v404
    %v432 = vpop.f32.mrf.mxu0
    %v433 = vadd.f32 %v386, %v432
    %434 = vmatmul.f32.gmra.mxu0 %v407
    %v435 = vpop.f32.mrf.mxu0
    %v436 = vadd.f32 %v391, %v435
    %437 = vmatmul.f32.gmra.mxu0 %v410
    %v438 = vpop.f32.mrf.mxu0
    %v439 = vadd.f32 %v396, %v438
    %440 = vmatmul.f32.gmra.mxu0 %v413
    %v441 = vpop.f32.mrf.mxu0
    %v442 = vadd.f32 %v401, %v441
    %443 = vdwg.mxu0
    %444 = vmatpush.msra.mxu0 0.0
    %445 = vmatpush.msra.mxu0 0.0
    %446 = vmatpush.msra.mxu0 0.0
    %447 = vmatpush.msra.mxu0 0.0
    %448 = vmatpush.msra.mxu0 0.0
    %449 = vmatpush.msra.mxu0 0.0
    %450 = vmatpush.msra.mxu0 0.0
    %451 = vmatpush.msra.mxu0 0.0
    %452 = vmatpush.msra.mxu0 0.0
    %453 = vmatpush.msra.mxu0 0.0
    %454 = vmatpush.msra.mxu0 0.0
    %455 = vmatpush.msra.mxu0 0.0
    %456 = vmatpush.msra.mxu0 0.0
    %457 = vmatpush.msra.mxu0 0.0
    %458 = vmatpush.msra.mxu0 0.0
    %459 = vmatpush.msra.mxu0 %v372
    %460 = vmatmul.f32.gmra.mxu0 %v404
    %v461 = vpop.f32.mrf.mxu0
    %v462 = vadd.f32 %v386, %v461
    %463 = vmatmul.f32.gmra.mxu0 %v407
    %v464 = vpop.f32.mrf.mxu0
    %v465 = vadd.f32 %v391, %v464
    %466 = vmatmul.f32.gmra.mxu0 %v410
    %v467 = vpop.f32.mrf.mxu0
    %v468 = vadd.f32 %v396, %v467
    %469 = vmatmul.f32.gmra.mxu0 %v413
    %v470 = vpop.f32.mrf.mxu0
    %v471 = vadd.f32 %v401, %v470
    %472 = vdwg.mxu0
    %s473 = scalar_lea.vmem [#allocation2], 64
    %474 = vst [vmem:[%s473] sm:$0xff] %v433
    %475 = vst [vmem:[%s473 + $0x8] sm:$0xff] %v462
    %476 = vst [vmem:[%s473 + $0x10] sm:$0xff] %v436
    %477 = vst [vmem:[%s473 + $0x18] sm:$0xff] %v465
    %478 = vst [vmem:[%s473 + $0x20] sm:$0xff] %v439
    %479 = vst [vmem:[%s473 + $0x28] sm:$0xff] %v468
    %480 = vst [vmem:[%s473 + $0x30] sm:$0xff] %v442
    %481 = vst [vmem:[%s473 + $0x38] sm:$0xff] %v471
    %s482 = scalar_lea.vmem %s7, 16
    %v483 = vld [vmem:[%s482] sm:$0xff]
    %s484 = scalar_lea.vmem %s8, 16
    %v485 = vld [vmem:[%s484] sm:$0xff]
    %487 = vset.pattern.permute.xlu0 0
    %488 = vperm.xlu0 %487, %v485
    %v489 = vpop.permute.xlu0 %488
    %491 = vst [vmem:[#allocation1] ss:$2 sm:$0xff] %v144
    %v492 = vld.sshfl [vmem:[#allocation1] sm:$0xff pattern:$0x75316420]
    %v493 = vld.sshfl [vmem:[#allocation1 + $0x8] sm:$0xff pattern:$0x75316420]
    %v495 = vsel %vm98, %v483, 0
    %v497 = vsel %vm111, %v492, 0
    %v499 = vsel %vm111, %v493, 0
    %501 = vmatpush.msra.mxu0 0.0
    %502 = vmatpush.msra.mxu0 0.0
    %503 = vmatpush.msra.mxu0 0.0
    %504 = vmatpush.msra.mxu0 0.0
    %505 = vmatpush.msra.mxu0 0.0
    %506 = vmatpush.msra.mxu0 0.0
    %507 = vmatpush.msra.mxu0 0.0
    %508 = vmatpush.msra.mxu0 0.0
    %509 = vmatpush.msra.mxu0 0.0
    %510 = vmatpush.msra.mxu0 0.0
    %511 = vmatpush.msra.mxu0 0.0
    %512 = vmatpush.msra.mxu0 0.0
    %513 = vmatpush.msra.mxu0 0.0
    %514 = vmatpush.msra.mxu0 0.0
    %515 = vmatpush.msra.mxu0 0.0
    %516 = vmatpush.msra.mxu0 %v497
    %517 = vmatmul.f32.gmra.mxu0 %v495
    %v518 = vpop.f32.mrf.mxu0
    %v519 = vadd.f32 %v489, %v518
    %520 = vdwg.mxu0
    %521 = vmatpush.msra.mxu0 0.0
    %522 = vmatpush.msra.mxu0 0.0
    %523 = vmatpush.msra.mxu0 0.0
    %524 = vmatpush.msra.mxu0 0.0
    %525 = vmatpush.msra.mxu0 0.0
    %526 = vmatpush.msra.mxu0 0.0
    %527 = vmatpush.msra.mxu0 0.0
    %528 = vmatpush.msra.mxu0 0.0
    %529 = vmatpush.msra.mxu0 0.0
    %530 = vmatpush.msra.mxu0 0.0
    %531 = vmatpush.msra.mxu0 0.0
    %532 = vmatpush.msra.mxu0 0.0
    %533 = vmatpush.msra.mxu0 0.0
    %534 = vmatpush.msra.mxu0 0.0
    %535 = vmatpush.msra.mxu0 0.0
    %536 = vmatpush.msra.mxu0 %v499
    %537 = vmatmul.f32.gmra.mxu0 %v495
    %v538 = vpop.f32.mrf.mxu0
    %v539 = vadd.f32 %v489, %v538
    %540 = vdwg.mxu0
    %v541 = vmax.f32 %v519, 0.0
    %v542 = vmax.f32 %v539, 0.0
    %s543 = scalar_lea.vmem %s9, 64
    %v544 = vld [vmem:[%s543] sm:$0xff]
    %v545 = vld [vmem:[%s543 + $0x8] sm:$0xff]
    %v546 = vld [vmem:[%s543 + $0x10] sm:$0xff]
    %v547 = vld [vmem:[%s543 + $0x18] sm:$0xff]
    %s548 = scalar_lea.vmem %s10, 64
    %v549 = vld [vmem:[%s548] sm:$0xff]
    %v550 = vld [vmem:[%s548 + $0x8] sm:$0xff]
    %v551 = vld [vmem:[%s548 + $0x10] sm:$0xff]
    %v552 = vld [vmem:[%s548 + $0x18] sm:$0xff]
    %554 = vset.pattern.permute.xlu0 0
    %555 = vperm.xlu0 %554, %v549
    %v556 = vpop.permute.xlu0 %555
    %559 = vset.pattern.permute.xlu0 0
    %560 = vperm.xlu0 %559, %v550
    %v561 = vpop.permute.xlu0 %560
    %564 = vset.pattern.permute.xlu0 0
    %565 = vperm.xlu0 %564, %v551
    %v566 = vpop.permute.xlu0 %565
    %569 = vset.pattern.permute.xlu0 0
    %570 = vperm.xlu0 %569, %v552
    %v571 = vpop.permute.xlu0 %570
    %v574 = vsel %vm233, %v544, 0
    %v577 = vsel %vm233, %v545, 0
    %v580 = vsel %vm233, %v546, 0
    %v583 = vsel %vm233, %v547, 0
    %585 = vmatpush.msra.mxu0 0.0
    %586 = vmatpush.msra.mxu0 0.0
    %587 = vmatpush.msra.mxu0 0.0
    %588 = vmatpush.msra.mxu0 0.0
    %589 = vmatpush.msra.mxu0 0.0
    %590 = vmatpush.msra.mxu0 0.0
    %591 = vmatpush.msra.mxu0 0.0
    %592 = vmatpush.msra.mxu0 0.0
    %593 = vmatpush.msra.mxu0 0.0
    %594 = vmatpush.msra.mxu0 0.0
    %595 = vmatpush.msra.mxu0 0.0
    %596 = vmatpush.msra.mxu0 0.0
    %597 = vmatpush.msra.mxu0 0.0
    %598 = vmatpush.msra.mxu0 0.0
    %599 = vmatpush.msra.mxu0 0.0
    %600 = vmatpush.msra.mxu0 %v541
    %601 = vmatmul.f32.gmra.mxu0 %v574
    %v602 = vpop.f32.mrf.mxu0
    %v603 = vadd.f32 %v556, %v602
    %604 = vmatmul.f32.gmra.mxu0 %v577
    %v605 = vpop.f32.mrf.mxu0
    %v606 = vadd.f32 %v561, %v605
    %607 = vmatmul.f32.gmra.mxu0 %v580
    %v608 = vpop.f32.mrf.mxu0
    %v609 = vadd.f32 %v566, %v608
    %610 = vmatmul.f32.gmra.mxu0 %v583
    %v611 = vpop.f32.mrf.mxu0
    %v612 = vadd.f32 %v571, %v611
    %613 = vdwg.mxu0
    %614 = vmatpush.msra.mxu0 0.0
    %615 = vmatpush.msra.mxu0 0.0
    %616 = vmatpush.msra.mxu0 0.0
    %617 = vmatpush.msra.mxu0 0.0
    %618 = vmatpush.msra.mxu0 0.0
    %619 = vmatpush.msra.mxu0 0.0
    %620 = vmatpush.msra.mxu0 0.0
    %621 = vmatpush.msra.mxu0 0.0
    %622 = vmatpush.msra.mxu0 0.0
    %623 = vmatpush.msra.mxu0 0.0
    %624 = vmatpush.msra.mxu0 0.0
    %625 = vmatpush.msra.mxu0 0.0
    %626 = vmatpush.msra.mxu0 0.0
    %627 = vmatpush.msra.mxu0 0.0
    %628 = vmatpush.msra.mxu0 0.0
    %629 = vmatpush.msra.mxu0 %v542
    %630 = vmatmul.f32.gmra.mxu0 %v574
    %v631 = vpop.f32.mrf.mxu0
    %v632 = vadd.f32 %v556, %v631
    %633 = vmatmul.f32.gmra.mxu0 %v577
    %v634 = vpop.f32.mrf.mxu0
    %v635 = vadd.f32 %v561, %v634
    %636 = vmatmul.f32.gmra.mxu0 %v580
    %v637 = vpop.f32.mrf.mxu0
    %v638 = vadd.f32 %v566, %v637
    %639 = vmatmul.f32.gmra.mxu0 %v583
    %v640 = vpop.f32.mrf.mxu0
    %v641 = vadd.f32 %v571, %v640
    %642 = vdwg.mxu0
    %s643 = scalar_lea.vmem [#allocation2], 128
    %644 = vst [vmem:[%s643] sm:$0xff] %v603
    %645 = vst [vmem:[%s643 + $0x8] sm:$0xff] %v632
    %646 = vst [vmem:[%s643 + $0x10] sm:$0xff] %v606
    %647 = vst [vmem:[%s643 + $0x18] sm:$0xff] %v635
    %648 = vst [vmem:[%s643 + $0x20] sm:$0xff] %v609
    %649 = vst [vmem:[%s643 + $0x28] sm:$0xff] %v638
    %650 = vst [vmem:[%s643 + $0x30] sm:$0xff] %v612
    %651 = vst [vmem:[%s643 + $0x38] sm:$0xff] %v641
    %v652 = vpack.c.bf16 %v136, %v133
    %v653 = vpack.c.bf16 %v142, %v139
    %v654 = vld [vmem:[%s2] sm:$0xff]
    %v655 = vld [vmem:[%s2 + $0x8] sm:$0xff]
    %v656 = vld [vmem:[%s2 + $0x10] sm:$0xff]
    %v657 = vld [vmem:[%s2 + $0x18] sm:$0xff]
    %v658 = vld [vmem:[%s2 + $0x20] sm:$0xff]
    %v659 = vld [vmem:[%s2 + $0x28] sm:$0xff]
    %v660 = vld [vmem:[%s2 + $0x30] sm:$0xff]
    %v661 = vld [vmem:[%s2 + $0x38] sm:$0xff]
    %v662 = vld [vmem:[%s2 + $0x40] sm:$0xff]
    %v663 = vld [vmem:[%s2 + $0x48] sm:$0xff]
    %v664 = vld [vmem:[%s2 + $0x50] sm:$0xff]
    %v665 = vld [vmem:[%s2 + $0x58] sm:$0xff]
    %v666 = vld [vmem:[%s2 + $0x60] sm:$0xff]
    %v667 = vld [vmem:[%s2 + $0x68] sm:$0xff]
    %v668 = vld [vmem:[%s2 + $0x70] sm:$0xff]
    %v669 = vld [vmem:[%s2 + $0x78] sm:$0xff]
    %v686 = vunpack.c.l.b16 %v654
    %v687 = vunpack.c.h.b16 %v654
    %v688 = vunpack.c.l.b16 %v655
    %v689 = vunpack.c.h.b16 %v655
    %v690 = vunpack.c.l.b16 %v656
    %v691 = vunpack.c.h.b16 %v656
    %v692 = vunpack.c.l.b16 %v657
    %v693 = vunpack.c.h.b16 %v657
    %v694 = vunpack.c.l.b16 %v658
    %v695 = vunpack.c.h.b16 %v658
    %v696 = vunpack.c.l.b16 %v659
    %v697 = vunpack.c.h.b16 %v659
    %v698 = vunpack.c.l.b16 %v660
    %v699 = vunpack.c.h.b16 %v660
    %v700 = vunpack.c.l.b16 %v661
    %v701 = vunpack.c.h.b16 %v661
    %v702 = vunpack.c.l.b16 %v662
    %v703 = vunpack.c.h.b16 %v662
    %v704 = vunpack.c.l.b16 %v663
    %v705 = vunpack.c.h.b16 %v663
    %v706 = vunpack.c.l.b16 %v664
    %v707 = vunpack.c.h.b16 %v664
    %v708 = vunpack.c.l.b16 %v665
    %v709 = vunpack.c.h.b16 %v665
    %v710 = vunpack.c.l.b16 %v666
    %v711 = vunpack.c.h.b16 %v666
    %v712 = vunpack.c.l.b16 %v667
    %v713 = vunpack.c.h.b16 %v667
    %v714 = vunpack.c.l.b16 %v668
    %v715 = vunpack.c.h.b16 %v668
    %v716 = vunpack.c.l.b16 %v669
    %v717 = vunpack.c.h.b16 %v669
    %v718 = vpack.c.b16 %v688, %v686
    %v719 = vpack.c.b16 %v689, %v687
    %v720 = vpack.c.b16 %v692, %v690
    %v721 = vpack.c.b16 %v693, %v691
    %v722 = vpack.c.b16 %v696, %v694
    %v723 = vpack.c.b16 %v697, %v695
    %v724 = vpack.c.b16 %v700, %v698
    %v725 = vpack.c.b16 %v701, %v699
    %v726 = vpack.c.b16 %v704, %v702
    %v727 = vpack.c.b16 %v705, %v703
    %v728 = vpack.c.b16 %v708, %v706
    %v729 = vpack.c.b16 %v709, %v707
    %v730 = vpack.c.b16 %v712, %v710
    %v731 = vpack.c.b16 %v713, %v711
    %v732 = vpack.c.b16 %v716, %v714
    %v733 = vpack.c.b16 %v717, %v715
    %750 = vmatpush.bf16.msra.mxu0 %v732
    %751 = vmatpush.bf16.msra.mxu0 %v730
    %752 = vmatpush.bf16.msra.mxu0 %v728
    %753 = vmatpush.bf16.msra.mxu0 %v726
    %754 = vmatpush.bf16.msra.mxu0 %v724
    %755 = vmatpush.bf16.msra.mxu0 %v722
    %756 = vmatpush.bf16.msra.mxu0 %v720
    %757 = vmatpush.bf16.msra.mxu0 %v718
    %758 = vmatmul.bf16.gmra.mxu0 %v652
    %v759 = vpop.f32.mrf.mxu0
    %v760 = vadd.f32 0.0, %v759
    %v761 = vpop.f32.mrf.mxu0
    %v762 = vadd.f32 0.0, %v761
    %763 = vmatmul.bf16.gmra.mxu0 %v653
    %v764 = vpop.f32.mrf.mxu0
    %v765 = vadd.f32 0.0, %v764
    %v766 = vpop.f32.mrf.mxu0
    %v767 = vadd.f32 0.0, %v766
    %768 = vdwg.mxu0
    %769 = vmatpush.bf16.msra.mxu0 %v733
    %770 = vmatpush.bf16.msra.mxu0 %v731
    %771 = vmatpush.bf16.msra.mxu0 %v729
    %772 = vmatpush.bf16.msra.mxu0 %v727
    %773 = vmatpush.bf16.msra.mxu0 %v725
    %774 = vmatpush.bf16.msra.mxu0 %v723
    %775 = vmatpush.bf16.msra.mxu0 %v721
    %776 = vmatpush.bf16.msra.mxu0 %v719
    %777 = vmatmul.bf16.gmra.mxu0 %v652
    %v778 = vpop.f32.mrf.mxu0
    %v779 = vadd.f32 0.0, %v778
    %v780 = vpop.f32.mrf.mxu0
    %v781 = vadd.f32 0.0, %v780
    %782 = vmatmul.bf16.gmra.mxu0 %v653
    %v783 = vpop.f32.mrf.mxu0
    %v784 = vadd.f32 0.0, %v783
    %v785 = vpop.f32.mrf.mxu0
    %v786 = vadd.f32 0.0, %v785
    %787 = vdwg.mxu0
    %v788 = vld [vmem:[#allocation2] sm:$0xff]
    %v789 = vld [vmem:[#allocation2 + $0x8] sm:$0xff]
    %v790 = vld [vmem:[#allocation2 + $0x10] sm:$0xff]
    %v791 = vld [vmem:[#allocation2 + $0x18] sm:$0xff]
    %v792 = vld [vmem:[#allocation2 + $0x20] sm:$0xff]
    %v793 = vld [vmem:[#allocation2 + $0x28] sm:$0xff]
    %v794 = vld [vmem:[#allocation2 + $0x30] sm:$0xff]
    %v795 = vld [vmem:[#allocation2 + $0x38] sm:$0xff]
    %v796 = vmul.f32 %v788, %v760
    %v797 = vmul.f32 %v789, %v779
    %v798 = vmul.f32 %v790, %v762
    %v799 = vmul.f32 %v791, %v781
    %v800 = vmul.f32 %v792, %v765
    %v801 = vmul.f32 %v793, %v784
    %v802 = vmul.f32 %v794, %v767
    %v803 = vmul.f32 %v795, %v786
    %v804 = vpack.c.bf16 %v798, %v796
    %v805 = vpack.c.bf16 %v799, %v797
    %v806 = vpack.c.bf16 %v802, %v800
    %v807 = vpack.c.bf16 %v803, %v801
    %v808 = vld [vmem:[%s3] sm:$0xf]
    %v809 = vld [vmem:[%s3 + $0x4] sm:$0xf]
    %v810 = vld [vmem:[%s3 + $0x8] sm:$0xf]
    %v811 = vld [vmem:[%s3 + $0xc] sm:$0xf]
    %v812 = vld [vmem:[%s3 + $0x10] sm:$0xf]
    %v813 = vld [vmem:[%s3 + $0x14] sm:$0xf]
    %v814 = vld [vmem:[%s3 + $0x18] sm:$0xf]
    %v815 = vld [vmem:[%s3 + $0x1c] sm:$0xf]
    %v816 = vld [vmem:[%s3 + $0x20] sm:$0xf]
    %v817 = vld [vmem:[%s3 + $0x24] sm:$0xf]
    %v818 = vld [vmem:[%s3 + $0x28] sm:$0xf]
    %v819 = vld [vmem:[%s3 + $0x2c] sm:$0xf]
    %v820 = vld [vmem:[%s3 + $0x30] sm:$0xf]
    %v821 = vld [vmem:[%s3 + $0x34] sm:$0xf]
    %v822 = vld [vmem:[%s3 + $0x38] sm:$0xf]
    %v823 = vld [vmem:[%s3 + $0x3c] sm:$0xf]
    %v824 = vld [vmem:[%s3 + $0x40] sm:$0xf]
    %v825 = vld [vmem:[%s3 + $0x44] sm:$0xf]
    %v826 = vld [vmem:[%s3 + $0x48] sm:$0xf]
    %v827 = vld [vmem:[%s3 + $0x4c] sm:$0xf]
    %v828 = vld [vmem:[%s3 + $0x50] sm:$0xf]
    %v829 = vld [vmem:[%s3 + $0x54] sm:$0xf]
    %v830 = vld [vmem:[%s3 + $0x58] sm:$0xf]
    %v831 = vld [vmem:[%s3 + $0x5c] sm:$0xf]
    %v832 = vld [vmem:[%s3 + $0x60] sm:$0xf]
    %v833 = vld [vmem:[%s3 + $0x64] sm:$0xf]
    %v834 = vld [vmem:[%s3 + $0x68] sm:$0xf]
    %v835 = vld [vmem:[%s3 + $0x6c] sm:$0xf]
    %v836 = vld [vmem:[%s3 + $0x70] sm:$0xf]
    %v837 = vld [vmem:[%s3 + $0x74] sm:$0xf]
    %v838 = vld [vmem:[%s3 + $0x78] sm:$0xf]
    %v839 = vld [vmem:[%s3 + $0x7c] sm:$0xf]
    %v872 = vunpack.c.l.b16 %v808
    %v873 = vunpack.c.l.b16 %v809
    %v874 = vunpack.c.l.b16 %v810
    %v875 = vunpack.c.l.b16 %v811
    %v876 = vunpack.c.l.b16 %v812
    %v877 = vunpack.c.l.b16 %v813
    %v878 = vunpack.c.l.b16 %v814
    %v879 = vunpack.c.l.b16 %v815
    %v880 = vunpack.c.l.b16 %v816
    %v881 = vunpack.c.l.b16 %v817
    %v882 = vunpack.c.l.b16 %v818
    %v883 = vunpack.c.l.b16 %v819
    %v884 = vunpack.c.l.b16 %v820
    %v885 = vunpack.c.l.b16 %v821
    %v886 = vunpack.c.l.b16 %v822
    %v887 = vunpack.c.l.b16 %v823
    %v888 = vunpack.c.l.b16 %v824
    %v889 = vunpack.c.l.b16 %v825
    %v890 = vunpack.c.l.b16 %v826
    %v891 = vunpack.c.l.b16 %v827
    %v892 = vunpack.c.l.b16 %v828
    %v893 = vunpack.c.l.b16 %v829
    %v894 = vunpack.c.l.b16 %v830
    %v895 = vunpack.c.l.b16 %v831
    %v896 = vunpack.c.l.b16 %v832
    %v897 = vunpack.c.l.b16 %v833
    %v898 = vunpack.c.l.b16 %v834
    %v899 = vunpack.c.l.b16 %v835
    %v900 = vunpack.c.l.b16 %v836
    %v901 = vunpack.c.l.b16 %v837
    %v902 = vunpack.c.l.b16 %v838
    %v903 = vunpack.c.l.b16 %v839
    %v904 = vpack.c.b16 %v873, %v872
    %v905 = vpack.c.b16 %v875, %v874
    %v906 = vpack.c.b16 %v877, %v876
    %v907 = vpack.c.b16 %v879, %v878
    %v908 = vpack.c.b16 %v881, %v880
    %v909 = vpack.c.b16 %v883, %v882
    %v910 = vpack.c.b16 %v885, %v884
    %v911 = vpack.c.b16 %v887, %v886
    %v912 = vpack.c.b16 %v889, %v888
    %v913 = vpack.c.b16 %v891, %v890
    %v914 = vpack.c.b16 %v893, %v892
    %v915 = vpack.c.b16 %v895, %v894
    %v916 = vpack.c.b16 %v897, %v896
    %v917 = vpack.c.b16 %v899, %v898
    %v918 = vpack.c.b16 %v901, %v900
    %v919 = vpack.c.b16 %v903, %v902
    %936 = vmatpush.bf16.msra.mxu0 %v911
    %937 = vmatpush.bf16.msra.mxu0 %v910
    %938 = vmatpush.bf16.msra.mxu0 %v909
    %939 = vmatpush.bf16.msra.mxu0 %v908
    %940 = vmatpush.bf16.msra.mxu0 %v907
    %941 = vmatpush.bf16.msra.mxu0 %v906
    %942 = vmatpush.bf16.msra.mxu0 %v905
    %943 = vmatpush.bf16.msra.mxu0 %v904
    %944 = vmatmul.bf16.gmra.mxu0 %v804
    %v945 = vpop.f32.mrf.mxu0
    %v946 = vadd.f32 0.0, %v945
    %v947 = vpop.f32.mrf.mxu0
    %v948 = vadd.f32 0.0, %v947
    %949 = vmatmul.bf16.gmra.mxu0 %v806
    %v950 = vpop.f32.mrf.mxu0
    %v951 = vadd.f32 0.0, %v950
    %v952 = vpop.f32.mrf.mxu0
    %v953 = vadd.f32 0.0, %v952
    %954 = vdwg.mxu0
    %955 = vmatpush.bf16.msra.mxu0 %v919
    %956 = vmatpush.bf16.msra.mxu0 %v918
    %957 = vmatpush.bf16.msra.mxu0 %v917
    %958 = vmatpush.bf16.msra.mxu0 %v916
    %959 = vmatpush.bf16.msra.mxu0 %v915
    %960 = vmatpush.bf16.msra.mxu0 %v914
    %961 = vmatpush.bf16.msra.mxu0 %v913
    %962 = vmatpush.bf16.msra.mxu0 %v912
    %963 = vmatmul.bf16.gmra.mxu0 %v805
    %v964 = vpop.f32.mrf.mxu0
    %v965 = vadd.f32 %v946, %v964
    %v966 = vpop.f32.mrf.mxu0
    %v967 = vadd.f32 %v948, %v966
    %968 = vmatmul.bf16.gmra.mxu0 %v807
    %v969 = vpop.f32.mrf.mxu0
    %v970 = vadd.f32 %v951, %v969
    %v971 = vpop.f32.mrf.mxu0
    %v972 = vadd.f32 %v953, %v971
    %973 = vdwg.mxu0
    %v974 = vld [vmem:[%s4] sm:$0x1]
    %v976 = vperm.slane %v974, 0
    %v978 = vmul.f32 %v965, %v976
    %v979 = vmul.f32 %v967, %v976
    %v980 = vmul.f32 %v970, %v976
    %v981 = vmul.f32 %v972, %v976
    %v982 = vld [vmem:[#allocation4] sm:$0xff]
    %v983 = vld [vmem:[#allocation4 + $0x8] sm:$0xff]
    %v984 = vld [vmem:[#allocation4 + $0x10] sm:$0xff]
    %v985 = vld [vmem:[#allocation4 + $0x18] sm:$0xff]
    %vm986 = vcmask 261120
    %v988 = vsel %vm986, %v982, 0
    %v991 = vsel %vm986, %v983, 0
    %v994 = vsel %vm986, %v984, 0
    %v997 = vsel %vm986, %v985, 0
    %999 = vmatpush.msra.mxu0 0.0
    %1000 = vmatpush.msra.mxu0 0.0
    %1001 = vmatpush.msra.mxu0 0.0
    %1002 = vmatpush.msra.mxu0 0.0
    %1003 = vmatpush.msra.mxu0 0.0
    %1004 = vmatpush.msra.mxu0 0.0
    %1005 = vmatpush.msra.mxu0 0.0
    %1006 = vmatpush.msra.mxu0 0.0
    %1007 = vmatpush.msra.mxu0 0.0
    %1008 = vmatpush.msra.mxu0 0.0
    %1009 = vmatpush.msra.mxu0 0.0
    %1010 = vmatpush.msra.mxu0 0.0
    %1011 = vmatpush.msra.mxu0 %v142
    %1012 = vmatpush.msra.mxu0 %v139
    %1013 = vmatpush.msra.mxu0 %v136
    %1014 = vmatpush.msra.mxu0 %v133
    %1015 = vmatmul.f32.gmra.mxu0 %v988
    %v1016 = vpop.f32.mrf.mxu0
    %v1017 = vadd.f32 0.0, %v1016
    %1018 = vmatmul.f32.gmra.mxu0 %v991
    %v1019 = vpop.f32.mrf.mxu0
    %v1020 = vadd.f32 0.0, %v1019
    %1021 = vmatmul.f32.gmra.mxu0 %v994
    %v1022 = vpop.f32.mrf.mxu0
    %v1023 = vadd.f32 0.0, %v1022
    %1024 = vmatmul.f32.gmra.mxu0 %v997
    %v1025 = vpop.f32.mrf.mxu0
    %v1026 = vadd.f32 0.0, %v1025
    %1027 = vdwg.mxu0
    %v1028 = vadd.f32 %v978, %v1017
    %v1029 = vadd.f32 %v979, %v1020
    %v1030 = vadd.f32 %v980, %v1023
    %v1031 = vadd.f32 %v981, %v1026
    %v1032 = vld [vmem:[%s12] sm:$0xff]
    %v1033 = vld [vmem:[%s12 + $0x8] sm:$0xff]
    %v1034 = vld [vmem:[%s12 + $0x10] sm:$0xff]
    %v1035 = vld [vmem:[%s12 + $0x18] sm:$0xff]
    %1037 = vset.pattern.permute.xlu0 0
    %1038 = vperm.xlu0 %1037, %v1032
    %v1039 = vpop.permute.xlu0 %1038
    %1042 = vset.pattern.permute.xlu0 0
    %1043 = vperm.xlu0 %1042, %v1033
    %v1044 = vpop.permute.xlu0 %1043
    %1047 = vset.pattern.permute.xlu0 0
    %1048 = vperm.xlu0 %1047, %v1034
    %v1049 = vpop.permute.xlu0 %1048
    %1052 = vset.pattern.permute.xlu0 0
    %1053 = vperm.xlu0 %1052, %v1035
    %v1054 = vpop.permute.xlu0 %1053
    %v1056 = vadd.f32 %v1028, %v1039
    %v1057 = vadd.f32 %v1029, %v1044
    %v1058 = vadd.f32 %v1030, %v1049
    %v1059 = vadd.f32 %v1031, %v1054
    %v1060 = vmax.f32 %v1056, 0.0
    %v1061 = vmax.f32 %v1057, 0.0
    %v1062 = vmax.f32 %v1058, 0.0
    %v1063 = vmax.f32 %v1059, 0.0
    %v1064 = vpack.c.bf16 %v1061, %v1060
    %v1065 = vpack.c.bf16 %v1063, %v1062
    %1066 = vmatpush.bf16.msra.mxu0 %v732
    %1067 = vmatpush.bf16.msra.mxu0 %v730
    %1068 = vmatpush.bf16.msra.mxu0 %v728
    %1069 = vmatpush.bf16.msra.mxu0 %v726
    %1070 = vmatpush.bf16.msra.mxu0 %v724
    %1071 = vmatpush.bf16.msra.mxu0 %v722
    %1072 = vmatpush.bf16.msra.mxu0 %v720
    %1073 = vmatpush.bf16.msra.mxu0 %v718
    %1074 = vmatmul.bf16.gmra.mxu0 %v1064
    %v1075 = vpop.f32.mrf.mxu0
    %v1076 = vadd.f32 0.0, %v1075
    %v1077 = vpop.f32.mrf.mxu0
    %v1078 = vadd.f32 0.0, %v1077
    %1079 = vmatmul.bf16.gmra.mxu0 %v1065
    %v1080 = vpop.f32.mrf.mxu0
    %v1081 = vadd.f32 0.0, %v1080
    %v1082 = vpop.f32.mrf.mxu0
    %v1083 = vadd.f32 0.0, %v1082
    %1084 = vdwg.mxu0
    %1085 = vmatpush.bf16.msra.mxu0 %v733
    %1086 = vmatpush.bf16.msra.mxu0 %v731
    %1087 = vmatpush.bf16.msra.mxu0 %v729
    %1088 = vmatpush.bf16.msra.mxu0 %v727
    %1089 = vmatpush.bf16.msra.mxu0 %v725
    %1090 = vmatpush.bf16.msra.mxu0 %v723
    %1091 = vmatpush.bf16.msra.mxu0 %v721
    %1092 = vmatpush.bf16.msra.mxu0 %v719
    %1093 = vmatmul.bf16.gmra.mxu0 %v1064
    %v1094 = vpop.f32.mrf.mxu0
    %v1095 = vadd.f32 0.0, %v1094
    %v1096 = vpop.f32.mrf.mxu0
    %v1097 = vadd.f32 0.0, %v1096
    %1098 = vmatmul.bf16.gmra.mxu0 %v1065
    %v1099 = vpop.f32.mrf.mxu0
    %v1100 = vadd.f32 0.0, %v1099
    %v1101 = vpop.f32.mrf.mxu0
    %v1102 = vadd.f32 0.0, %v1101
    %1103 = vdwg.mxu0
    %v1104 = vld [vmem:[%s473] sm:$0xff]
    %v1105 = vld [vmem:[%s473 + $0x8] sm:$0xff]
    %v1106 = vld [vmem:[%s473 + $0x10] sm:$0xff]
    %v1107 = vld [vmem:[%s473 + $0x18] sm:$0xff]
    %v1108 = vld [vmem:[%s473 + $0x20] sm:$0xff]
    %v1109 = vld [vmem:[%s473 + $0x28] sm:$0xff]
    %v1110 = vld [vmem:[%s473 + $0x30] sm:$0xff]
    %v1111 = vld [vmem:[%s473 + $0x38] sm:$0xff]
    %v1112 = vmul.f32 %v1104, %v1076
    %v1113 = vmul.f32 %v1105, %v1095
    %v1114 = vmul.f32 %v1106, %v1078
    %v1115 = vmul.f32 %v1107, %v1097
    %v1116 = vmul.f32 %v1108, %v1081
    %v1117 = vmul.f32 %v1109, %v1100
    %v1118 = vmul.f32 %v1110, %v1083
    %v1119 = vmul.f32 %v1111, %v1102
    %v1120 = vpack.c.bf16 %v1114, %v1112
    %v1121 = vpack.c.bf16 %v1115, %v1113
    %v1122 = vpack.c.bf16 %v1118, %v1116
    %v1123 = vpack.c.bf16 %v1119, %v1117
    %1124 = vmatpush.bf16.msra.mxu0 %v911
    %1125 = vmatpush.bf16.msra.mxu0 %v910
    %1126 = vmatpush.bf16.msra.mxu0 %v909
    %1127 = vmatpush.bf16.msra.mxu0 %v908
    %1128 = vmatpush.bf16.msra.mxu0 %v907
    %1129 = vmatpush.bf16.msra.mxu0 %v906
    %1130 = vmatpush.bf16.msra.mxu0 %v905
    %1131 = vmatpush.bf16.msra.mxu0 %v904
    %1132 = vmatmul.bf16.gmra.mxu0 %v1120
    %v1133 = vpop.f32.mrf.mxu0
    %v1134 = vadd.f32 0.0, %v1133
    %v1135 = vpop.f32.mrf.mxu0
    %v1136 = vadd.f32 0.0, %v1135
    %1137 = vmatmul.bf16.gmra.mxu0 %v1122
    %v1138 = vpop.f32.mrf.mxu0
    %v1139 = vadd.f32 0.0, %v1138
    %v1140 = vpop.f32.mrf.mxu0
    %v1141 = vadd.f32 0.0, %v1140
    %1142 = vdwg.mxu0
    %1143 = vmatpush.bf16.msra.mxu0 %v919
    %1144 = vmatpush.bf16.msra.mxu0 %v918
    %1145 = vmatpush.bf16.msra.mxu0 %v917
    %1146 = vmatpush.bf16.msra.mxu0 %v916
    %1147 = vmatpush.bf16.msra.mxu0 %v915
    %1148 = vmatpush.bf16.msra.mxu0 %v914
    %1149 = vmatpush.bf16.msra.mxu0 %v913
    %1150 = vmatpush.bf16.msra.mxu0 %v912
    %1151 = vmatmul.bf16.gmra.mxu0 %v1121
    %v1152 = vpop.f32.mrf.mxu0
    %v1153 = vadd.f32 %v1134, %v1152
    %v1154 = vpop.f32.mrf.mxu0
    %v1155 = vadd.f32 %v1136, %v1154
    %1156 = vmatmul.bf16.gmra.mxu0 %v1123
    %v1157 = vpop.f32.mrf.mxu0
    %v1158 = vadd.f32 %v1139, %v1157
    %v1159 = vpop.f32.mrf.mxu0
    %v1160 = vadd.f32 %v1141, %v1159
    %1161 = vdwg.mxu0
    %v1162 = vmul.f32 %v1153, %v976
    %v1163 = vmul.f32 %v1155, %v976
    %v1164 = vmul.f32 %v1158, %v976
    %v1165 = vmul.f32 %v1160, %v976
    %s1166 = scalar_lea.vmem [#allocation4], 32
    %v1167 = vld [vmem:[%s1166] sm:$0xff]
    %v1168 = vld [vmem:[%s1166 + $0x8] sm:$0xff]
    %v1169 = vld [vmem:[%s1166 + $0x10] sm:$0xff]
    %v1170 = vld [vmem:[%s1166 + $0x18] sm:$0xff]
    %v1172 = vsel %vm986, %v1167, 0
    %v1175 = vsel %vm986, %v1168, 0
    %v1178 = vsel %vm986, %v1169, 0
    %v1181 = vsel %vm986, %v1170, 0
    %1183 = vmatpush.msra.mxu0 0.0
    %1184 = vmatpush.msra.mxu0 0.0
    %1185 = vmatpush.msra.mxu0 0.0
    %1186 = vmatpush.msra.mxu0 0.0
    %1187 = vmatpush.msra.mxu0 0.0
    %1188 = vmatpush.msra.mxu0 0.0
    %1189 = vmatpush.msra.mxu0 0.0
    %1190 = vmatpush.msra.mxu0 0.0
    %1191 = vmatpush.msra.mxu0 0.0
    %1192 = vmatpush.msra.mxu0 0.0
    %1193 = vmatpush.msra.mxu0 0.0
    %1194 = vmatpush.msra.mxu0 0.0
    %1195 = vmatpush.msra.mxu0 %v1063
    %1196 = vmatpush.msra.mxu0 %v1062
    %1197 = vmatpush.msra.mxu0 %v1061
    %1198 = vmatpush.msra.mxu0 %v1060
    %1199 = vmatmul.f32.gmra.mxu0 %v1172
    %v1200 = vpop.f32.mrf.mxu0
    %v1201 = vadd.f32 0.0, %v1200
    %1202 = vmatmul.f32.gmra.mxu0 %v1175
    %v1203 = vpop.f32.mrf.mxu0
    %v1204 = vadd.f32 0.0, %v1203
    %1205 = vmatmul.f32.gmra.mxu0 %v1178
    %v1206 = vpop.f32.mrf.mxu0
    %v1207 = vadd.f32 0.0, %v1206
    %1208 = vmatmul.f32.gmra.mxu0 %v1181
    %v1209 = vpop.f32.mrf.mxu0
    %v1210 = vadd.f32 0.0, %v1209
    %1211 = vdwg.mxu0
    %v1212 = vadd.f32 %v1162, %v1201
    %v1213 = vadd.f32 %v1163, %v1204
    %v1214 = vadd.f32 %v1164, %v1207
    %v1215 = vadd.f32 %v1165, %v1210
    %s1216 = scalar_lea.vmem %s12, 32
    %v1217 = vld [vmem:[%s1216] sm:$0xff]
    %v1218 = vld [vmem:[%s1216 + $0x8] sm:$0xff]
    %v1219 = vld [vmem:[%s1216 + $0x10] sm:$0xff]
    %v1220 = vld [vmem:[%s1216 + $0x18] sm:$0xff]
    %1222 = vset.pattern.permute.xlu0 0
    %1223 = vperm.xlu0 %1222, %v1217
    %v1224 = vpop.permute.xlu0 %1223
    %1227 = vset.pattern.permute.xlu0 0
    %1228 = vperm.xlu0 %1227, %v1218
    %v1229 = vpop.permute.xlu0 %1228
    %1232 = vset.pattern.permute.xlu0 0
    %1233 = vperm.xlu0 %1232, %v1219
    %v1234 = vpop.permute.xlu0 %1233
    %1237 = vset.pattern.permute.xlu0 0
    %1238 = vperm.xlu0 %1237, %v1220
    %v1239 = vpop.permute.xlu0 %1238
    %v1241 = vadd.f32 %v1212, %v1224
    %v1242 = vadd.f32 %v1213, %v1229
    %v1243 = vadd.f32 %v1214, %v1234
    %v1244 = vadd.f32 %v1215, %v1239
    %v1245 = vmax.f32 %v1241, 0.0
    %v1246 = vmax.f32 %v1242, 0.0
    %v1247 = vmax.f32 %v1243, 0.0
    %v1248 = vmax.f32 %v1244, 0.0
    %v1249 = vpack.c.bf16 %v1246, %v1245
    %v1250 = vpack.c.bf16 %v1248, %v1247
    %1251 = vmatpush.bf16.msra.mxu0 %v732
    %1252 = vmatpush.bf16.msra.mxu0 %v730
    %1253 = vmatpush.bf16.msra.mxu0 %v728
    %1254 = vmatpush.bf16.msra.mxu0 %v726
    %1255 = vmatpush.bf16.msra.mxu0 %v724
    %1256 = vmatpush.bf16.msra.mxu0 %v722
    %1257 = vmatpush.bf16.msra.mxu0 %v720
    %1258 = vmatpush.bf16.msra.mxu0 %v718
    %1259 = vmatmul.bf16.gmra.mxu0 %v1249
    %v1260 = vpop.f32.mrf.mxu0
    %v1261 = vadd.f32 0.0, %v1260
    %v1262 = vpop.f32.mrf.mxu0
    %v1263 = vadd.f32 0.0, %v1262
    %1264 = vmatmul.bf16.gmra.mxu0 %v1250
    %v1265 = vpop.f32.mrf.mxu0
    %v1266 = vadd.f32 0.0, %v1265
    %v1267 = vpop.f32.mrf.mxu0
    %v1268 = vadd.f32 0.0, %v1267
    %1269 = vdwg.mxu0
    %1270 = vmatpush.bf16.msra.mxu0 %v733
    %1271 = vmatpush.bf16.msra.mxu0 %v731
    %1272 = vmatpush.bf16.msra.mxu0 %v729
    %1273 = vmatpush.bf16.msra.mxu0 %v727
    %1274 = vmatpush.bf16.msra.mxu0 %v725
    %1275 = vmatpush.bf16.msra.mxu0 %v723
    %1276 = vmatpush.bf16.msra.mxu0 %v721
    %1277 = vmatpush.bf16.msra.mxu0 %v719
    %1278 = vmatmul.bf16.gmra.mxu0 %v1249
    %v1279 = vpop.f32.mrf.mxu0
    %v1280 = vadd.f32 0.0, %v1279
    %v1281 = vpop.f32.mrf.mxu0
    %v1282 = vadd.f32 0.0, %v1281
    %1283 = vmatmul.bf16.gmra.mxu0 %v1250
    %v1284 = vpop.f32.mrf.mxu0
    %v1285 = vadd.f32 0.0, %v1284
    %v1286 = vpop.f32.mrf.mxu0
    %v1287 = vadd.f32 0.0, %v1286
    %1288 = vdwg.mxu0
    %v1289 = vld [vmem:[%s643] sm:$0xff]
    %v1290 = vld [vmem:[%s643 + $0x8] sm:$0xff]
    %v1291 = vld [vmem:[%s643 + $0x10] sm:$0xff]
    %v1292 = vld [vmem:[%s643 + $0x18] sm:$0xff]
    %v1293 = vld [vmem:[%s643 + $0x20] sm:$0xff]
    %v1294 = vld [vmem:[%s643 + $0x28] sm:$0xff]
    %v1295 = vld [vmem:[%s643 + $0x30] sm:$0xff]
    %v1296 = vld [vmem:[%s643 + $0x38] sm:$0xff]
    %v1297 = vmul.f32 %v1289, %v1261
    %v1298 = vmul.f32 %v1290, %v1280
    %v1299 = vmul.f32 %v1291, %v1263
    %v1300 = vmul.f32 %v1292, %v1282
    %v1301 = vmul.f32 %v1293, %v1266
    %v1302 = vmul.f32 %v1294, %v1285
    %v1303 = vmul.f32 %v1295, %v1268
    %v1304 = vmul.f32 %v1296, %v1287
    %v1305 = vpack.c.bf16 %v1299, %v1297
    %v1306 = vpack.c.bf16 %v1300, %v1298
    %v1307 = vpack.c.bf16 %v1303, %v1301
    %v1308 = vpack.c.bf16 %v1304, %v1302
    %1309 = vmatpush.bf16.msra.mxu0 %v911
    %1310 = vmatpush.bf16.msra.mxu0 %v910
    %1311 = vmatpush.bf16.msra.mxu0 %v909
    %1312 = vmatpush.bf16.msra.mxu0 %v908
    %1313 = vmatpush.bf16.msra.mxu0 %v907
    %1314 = vmatpush.bf16.msra.mxu0 %v906
    %1315 = vmatpush.bf16.msra.mxu0 %v905
    %1316 = vmatpush.bf16.msra.mxu0 %v904
    %1317 = vmatmul.bf16.gmra.mxu0 %v1305
    %v1318 = vpop.f32.mrf.mxu0
    %v1319 = vadd.f32 0.0, %v1318
    %v1320 = vpop.f32.mrf.mxu0
    %v1321 = vadd.f32 0.0, %v1320
    %1322 = vmatmul.bf16.gmra.mxu0 %v1307
    %v1323 = vpop.f32.mrf.mxu0
    %v1324 = vadd.f32 0.0, %v1323
    %v1325 = vpop.f32.mrf.mxu0
    %v1326 = vadd.f32 0.0, %v1325
    %1327 = vdwg.mxu0
    %1328 = vmatpush.bf16.msra.mxu0 %v919
    %1329 = vmatpush.bf16.msra.mxu0 %v918
    %1330 = vmatpush.bf16.msra.mxu0 %v917
    %1331 = vmatpush.bf16.msra.mxu0 %v916
    %1332 = vmatpush.bf16.msra.mxu0 %v915
    %1333 = vmatpush.bf16.msra.mxu0 %v914
    %1334 = vmatpush.bf16.msra.mxu0 %v913
    %1335 = vmatpush.bf16.msra.mxu0 %v912
    %1336 = vmatmul.bf16.gmra.mxu0 %v1306
    %v1337 = vpop.f32.mrf.mxu0
    %v1338 = vadd.f32 %v1319, %v1337
    %v1339 = vpop.f32.mrf.mxu0
    %v1340 = vadd.f32 %v1321, %v1339
    %1341 = vmatmul.bf16.gmra.mxu0 %v1308
    %v1342 = vpop.f32.mrf.mxu0
    %v1343 = vadd.f32 %v1324, %v1342
    %v1344 = vpop.f32.mrf.mxu0
    %v1345 = vadd.f32 %v1326, %v1344
    %1346 = vdwg.mxu0
    %v1347 = vmul.f32 %v1338, %v976
    %v1348 = vmul.f32 %v1340, %v976
    %v1349 = vmul.f32 %v1343, %v976
    %v1350 = vmul.f32 %v1345, %v976
    %s1351 = scalar_lea.vmem [#allocation4], 64
    %v1352 = vld [vmem:[%s1351] sm:$0xff]
    %v1353 = vld [vmem:[%s1351 + $0x8] sm:$0xff]
    %v1354 = vld [vmem:[%s1351 + $0x10] sm:$0xff]
    %v1355 = vld [vmem:[%s1351 + $0x18] sm:$0xff]
    %v1357 = vsel %vm986, %v1352, 0
    %v1360 = vsel %vm986, %v1353, 0
    %v1363 = vsel %vm986, %v1354, 0
    %v1366 = vsel %vm986, %v1355, 0
    %1368 = vmatpush.msra.mxu0 0.0
    %1369 = vmatpush.msra.mxu0 0.0
    %1370 = vmatpush.msra.mxu0 0.0
    %1371 = vmatpush.msra.mxu0 0.0
    %1372 = vmatpush.msra.mxu0 0.0
    %1373 = vmatpush.msra.mxu0 0.0
    %1374 = vmatpush.msra.mxu0 0.0
    %1375 = vmatpush.msra.mxu0 0.0
    %1376 = vmatpush.msra.mxu0 0.0
    %1377 = vmatpush.msra.mxu0 0.0
    %1378 = vmatpush.msra.mxu0 0.0
    %1379 = vmatpush.msra.mxu0 0.0
    %1380 = vmatpush.msra.mxu0 %v1248
    %1381 = vmatpush.msra.mxu0 %v1247
    %1382 = vmatpush.msra.mxu0 %v1246
    %1383 = vmatpush.msra.mxu0 %v1245
    %1384 = vmatmul.f32.gmra.mxu0 %v1357
    %v1385 = vpop.f32.mrf.mxu0
    %v1386 = vadd.f32 0.0, %v1385
    %1387 = vmatmul.f32.gmra.mxu0 %v1360
    %v1388 = vpop.f32.mrf.mxu0
    %v1389 = vadd.f32 0.0, %v1388
    %1390 = vmatmul.f32.gmra.mxu0 %v1363
    %v1391 = vpop.f32.mrf.mxu0
    %v1392 = vadd.f32 0.0, %v1391
    %1393 = vmatmul.f32.gmra.mxu0 %v1366
    %v1394 = vpop.f32.mrf.mxu0
    %v1395 = vadd.f32 0.0, %v1394
    %1396 = vdwg.mxu0
    %v1397 = vadd.f32 %v1347, %v1386
    %v1398 = vadd.f32 %v1348, %v1389
    %v1399 = vadd.f32 %v1349, %v1392
    %v1400 = vadd.f32 %v1350, %v1395
    %s1401 = scalar_lea.vmem %s12, 64
    %v1402 = vld [vmem:[%s1401] sm:$0xff]
    %v1403 = vld [vmem:[%s1401 + $0x8] sm:$0xff]
    %v1404 = vld [vmem:[%s1401 + $0x10] sm:$0xff]
    %v1405 = vld [vmem:[%s1401 + $0x18] sm:$0xff]
    %1407 = vset.pattern.permute.xlu0 0
    %1408 = vperm.xlu0 %1407, %v1402
    %v1409 = vpop.permute.xlu0 %1408
    %1412 = vset.pattern.permute.xlu0 0
    %1413 = vperm.xlu0 %1412, %v1403
    %v1414 = vpop.permute.xlu0 %1413
    %1417 = vset.pattern.permute.xlu0 0
    %1418 = vperm.xlu0 %1417, %v1404
    %v1419 = vpop.permute.xlu0 %1418
    %1422 = vset.pattern.permute.xlu0 0
    %1423 = vperm.xlu0 %1422, %v1405
    %v1424 = vpop.permute.xlu0 %1423
    %v1426 = vadd.f32 %v1397, %v1409
    %v1427 = vadd.f32 %v1398, %v1414
    %v1428 = vadd.f32 %v1399, %v1419
    %v1429 = vadd.f32 %v1400, %v1424
    %v1430 = vmax.f32 %v1426, 0.0
    %v1431 = vmax.f32 %v1427, 0.0
    %v1432 = vmax.f32 %v1428, 0.0
    %v1433 = vmax.f32 %v1429, 0.0
    %v1434 = vpack.c.bf16 %v1431, %v1430
    %v1435 = vpack.c.bf16 %v1433, %v1432
    %1436 = vmatpush.bf16.msra.mxu0 %v732
    %1437 = vmatpush.bf16.msra.mxu0 %v730
    %1438 = vmatpush.bf16.msra.mxu0 %v728
    %1439 = vmatpush.bf16.msra.mxu0 %v726
    %1440 = vmatpush.bf16.msra.mxu0 %v724
    %1441 = vmatpush.bf16.msra.mxu0 %v722
    %1442 = vmatpush.bf16.msra.mxu0 %v720
    %1443 = vmatpush.bf16.msra.mxu0 %v718
    %1444 = vmatmul.bf16.gmra.mxu0 %v1434
    %v1445 = vpop.f32.mrf.mxu0
    %v1446 = vadd.f32 0.0, %v1445
    %v1447 = vpop.f32.mrf.mxu0
    %v1448 = vadd.f32 0.0, %v1447
    %1449 = vmatmul.bf16.gmra.mxu0 %v1435
    %v1450 = vpop.f32.mrf.mxu0
    %v1451 = vadd.f32 0.0, %v1450
    %v1452 = vpop.f32.mrf.mxu0
    %v1453 = vadd.f32 0.0, %v1452
    %1454 = vdwg.mxu0
    %1455 = vmatpush.bf16.msra.mxu0 %v733
    %1456 = vmatpush.bf16.msra.mxu0 %v731
    %1457 = vmatpush.bf16.msra.mxu0 %v729
    %1458 = vmatpush.bf16.msra.mxu0 %v727
    %1459 = vmatpush.bf16.msra.mxu0 %v725
    %1460 = vmatpush.bf16.msra.mxu0 %v723
    %1461 = vmatpush.bf16.msra.mxu0 %v721
    %1462 = vmatpush.bf16.msra.mxu0 %v719
    %1463 = vmatmul.bf16.gmra.mxu0 %v1434
    %v1464 = vpop.f32.mrf.mxu0
    %v1465 = vadd.f32 0.0, %v1464
    %v1466 = vpop.f32.mrf.mxu0
    %v1467 = vadd.f32 0.0, %v1466
    %1468 = vmatmul.bf16.gmra.mxu0 %v1435
    %v1469 = vpop.f32.mrf.mxu0
    %v1470 = vadd.f32 0.0, %v1469
    %v1471 = vpop.f32.mrf.mxu0
    %v1472 = vadd.f32 0.0, %v1471
    %1473 = vdwg.mxu0
    %v1474 = vmul.f32 %v788, %v1446
    %v1475 = vmul.f32 %v789, %v1465
    %v1476 = vmul.f32 %v790, %v1448
    %v1477 = vmul.f32 %v791, %v1467
    %v1478 = vmul.f32 %v792, %v1451
    %v1479 = vmul.f32 %v793, %v1470
    %v1480 = vmul.f32 %v794, %v1453
    %v1481 = vmul.f32 %v795, %v1472
    %v1482 = vpack.c.bf16 %v1476, %v1474
    %v1483 = vpack.c.bf16 %v1477, %v1475
    %v1484 = vpack.c.bf16 %v1480, %v1478
    %v1485 = vpack.c.bf16 %v1481, %v1479
    %1486 = vmatpush.bf16.msra.mxu0 %v911
    %1487 = vmatpush.bf16.msra.mxu0 %v910
    %1488 = vmatpush.bf16.msra.mxu0 %v909
    %1489 = vmatpush.bf16.msra.mxu0 %v908
    %1490 = vmatpush.bf16.msra.mxu0 %v907
    %1491 = vmatpush.bf16.msra.mxu0 %v906
    %1492 = vmatpush.bf16.msra.mxu0 %v905
    %1493 = vmatpush.bf16.msra.mxu0 %v904
    %1494 = vmatmul.bf16.gmra.mxu0 %v1482
    %v1495 = vpop.f32.mrf.mxu0
    %v1496 = vadd.f32 0.0, %v1495
    %v1497 = vpop.f32.mrf.mxu0
    %v1498 = vadd.f32 0.0, %v1497
    %1499 = vmatmul.bf16.gmra.mxu0 %v1484
    %v1500 = vpop.f32.mrf.mxu0
    %v1501 = vadd.f32 0.0, %v1500
    %v1502 = vpop.f32.mrf.mxu0
    %v1503 = vadd.f32 0.0, %v1502
    %1504 = vdwg.mxu0
    %1505 = vmatpush.bf16.msra.mxu0 %v919
    %1506 = vmatpush.bf16.msra.mxu0 %v918
    %1507 = vmatpush.bf16.msra.mxu0 %v917
    %1508 = vmatpush.bf16.msra.mxu0 %v916
    %1509 = vmatpush.bf16.msra.mxu0 %v915
    %1510 = vmatpush.bf16.msra.mxu0 %v914
    %1511 = vmatpush.bf16.msra.mxu0 %v913
    %1512 = vmatpush.bf16.msra.mxu0 %v912
    %1513 = vmatmul.bf16.gmra.mxu0 %v1483
    %v1514 = vpop.f32.mrf.mxu0
    %v1515 = vadd.f32 %v1496, %v1514
    %v1516 = vpop.f32.mrf.mxu0
    %v1517 = vadd.f32 %v1498, %v1516
    %1518 = vmatmul.bf16.gmra.mxu0 %v1485
    %v1519 = vpop.f32.mrf.mxu0
    %v1520 = vadd.f32 %v1501, %v1519
    %v1521 = vpop.f32.mrf.mxu0
    %v1522 = vadd.f32 %v1503, %v1521
    %1523 = vdwg.mxu0
    %v1524 = vmul.f32 %v1515, %v976
    %v1525 = vmul.f32 %v1517, %v976
    %v1526 = vmul.f32 %v1520, %v976
    %v1527 = vmul.f32 %v1522, %v976
    %1528 = vmatpush.msra.mxu0 0.0
    %1529 = vmatpush.msra.mxu0 0.0
    %1530 = vmatpush.msra.mxu0 0.0
    %1531 = vmatpush.msra.mxu0 0.0
    %1532 = vmatpush.msra.mxu0 0.0
    %1533 = vmatpush.msra.mxu0 0.0
    %1534 = vmatpush.msra.mxu0 0.0
    %1535 = vmatpush.msra.mxu0 0.0
    %1536 = vmatpush.msra.mxu0 0.0
    %1537 = vmatpush.msra.mxu0 0.0
    %1538 = vmatpush.msra.mxu0 0.0
    %1539 = vmatpush.msra.mxu0 0.0
    %1540 = vmatpush.msra.mxu0 %v1433
    %1541 = vmatpush.msra.mxu0 %v1432
    %1542 = vmatpush.msra.mxu0 %v1431
    %1543 = vmatpush.msra.mxu0 %v1430
    %1544 = vmatmul.f32.gmra.mxu0 %v988
    %v1545 = vpop.f32.mrf.mxu0
    %v1546 = vadd.f32 0.0, %v1545
    %1547 = vmatmul.f32.gmra.mxu0 %v991
    %v1548 = vpop.f32.mrf.mxu0
    %v1549 = vadd.f32 0.0, %v1548
    %1550 = vmatmul.f32.gmra.mxu0 %v994
    %v1551 = vpop.f32.mrf.mxu0
    %v1552 = vadd.f32 0.0, %v1551
    %1553 = vmatmul.f32.gmra.mxu0 %v997
    %v1554 = vpop.f32.mrf.mxu0
    %v1555 = vadd.f32 0.0, %v1554
    %1556 = vdwg.mxu0
    %v1557 = vadd.f32 %v1524, %v1546
    %v1558 = vadd.f32 %v1525, %v1549
    %v1559 = vadd.f32 %v1526, %v1552
    %v1560 = vadd.f32 %v1527, %v1555
    %v1561 = vadd.f32 %v1557, %v1039
    %v1562 = vadd.f32 %v1558, %v1044
    %v1563 = vadd.f32 %v1559, %v1049
    %v1564 = vadd.f32 %v1560, %v1054
    %v1565 = vmax.f32 %v1561, 0.0
    %v1566 = vmax.f32 %v1562, 0.0
    %v1567 = vmax.f32 %v1563, 0.0
    %v1568 = vmax.f32 %v1564, 0.0
    %v1569 = vpack.c.bf16 %v1566, %v1565
    %v1570 = vpack.c.bf16 %v1568, %v1567
    %1571 = vmatpush.bf16.msra.mxu0 %v732
    %1572 = vmatpush.bf16.msra.mxu0 %v730
    %1573 = vmatpush.bf16.msra.mxu0 %v728
    %1574 = vmatpush.bf16.msra.mxu0 %v726
    %1575 = vmatpush.bf16.msra.mxu0 %v724
    %1576 = vmatpush.bf16.msra.mxu0 %v722
    %1577 = vmatpush.bf16.msra.mxu0 %v720
    %1578 = vmatpush.bf16.msra.mxu0 %v718
    %1579 = vmatmul.bf16.gmra.mxu0 %v1569
    %v1580 = vpop.f32.mrf.mxu0
    %v1581 = vadd.f32 0.0, %v1580
    %v1582 = vpop.f32.mrf.mxu0
    %v1583 = vadd.f32 0.0, %v1582
    %1584 = vmatmul.bf16.gmra.mxu0 %v1570
    %v1585 = vpop.f32.mrf.mxu0
    %v1586 = vadd.f32 0.0, %v1585
    %v1587 = vpop.f32.mrf.mxu0
    %v1588 = vadd.f32 0.0, %v1587
    %1589 = vdwg.mxu0
    %1590 = vmatpush.bf16.msra.mxu0 %v733
    %1591 = vmatpush.bf16.msra.mxu0 %v731
    %1592 = vmatpush.bf16.msra.mxu0 %v729
    %1593 = vmatpush.bf16.msra.mxu0 %v727
    %1594 = vmatpush.bf16.msra.mxu0 %v725
    %1595 = vmatpush.bf16.msra.mxu0 %v723
    %1596 = vmatpush.bf16.msra.mxu0 %v721
    %1597 = vmatpush.bf16.msra.mxu0 %v719
    %1598 = vmatmul.bf16.gmra.mxu0 %v1569
    %v1599 = vpop.f32.mrf.mxu0
    %v1600 = vadd.f32 0.0, %v1599
    %v1601 = vpop.f32.mrf.mxu0
    %v1602 = vadd.f32 0.0, %v1601
    %1603 = vmatmul.bf16.gmra.mxu0 %v1570
    %v1604 = vpop.f32.mrf.mxu0
    %v1605 = vadd.f32 0.0, %v1604
    %v1606 = vpop.f32.mrf.mxu0
    %v1607 = vadd.f32 0.0, %v1606
    %1608 = vdwg.mxu0
    %v1609 = vmul.f32 %v1104, %v1581
    %v1610 = vmul.f32 %v1105, %v1600
    %v1611 = vmul.f32 %v1106, %v1583
    %v1612 = vmul.f32 %v1107, %v1602
    %v1613 = vmul.f32 %v1108, %v1586
    %v1614 = vmul.f32 %v1109, %v1605
    %v1615 = vmul.f32 %v1110, %v1588
    %v1616 = vmul.f32 %v1111, %v1607
    %v1617 = vpack.c.bf16 %v1611, %v1609
    %v1618 = vpack.c.bf16 %v1612, %v1610
    %v1619 = vpack.c.bf16 %v1615, %v1613
    %v1620 = vpack.c.bf16 %v1616, %v1614
    %1621 = vmatpush.bf16.msra.mxu0 %v911
    %1622 = vmatpush.bf16.msra.mxu0 %v910
    %1623 = vmatpush.bf16.msra.mxu0 %v909
    %1624 = vmatpush.bf16.msra.mxu0 %v908
    %1625 = vmatpush.bf16.msra.mxu0 %v907
    %1626 = vmatpush.bf16.msra.mxu0 %v906
    %1627 = vmatpush.bf16.msra.mxu0 %v905
    %1628 = vmatpush.bf16.msra.mxu0 %v904
    %1629 = vmatmul.bf16.gmra.mxu0 %v1617
    %v1630 = vpop.f32.mrf.mxu0
    %v1631 = vadd.f32 0.0, %v1630
    %v1632 = vpop.f32.mrf.mxu0
    %v1633 = vadd.f32 0.0, %v1632
    %1634 = vmatmul.bf16.gmra.mxu0 %v1619
    %v1635 = vpop.f32.mrf.mxu0
    %v1636 = vadd.f32 0.0, %v1635
    %v1637 = vpop.f32.mrf.mxu0
    %v1638 = vadd.f32 0.0, %v1637
    %1639 = vdwg.mxu0
    %1640 = vmatpush.bf16.msra.mxu0 %v919
    %1641 = vmatpush.bf16.msra.mxu0 %v918
    %1642 = vmatpush.bf16.msra.mxu0 %v917
    %1643 = vmatpush.bf16.msra.mxu0 %v916
    %1644 = vmatpush.bf16.msra.mxu0 %v915
    %1645 = vmatpush.bf16.msra.mxu0 %v914
    %1646 = vmatpush.bf16.msra.mxu0 %v913
    %1647 = vmatpush.bf16.msra.mxu0 %v912
    %1648 = vmatmul.bf16.gmra.mxu0 %v1618
    %v1649 = vpop.f32.mrf.mxu0
    %v1650 = vadd.f32 %v1631, %v1649
    %v1651 = vpop.f32.mrf.mxu0
    %v1652 = vadd.f32 %v1633, %v1651
    %1653 = vmatmul.bf16.gmra.mxu0 %v1620
    %v1654 = vpop.f32.mrf.mxu0
    %v1655 = vadd.f32 %v1636, %v1654
    %v1656 = vpop.f32.mrf.mxu0
    %v1657 = vadd.f32 %v1638, %v1656
    %1658 = vdwg.mxu0
    %v1659 = vmul.f32 %v1650, %v976
    %v1660 = vmul.f32 %v1652, %v976
    %v1661 = vmul.f32 %v1655, %v976
    %v1662 = vmul.f32 %v1657, %v976
    %1663 = vmatpush.msra.mxu0 0.0
    %1664 = vmatpush.msra.mxu0 0.0
    %1665 = vmatpush.msra.mxu0 0.0
    %1666 = vmatpush.msra.mxu0 0.0
    %1667 = vmatpush.msra.mxu0 0.0
    %1668 = vmatpush.msra.mxu0 0.0
    %1669 = vmatpush.msra.mxu0 0.0
    %1670 = vmatpush.msra.mxu0 0.0
    %1671 = vmatpush.msra.mxu0 0.0
    %1672 = vmatpush.msra.mxu0 0.0
    %1673 = vmatpush.msra.mxu0 0.0
    %1674 = vmatpush.msra.mxu0 0.0
    %1675 = vmatpush.msra.mxu0 %v1568
    %1676 = vmatpush.msra.mxu0 %v1567
    %1677 = vmatpush.msra.mxu0 %v1566
    %1678 = vmatpush.msra.mxu0 %v1565
    %1679 = vmatmul.f32.gmra.mxu0 %v1172
    %v1680 = vpop.f32.mrf.mxu0
    %v1681 = vadd.f32 0.0, %v1680
    %1682 = vmatmul.f32.gmra.mxu0 %v1175
    %v1683 = vpop.f32.mrf.mxu0
    %v1684 = vadd.f32 0.0, %v1683
    %1685 = vmatmul.f32.gmra.mxu0 %v1178
    %v1686 = vpop.f32.mrf.mxu0
    %v1687 = vadd.f32 0.0, %v1686
    %1688 = vmatmul.f32.gmra.mxu0 %v1181
    %v1689 = vpop.f32.mrf.mxu0
    %v1690 = vadd.f32 0.0, %v1689
    %1691 = vdwg.mxu0
    %v1692 = vadd.f32 %v1659, %v1681
    %v1693 = vadd.f32 %v1660, %v1684
    %v1694 = vadd.f32 %v1661, %v1687
    %v1695 = vadd.f32 %v1662, %v1690
    %v1696 = vadd.f32 %v1692, %v1224
    %v1697 = vadd.f32 %v1693, %v1229
    %v1698 = vadd.f32 %v1694, %v1234
    %v1699 = vadd.f32 %v1695, %v1239
    %v1700 = vmax.f32 %v1696, 0.0
    %v1701 = vmax.f32 %v1697, 0.0
    %v1702 = vmax.f32 %v1698, 0.0
    %v1703 = vmax.f32 %v1699, 0.0
    %v1704 = vpack.c.bf16 %v1701, %v1700
    %v1705 = vpack.c.bf16 %v1703, %v1702
    %1706 = vmatpush.bf16.msra.mxu0 %v732
    %1707 = vmatpush.bf16.msra.mxu0 %v730
    %1708 = vmatpush.bf16.msra.mxu0 %v728
    %1709 = vmatpush.bf16.msra.mxu0 %v726
    %1710 = vmatpush.bf16.msra.mxu0 %v724
    %1711 = vmatpush.bf16.msra.mxu0 %v722
    %1712 = vmatpush.bf16.msra.mxu0 %v720
    %1713 = vmatpush.bf16.msra.mxu0 %v718
    %1714 = vmatmul.bf16.gmra.mxu0 %v1704
    %v1715 = vpop.f32.mrf.mxu0
    %v1716 = vadd.f32 0.0, %v1715
    %v1717 = vpop.f32.mrf.mxu0
    %v1718 = vadd.f32 0.0, %v1717
    %1719 = vmatmul.bf16.gmra.mxu0 %v1705
    %v1720 = vpop.f32.mrf.mxu0
    %v1721 = vadd.f32 0.0, %v1720
    %v1722 = vpop.f32.mrf.mxu0
    %v1723 = vadd.f32 0.0, %v1722
    %1724 = vdwg.mxu0
    %1725 = vmatpush.bf16.msra.mxu0 %v733
    %1726 = vmatpush.bf16.msra.mxu0 %v731
    %1727 = vmatpush.bf16.msra.mxu0 %v729
    %1728 = vmatpush.bf16.msra.mxu0 %v727
    %1729 = vmatpush.bf16.msra.mxu0 %v725
    %1730 = vmatpush.bf16.msra.mxu0 %v723
    %1731 = vmatpush.bf16.msra.mxu0 %v721
    %1732 = vmatpush.bf16.msra.mxu0 %v719
    %1733 = vmatmul.bf16.gmra.mxu0 %v1704
    %v1734 = vpop.f32.mrf.mxu0
    %v1735 = vadd.f32 0.0, %v1734
    %v1736 = vpop.f32.mrf.mxu0
    %v1737 = vadd.f32 0.0, %v1736
    %1738 = vmatmul.bf16.gmra.mxu0 %v1705
    %v1739 = vpop.f32.mrf.mxu0
    %v1740 = vadd.f32 0.0, %v1739
    %v1741 = vpop.f32.mrf.mxu0
    %v1742 = vadd.f32 0.0, %v1741
    %1743 = vdwg.mxu0
    %v1744 = vmul.f32 %v1289, %v1716
    %v1745 = vmul.f32 %v1290, %v1735
    %v1746 = vmul.f32 %v1291, %v1718
    %v1747 = vmul.f32 %v1292, %v1737
    %v1748 = vmul.f32 %v1293, %v1721
    %v1749 = vmul.f32 %v1294, %v1740
    %v1750 = vmul.f32 %v1295, %v1723
    %v1751 = vmul.f32 %v1296, %v1742
    %v1752 = vpack.c.bf16 %v1746, %v1744
    %v1753 = vpack.c.bf16 %v1747, %v1745
    %v1754 = vpack.c.bf16 %v1750, %v1748
    %v1755 = vpack.c.bf16 %v1751, %v1749
    %1756 = vmatpush.bf16.msra.mxu0 %v911
    %1757 = vmatpush.bf16.msra.mxu0 %v910
    %1758 = vmatpush.bf16.msra.mxu0 %v909
    %1759 = vmatpush.bf16.msra.mxu0 %v908
    %1760 = vmatpush.bf16.msra.mxu0 %v907
    %1761 = vmatpush.bf16.msra.mxu0 %v906
    %1762 = vmatpush.bf16.msra.mxu0 %v905
    %1763 = vmatpush.bf16.msra.mxu0 %v904
    %1764 = vmatmul.bf16.gmra.mxu0 %v1752
    %v1765 = vpop.f32.mrf.mxu0
    %v1766 = vadd.f32 0.0, %v1765
    %v1767 = vpop.f32.mrf.mxu0
    %v1768 = vadd.f32 0.0, %v1767
    %1769 = vmatmul.bf16.gmra.mxu0 %v1754
    %v1770 = vpop.f32.mrf.mxu0
    %v1771 = vadd.f32 0.0, %v1770
    %v1772 = vpop.f32.mrf.mxu0
    %v1773 = vadd.f32 0.0, %v1772
    %1774 = vdwg.mxu0
    %1775 = vmatpush.bf16.msra.mxu0 %v919
    %1776 = vmatpush.bf16.msra.mxu0 %v918
    %1777 = vmatpush.bf16.msra.mxu0 %v917
    %1778 = vmatpush.bf16.msra.mxu0 %v916
    %1779 = vmatpush.bf16.msra.mxu0 %v915
    %1780 = vmatpush.bf16.msra.mxu0 %v914
    %1781 = vmatpush.bf16.msra.mxu0 %v913
    %1782 = vmatpush.bf16.msra.mxu0 %v912
    %1783 = vmatmul.bf16.gmra.mxu0 %v1753
    %v1784 = vpop.f32.mrf.mxu0
    %v1785 = vadd.f32 %v1766, %v1784
    %v1786 = vpop.f32.mrf.mxu0
    %v1787 = vadd.f32 %v1768, %v1786
    %1788 = vmatmul.bf16.gmra.mxu0 %v1755
    %v1789 = vpop.f32.mrf.mxu0
    %v1790 = vadd.f32 %v1771, %v1789
    %v1791 = vpop.f32.mrf.mxu0
    %v1792 = vadd.f32 %v1773, %v1791
    %1793 = vdwg.mxu0
    %v1794 = vmul.f32 %v1785, %v976
    %v1795 = vmul.f32 %v1787, %v976
    %v1796 = vmul.f32 %v1790, %v976
    %v1797 = vmul.f32 %v1792, %v976
    %1798 = vmatpush.msra.mxu0 0.0
    %1799 = vmatpush.msra.mxu0 0.0
    %1800 = vmatpush.msra.mxu0 0.0
    %1801 = vmatpush.msra.mxu0 0.0
    %1802 = vmatpush.msra.mxu0 0.0
    %1803 = vmatpush.msra.mxu0 0.0
    %1804 = vmatpush.msra.mxu0 0.0
    %1805 = vmatpush.msra.mxu0 0.0
    %1806 = vmatpush.msra.mxu0 0.0
    %1807 = vmatpush.msra.mxu0 0.0
    %1808 = vmatpush.msra.mxu0 0.0
    %1809 = vmatpush.msra.mxu0 0.0
    %1810 = vmatpush.msra.mxu0 %v1703
    %1811 = vmatpush.msra.mxu0 %v1702
    %1812 = vmatpush.msra.mxu0 %v1701
    %1813 = vmatpush.msra.mxu0 %v1700
    %1814 = vmatmul.f32.gmra.mxu0 %v1357
    %v1815 = vpop.f32.mrf.mxu0
    %v1816 = vadd.f32 0.0, %v1815
    %1817 = vmatmul.f32.gmra.mxu0 %v1360
    %v1818 = vpop.f32.mrf.mxu0
    %v1819 = vadd.f32 0.0, %v1818
    %1820 = vmatmul.f32.gmra.mxu0 %v1363
    %v1821 = vpop.f32.mrf.mxu0
    %v1822 = vadd.f32 0.0, %v1821
    %1823 = vmatmul.f32.gmra.mxu0 %v1366
    %v1824 = vpop.f32.mrf.mxu0
    %v1825 = vadd.f32 0.0, %v1824
    %1826 = vdwg.mxu0
    %v1827 = vadd.f32 %v1794, %v1816
    %v1828 = vadd.f32 %v1795, %v1819
    %v1829 = vadd.f32 %v1796, %v1822
    %v1830 = vadd.f32 %v1797, %v1825
    %v1831 = vadd.f32 %v1827, %v1409
    %v1832 = vadd.f32 %v1828, %v1414
    %v1833 = vadd.f32 %v1829, %v1419
    %v1834 = vadd.f32 %v1830, %v1424
    %v1835 = vmax.f32 %v1831, 0.0
    %v1836 = vmax.f32 %v1832, 0.0
    %v1837 = vmax.f32 %v1833, 0.0
    %v1838 = vmax.f32 %v1834, 0.0
    %v1839 = vpack.c.bf16 %v1836, %v1835
    %v1840 = vpack.c.bf16 %v1838, %v1837
    %1841 = vmatpush.bf16.msra.mxu0 %v732
    %1842 = vmatpush.bf16.msra.mxu0 %v730
    %1843 = vmatpush.bf16.msra.mxu0 %v728
    %1844 = vmatpush.bf16.msra.mxu0 %v726
    %1845 = vmatpush.bf16.msra.mxu0 %v724
    %1846 = vmatpush.bf16.msra.mxu0 %v722
    %1847 = vmatpush.bf16.msra.mxu0 %v720
    %1848 = vmatpush.bf16.msra.mxu0 %v718
    %1849 = vmatmul.bf16.gmra.mxu0 %v1839
    %v1850 = vpop.f32.mrf.mxu0
    %v1851 = vadd.f32 0.0, %v1850
    %v1852 = vpop.f32.mrf.mxu0
    %v1853 = vadd.f32 0.0, %v1852
    %1854 = vmatmul.bf16.gmra.mxu0 %v1840
    %v1855 = vpop.f32.mrf.mxu0
    %v1856 = vadd.f32 0.0, %v1855
    %v1857 = vpop.f32.mrf.mxu0
    %v1858 = vadd.f32 0.0, %v1857
    %1859 = vdwg.mxu0
    %1860 = vmatpush.bf16.msra.mxu0 %v733
    %1861 = vmatpush.bf16.msra.mxu0 %v731
    %1862 = vmatpush.bf16.msra.mxu0 %v729
    %1863 = vmatpush.bf16.msra.mxu0 %v727
    %1864 = vmatpush.bf16.msra.mxu0 %v725
    %1865 = vmatpush.bf16.msra.mxu0 %v723
    %1866 = vmatpush.bf16.msra.mxu0 %v721
    %1867 = vmatpush.bf16.msra.mxu0 %v719
    %1868 = vmatmul.bf16.gmra.mxu0 %v1839
    %v1869 = vpop.f32.mrf.mxu0
    %v1870 = vadd.f32 0.0, %v1869
    %v1871 = vpop.f32.mrf.mxu0
    %v1872 = vadd.f32 0.0, %v1871
    %1873 = vmatmul.bf16.gmra.mxu0 %v1840
    %v1874 = vpop.f32.mrf.mxu0
    %v1875 = vadd.f32 0.0, %v1874
    %v1876 = vpop.f32.mrf.mxu0
    %v1877 = vadd.f32 0.0, %v1876
    %1878 = vdwg.mxu0
    %v1879 = vmul.f32 %v788, %v1851
    %v1880 = vmul.f32 %v789, %v1870
    %v1881 = vmul.f32 %v790, %v1853
    %v1882 = vmul.f32 %v791, %v1872
    %v1883 = vmul.f32 %v792, %v1856
    %v1884 = vmul.f32 %v793, %v1875
    %v1885 = vmul.f32 %v794, %v1858
    %v1886 = vmul.f32 %v795, %v1877
    %v1887 = vpack.c.bf16 %v1881, %v1879
    %v1888 = vpack.c.bf16 %v1882, %v1880
    %v1889 = vpack.c.bf16 %v1885, %v1883
    %v1890 = vpack.c.bf16 %v1886, %v1884
    %1891 = vmatpush.bf16.msra.mxu0 %v911
    %1892 = vmatpush.bf16.msra.mxu0 %v910
    %1893 = vmatpush.bf16.msra.mxu0 %v909
    %1894 = vmatpush.bf16.msra.mxu0 %v908
    %1895 = vmatpush.bf16.msra.mxu0 %v907
    %1896 = vmatpush.bf16.msra.mxu0 %v906
    %1897 = vmatpush.bf16.msra.mxu0 %v905
    %1898 = vmatpush.bf16.msra.mxu0 %v904
    %1899 = vmatmul.bf16.gmra.mxu0 %v1887
    %v1900 = vpop.f32.mrf.mxu0
    %v1901 = vadd.f32 0.0, %v1900
    %v1902 = vpop.f32.mrf.mxu0
    %v1903 = vadd.f32 0.0, %v1902
    %1904 = vmatmul.bf16.gmra.mxu0 %v1889
    %v1905 = vpop.f32.mrf.mxu0
    %v1906 = vadd.f32 0.0, %v1905
    %v1907 = vpop.f32.mrf.mxu0
    %v1908 = vadd.f32 0.0, %v1907
    %1909 = vdwg.mxu0
    %1910 = vmatpush.bf16.msra.mxu0 %v919
    %1911 = vmatpush.bf16.msra.mxu0 %v918
    %1912 = vmatpush.bf16.msra.mxu0 %v917
    %1913 = vmatpush.bf16.msra.mxu0 %v916
    %1914 = vmatpush.bf16.msra.mxu0 %v915
    %1915 = vmatpush.bf16.msra.mxu0 %v914
    %1916 = vmatpush.bf16.msra.mxu0 %v913
    %1917 = vmatpush.bf16.msra.mxu0 %v912
    %1918 = vmatmul.bf16.gmra.mxu0 %v1888
    %v1919 = vpop.f32.mrf.mxu0
    %v1920 = vadd.f32 %v1901, %v1919
    %v1921 = vpop.f32.mrf.mxu0
    %v1922 = vadd.f32 %v1903, %v1921
    %1923 = vmatmul.bf16.gmra.mxu0 %v1890
    %v1924 = vpop.f32.mrf.mxu0
    %v1925 = vadd.f32 %v1906, %v1924
    %v1926 = vpop.f32.mrf.mxu0
    %v1927 = vadd.f32 %v1908, %v1926
    %1928 = vdwg.mxu0
    %v1929 = vmul.f32 %v1920, %v976
    %v1930 = vmul.f32 %v1922, %v976
    %v1931 = vmul.f32 %v1925, %v976
    %v1932 = vmul.f32 %v1927, %v976
    %1933 = vmatpush.msra.mxu0 0.0
    %1934 = vmatpush.msra.mxu0 0.0
    %1935 = vmatpush.msra.mxu0 0.0
    %1936 = vmatpush.msra.mxu0 0.0
    %1937 = vmatpush.msra.mxu0 0.0
    %1938 = vmatpush.msra.mxu0 0.0
    %1939 = vmatpush.msra.mxu0 0.0
    %1940 = vmatpush.msra.mxu0 0.0
    %1941 = vmatpush.msra.mxu0 0.0
    %1942 = vmatpush.msra.mxu0 0.0
    %1943 = vmatpush.msra.mxu0 0.0
    %1944 = vmatpush.msra.mxu0 0.0
    %1945 = vmatpush.msra.mxu0 %v1838
    %1946 = vmatpush.msra.mxu0 %v1837
    %1947 = vmatpush.msra.mxu0 %v1836
    %1948 = vmatpush.msra.mxu0 %v1835
    %1949 = vmatmul.f32.gmra.mxu0 %v988
    %v1950 = vpop.f32.mrf.mxu0
    %v1951 = vadd.f32 0.0, %v1950
    %1952 = vmatmul.f32.gmra.mxu0 %v991
    %v1953 = vpop.f32.mrf.mxu0
    %v1954 = vadd.f32 0.0, %v1953
    %1955 = vmatmul.f32.gmra.mxu0 %v994
    %v1956 = vpop.f32.mrf.mxu0
    %v1957 = vadd.f32 0.0, %v1956
    %1958 = vmatmul.f32.gmra.mxu0 %v997
    %v1959 = vpop.f32.mrf.mxu0
    %v1960 = vadd.f32 0.0, %v1959
    %1961 = vdwg.mxu0
    %v1962 = vadd.f32 %v1929, %v1951
    %v1963 = vadd.f32 %v1930, %v1954
    %v1964 = vadd.f32 %v1931, %v1957
    %v1965 = vadd.f32 %v1932, %v1960
    %v1966 = vadd.f32 %v1962, %v1039
    %v1967 = vadd.f32 %v1963, %v1044
    %v1968 = vadd.f32 %v1964, %v1049
    %v1969 = vadd.f32 %v1965, %v1054
    %v1970 = vmax.f32 %v1966, 0.0
    %v1971 = vmax.f32 %v1967, 0.0
    %v1972 = vmax.f32 %v1968, 0.0
    %v1973 = vmax.f32 %v1969, 0.0
    %v1974 = vpack.c.bf16 %v1971, %v1970
    %v1975 = vpack.c.bf16 %v1973, %v1972
    %1976 = vmatpush.bf16.msra.mxu0 %v732
    %1977 = vmatpush.bf16.msra.mxu0 %v730
    %1978 = vmatpush.bf16.msra.mxu0 %v728
    %1979 = vmatpush.bf16.msra.mxu0 %v726
    %1980 = vmatpush.bf16.msra.mxu0 %v724
    %1981 = vmatpush.bf16.msra.mxu0 %v722
    %1982 = vmatpush.bf16.msra.mxu0 %v720
    %1983 = vmatpush.bf16.msra.mxu0 %v718
    %1984 = vmatmul.bf16.gmra.mxu0 %v1974
    %v1985 = vpop.f32.mrf.mxu0
    %v1986 = vadd.f32 0.0, %v1985
    %v1987 = vpop.f32.mrf.mxu0
    %v1988 = vadd.f32 0.0, %v1987
    %1989 = vmatmul.bf16.gmra.mxu0 %v1975
    %v1990 = vpop.f32.mrf.mxu0
    %v1991 = vadd.f32 0.0, %v1990
    %v1992 = vpop.f32.mrf.mxu0
    %v1993 = vadd.f32 0.0, %v1992
    %1994 = vdwg.mxu0
    %1995 = vmatpush.bf16.msra.mxu0 %v733
    %1996 = vmatpush.bf16.msra.mxu0 %v731
    %1997 = vmatpush.bf16.msra.mxu0 %v729
    %1998 = vmatpush.bf16.msra.mxu0 %v727
    %1999 = vmatpush.bf16.msra.mxu0 %v725
    %2000 = vmatpush.bf16.msra.mxu0 %v723
    %2001 = vmatpush.bf16.msra.mxu0 %v721
    %2002 = vmatpush.bf16.msra.mxu0 %v719
    %2003 = vmatmul.bf16.gmra.mxu0 %v1974
    %v2004 = vpop.f32.mrf.mxu0
    %v2005 = vadd.f32 0.0, %v2004
    %v2006 = vpop.f32.mrf.mxu0
    %v2007 = vadd.f32 0.0, %v2006
    %2008 = vmatmul.bf16.gmra.mxu0 %v1975
    %v2009 = vpop.f32.mrf.mxu0
    %v2010 = vadd.f32 0.0, %v2009
    %v2011 = vpop.f32.mrf.mxu0
    %v2012 = vadd.f32 0.0, %v2011
    %2013 = vdwg.mxu0
    %v2014 = vmul.f32 %v1104, %v1986
    %v2015 = vmul.f32 %v1105, %v2005
    %v2016 = vmul.f32 %v1106, %v1988
    %v2017 = vmul.f32 %v1107, %v2007
    %v2018 = vmul.f32 %v1108, %v1991
    %v2019 = vmul.f32 %v1109, %v2010
    %v2020 = vmul.f32 %v1110, %v1993
    %v2021 = vmul.f32 %v1111, %v2012
    %v2022 = vpack.c.bf16 %v2016, %v2014
    %v2023 = vpack.c.bf16 %v2017, %v2015
    %v2024 = vpack.c.bf16 %v2020, %v2018
    %v2025 = vpack.c.bf16 %v2021, %v2019
    %2026 = vmatpush.bf16.msra.mxu0 %v911
    %2027 = vmatpush.bf16.msra.mxu0 %v910
    %2028 = vmatpush.bf16.msra.mxu0 %v909
    %2029 = vmatpush.bf16.msra.mxu0 %v908
    %2030 = vmatpush.bf16.msra.mxu0 %v907
    %2031 = vmatpush.bf16.msra.mxu0 %v906
    %2032 = vmatpush.bf16.msra.mxu0 %v905
    %2033 = vmatpush.bf16.msra.mxu0 %v904
    %2034 = vmatmul.bf16.gmra.mxu0 %v2022
    %v2035 = vpop.f32.mrf.mxu0
    %v2036 = vadd.f32 0.0, %v2035
    %v2037 = vpop.f32.mrf.mxu0
    %v2038 = vadd.f32 0.0, %v2037
    %2039 = vmatmul.bf16.gmra.mxu0 %v2024
    %v2040 = vpop.f32.mrf.mxu0
    %v2041 = vadd.f32 0.0, %v2040
    %v2042 = vpop.f32.mrf.mxu0
    %v2043 = vadd.f32 0.0, %v2042
    %2044 = vdwg.mxu0
    %2045 = vmatpush.bf16.msra.mxu0 %v919
    %2046 = vmatpush.bf16.msra.mxu0 %v918
    %2047 = vmatpush.bf16.msra.mxu0 %v917
    %2048 = vmatpush.bf16.msra.mxu0 %v916
    %2049 = vmatpush.bf16.msra.mxu0 %v915
    %2050 = vmatpush.bf16.msra.mxu0 %v914
    %2051 = vmatpush.bf16.msra.mxu0 %v913
    %2052 = vmatpush.bf16.msra.mxu0 %v912
    %2053 = vmatmul.bf16.gmra.mxu0 %v2023
    %v2054 = vpop.f32.mrf.mxu0
    %v2055 = vadd.f32 %v2036, %v2054
    %v2056 = vpop.f32.mrf.mxu0
    %v2057 = vadd.f32 %v2038, %v2056
    %2058 = vmatmul.bf16.gmra.mxu0 %v2025
    %v2059 = vpop.f32.mrf.mxu0
    %v2060 = vadd.f32 %v2041, %v2059
    %v2061 = vpop.f32.mrf.mxu0
    %v2062 = vadd.f32 %v2043, %v2061
    %2063 = vdwg.mxu0
    %v2064 = vmul.f32 %v2055, %v976
    %v2065 = vmul.f32 %v2057, %v976
    %v2066 = vmul.f32 %v2060, %v976
    %v2067 = vmul.f32 %v2062, %v976
    %2068 = vmatpush.msra.mxu0 0.0
    %2069 = vmatpush.msra.mxu0 0.0
    %2070 = vmatpush.msra.mxu0 0.0
    %2071 = vmatpush.msra.mxu0 0.0
    %2072 = vmatpush.msra.mxu0 0.0
    %2073 = vmatpush.msra.mxu0 0.0
    %2074 = vmatpush.msra.mxu0 0.0
    %2075 = vmatpush.msra.mxu0 0.0
    %2076 = vmatpush.msra.mxu0 0.0
    %2077 = vmatpush.msra.mxu0 0.0
    %2078 = vmatpush.msra.mxu0 0.0
    %2079 = vmatpush.msra.mxu0 0.0
    %2080 = vmatpush.msra.mxu0 %v1973
    %2081 = vmatpush.msra.mxu0 %v1972
    %2082 = vmatpush.msra.mxu0 %v1971
    %2083 = vmatpush.msra.mxu0 %v1970
    %2084 = vmatmul.f32.gmra.mxu0 %v1172
    %v2085 = vpop.f32.mrf.mxu0
    %v2086 = vadd.f32 0.0, %v2085
    %2087 = vmatmul.f32.gmra.mxu0 %v1175
    %v2088 = vpop.f32.mrf.mxu0
    %v2089 = vadd.f32 0.0, %v2088
    %2090 = vmatmul.f32.gmra.mxu0 %v1178
    %v2091 = vpop.f32.mrf.mxu0
    %v2092 = vadd.f32 0.0, %v2091
    %2093 = vmatmul.f32.gmra.mxu0 %v1181
    %v2094 = vpop.f32.mrf.mxu0
    %v2095 = vadd.f32 0.0, %v2094
    %2096 = vdwg.mxu0
    %v2097 = vadd.f32 %v2064, %v2086
    %v2098 = vadd.f32 %v2065, %v2089
    %v2099 = vadd.f32 %v2066, %v2092
    %v2100 = vadd.f32 %v2067, %v2095
    %v2101 = vadd.f32 %v2097, %v1224
    %v2102 = vadd.f32 %v2098, %v1229
    %v2103 = vadd.f32 %v2099, %v1234
    %v2104 = vadd.f32 %v2100, %v1239
    %v2105 = vmax.f32 %v2101, 0.0
    %v2106 = vmax.f32 %v2102, 0.0
    %v2107 = vmax.f32 %v2103, 0.0
    %v2108 = vmax.f32 %v2104, 0.0
    %v2109 = vpack.c.bf16 %v2106, %v2105
    %v2110 = vpack.c.bf16 %v2108, %v2107
    %2111 = vmatpush.bf16.msra.mxu0 %v732
    %2112 = vmatpush.bf16.msra.mxu0 %v730
    %2113 = vmatpush.bf16.msra.mxu0 %v728
    %2114 = vmatpush.bf16.msra.mxu0 %v726
    %2115 = vmatpush.bf16.msra.mxu0 %v724
    %2116 = vmatpush.bf16.msra.mxu0 %v722
    %2117 = vmatpush.bf16.msra.mxu0 %v720
    %2118 = vmatpush.bf16.msra.mxu0 %v718
    %2119 = vmatmul.bf16.gmra.mxu0 %v2109
    %v2120 = vpop.f32.mrf.mxu0
    %v2121 = vadd.f32 0.0, %v2120
    %v2122 = vpop.f32.mrf.mxu0
    %v2123 = vadd.f32 0.0, %v2122
    %2124 = vmatmul.bf16.gmra.mxu0 %v2110
    %v2125 = vpop.f32.mrf.mxu0
    %v2126 = vadd.f32 0.0, %v2125
    %v2127 = vpop.f32.mrf.mxu0
    %v2128 = vadd.f32 0.0, %v2127
    %2129 = vdwg.mxu0
    %2130 = vmatpush.bf16.msra.mxu0 %v733
    %2131 = vmatpush.bf16.msra.mxu0 %v731
    %2132 = vmatpush.bf16.msra.mxu0 %v729
    %2133 = vmatpush.bf16.msra.mxu0 %v727
    %2134 = vmatpush.bf16.msra.mxu0 %v725
    %2135 = vmatpush.bf16.msra.mxu0 %v723
    %2136 = vmatpush.bf16.msra.mxu0 %v721
    %2137 = vmatpush.bf16.msra.mxu0 %v719
    %2138 = vmatmul.bf16.gmra.mxu0 %v2109
    %v2139 = vpop.f32.mrf.mxu0
    %v2140 = vadd.f32 0.0, %v2139
    %v2141 = vpop.f32.mrf.mxu0
    %v2142 = vadd.f32 0.0, %v2141
    %2143 = vmatmul.bf16.gmra.mxu0 %v2110
    %v2144 = vpop.f32.mrf.mxu0
    %v2145 = vadd.f32 0.0, %v2144
    %v2146 = vpop.f32.mrf.mxu0
    %v2147 = vadd.f32 0.0, %v2146
    %2148 = vdwg.mxu0
    %v2149 = vmul.f32 %v1289, %v2121
    %v2150 = vmul.f32 %v1290, %v2140
    %v2151 = vmul.f32 %v1291, %v2123
    %v2152 = vmul.f32 %v1292, %v2142
    %v2153 = vmul.f32 %v1293, %v2126
    %v2154 = vmul.f32 %v1294, %v2145
    %v2155 = vmul.f32 %v1295, %v2128
    %v2156 = vmul.f32 %v1296, %v2147
    %v2157 = vpack.c.bf16 %v2151, %v2149
    %v2158 = vpack.c.bf16 %v2152, %v2150
    %v2159 = vpack.c.bf16 %v2155, %v2153
    %v2160 = vpack.c.bf16 %v2156, %v2154
    %2161 = vmatpush.bf16.msra.mxu0 %v911
    %2162 = vmatpush.bf16.msra.mxu0 %v910
    %2163 = vmatpush.bf16.msra.mxu0 %v909
    %2164 = vmatpush.bf16.msra.mxu0 %v908
    %2165 = vmatpush.bf16.msra.mxu0 %v907
    %2166 = vmatpush.bf16.msra.mxu0 %v906
    %2167 = vmatpush.bf16.msra.mxu0 %v905
    %2168 = vmatpush.bf16.msra.mxu0 %v904
    %2169 = vmatmul.bf16.gmra.mxu0 %v2157
    %v2170 = vpop.f32.mrf.mxu0
    %v2171 = vadd.f32 0.0, %v2170
    %v2172 = vpop.f32.mrf.mxu0
    %v2173 = vadd.f32 0.0, %v2172
    %2174 = vmatmul.bf16.gmra.mxu0 %v2159
    %v2175 = vpop.f32.mrf.mxu0
    %v2176 = vadd.f32 0.0, %v2175
    %v2177 = vpop.f32.mrf.mxu0
    %v2178 = vadd.f32 0.0, %v2177
    %2179 = vdwg.mxu0
    %2180 = vmatpush.bf16.msra.mxu0 %v919
    %2181 = vmatpush.bf16.msra.mxu0 %v918
    %2182 = vmatpush.bf16.msra.mxu0 %v917
    %2183 = vmatpush.bf16.msra.mxu0 %v916
    %2184 = vmatpush.bf16.msra.mxu0 %v915
    %2185 = vmatpush.bf16.msra.mxu0 %v914
    %2186 = vmatpush.bf16.msra.mxu0 %v913
    %2187 = vmatpush.bf16.msra.mxu0 %v912
    %2188 = vmatmul.bf16.gmra.mxu0 %v2158
    %v2189 = vpop.f32.mrf.mxu0
    %v2190 = vadd.f32 %v2171, %v2189
    %v2191 = vpop.f32.mrf.mxu0
    %v2192 = vadd.f32 %v2173, %v2191
    %2193 = vmatmul.bf16.gmra.mxu0 %v2160
    %v2194 = vpop.f32.mrf.mxu0
    %v2195 = vadd.f32 %v2176, %v2194
    %v2196 = vpop.f32.mrf.mxu0
    %v2197 = vadd.f32 %v2178, %v2196
    %2198 = vdwg.mxu0
    %v2199 = vmul.f32 %v2190, %v976
    %v2200 = vmul.f32 %v2192, %v976
    %v2201 = vmul.f32 %v2195, %v976
    %v2202 = vmul.f32 %v2197, %v976
    %2203 = vmatpush.msra.mxu0 0.0
    %2204 = vmatpush.msra.mxu0 0.0
    %2205 = vmatpush.msra.mxu0 0.0
    %2206 = vmatpush.msra.mxu0 0.0
    %2207 = vmatpush.msra.mxu0 0.0
    %2208 = vmatpush.msra.mxu0 0.0
    %2209 = vmatpush.msra.mxu0 0.0
    %2210 = vmatpush.msra.mxu0 0.0
    %2211 = vmatpush.msra.mxu0 0.0
    %2212 = vmatpush.msra.mxu0 0.0
    %2213 = vmatpush.msra.mxu0 0.0
    %2214 = vmatpush.msra.mxu0 0.0
    %2215 = vmatpush.msra.mxu0 %v2108
    %2216 = vmatpush.msra.mxu0 %v2107
    %2217 = vmatpush.msra.mxu0 %v2106
    %2218 = vmatpush.msra.mxu0 %v2105
    %2219 = vmatmul.f32.gmra.mxu0 %v1357
    %v2220 = vpop.f32.mrf.mxu0
    %v2221 = vadd.f32 0.0, %v2220
    %2222 = vmatmul.f32.gmra.mxu0 %v1360
    %v2223 = vpop.f32.mrf.mxu0
    %v2224 = vadd.f32 0.0, %v2223
    %2225 = vmatmul.f32.gmra.mxu0 %v1363
    %v2226 = vpop.f32.mrf.mxu0
    %v2227 = vadd.f32 0.0, %v2226
    %2228 = vmatmul.f32.gmra.mxu0 %v1366
    %v2229 = vpop.f32.mrf.mxu0
    %v2230 = vadd.f32 0.0, %v2229
    %2231 = vdwg.mxu0
    %v2232 = vadd.f32 %v2199, %v2221
    %v2233 = vadd.f32 %v2200, %v2224
    %v2234 = vadd.f32 %v2201, %v2227
    %v2235 = vadd.f32 %v2202, %v2230
    %v2236 = vadd.f32 %v2232, %v1409
    %v2237 = vadd.f32 %v2233, %v1414
    %v2238 = vadd.f32 %v2234, %v1419
    %v2239 = vadd.f32 %v2235, %v1424
    %v2240 = vmax.f32 %v2236, 0.0
    %v2241 = vmax.f32 %v2237, 0.0
    %v2242 = vmax.f32 %v2238, 0.0
    %v2243 = vmax.f32 %v2239, 0.0
    %v2244 = vpack.c.bf16 %v2241, %v2240
    %v2245 = vpack.c.bf16 %v2243, %v2242
    %2246 = vmatpush.bf16.msra.mxu0 %v732
    %2247 = vmatpush.bf16.msra.mxu0 %v730
    %2248 = vmatpush.bf16.msra.mxu0 %v728
    %2249 = vmatpush.bf16.msra.mxu0 %v726
    %2250 = vmatpush.bf16.msra.mxu0 %v724
    %2251 = vmatpush.bf16.msra.mxu0 %v722
    %2252 = vmatpush.bf16.msra.mxu0 %v720
    %2253 = vmatpush.bf16.msra.mxu0 %v718
    %2254 = vmatmul.bf16.gmra.mxu0 %v2244
    %v2255 = vpop.f32.mrf.mxu0
    %v2256 = vadd.f32 0.0, %v2255
    %v2257 = vpop.f32.mrf.mxu0
    %v2258 = vadd.f32 0.0, %v2257
    %2259 = vmatmul.bf16.gmra.mxu0 %v2245
    %v2260 = vpop.f32.mrf.mxu0
    %v2261 = vadd.f32 0.0, %v2260
    %v2262 = vpop.f32.mrf.mxu0
    %v2263 = vadd.f32 0.0, %v2262
    %2264 = vdwg.mxu0
    %2265 = vmatpush.bf16.msra.mxu0 %v733
    %2266 = vmatpush.bf16.msra.mxu0 %v731
    %2267 = vmatpush.bf16.msra.mxu0 %v729
    %2268 = vmatpush.bf16.msra.mxu0 %v727
    %2269 = vmatpush.bf16.msra.mxu0 %v725
    %2270 = vmatpush.bf16.msra.mxu0 %v723
    %2271 = vmatpush.bf16.msra.mxu0 %v721
    %2272 = vmatpush.bf16.msra.mxu0 %v719
    %2273 = vmatmul.bf16.gmra.mxu0 %v2244
    %v2274 = vpop.f32.mrf.mxu0
    %v2275 = vadd.f32 0.0, %v2274
    %v2276 = vpop.f32.mrf.mxu0
    %v2277 = vadd.f32 0.0, %v2276
    %2278 = vmatmul.bf16.gmra.mxu0 %v2245
    %v2279 = vpop.f32.mrf.mxu0
    %v2280 = vadd.f32 0.0, %v2279
    %v2281 = vpop.f32.mrf.mxu0
    %v2282 = vadd.f32 0.0, %v2281
    %2283 = vdwg.mxu0
    %v2284 = vmul.f32 %v788, %v2256
    %v2285 = vmul.f32 %v789, %v2275
    %v2286 = vmul.f32 %v790, %v2258
    %v2287 = vmul.f32 %v791, %v2277
    %v2288 = vmul.f32 %v792, %v2261
    %v2289 = vmul.f32 %v793, %v2280
    %v2290 = vmul.f32 %v794, %v2263
    %v2291 = vmul.f32 %v795, %v2282
    %v2292 = vpack.c.bf16 %v2286, %v2284
    %v2293 = vpack.c.bf16 %v2287, %v2285
    %v2294 = vpack.c.bf16 %v2290, %v2288
    %v2295 = vpack.c.bf16 %v2291, %v2289
    %2296 = vmatpush.bf16.msra.mxu0 %v911
    %2297 = vmatpush.bf16.msra.mxu0 %v910
    %2298 = vmatpush.bf16.msra.mxu0 %v909
    %2299 = vmatpush.bf16.msra.mxu0 %v908
    %2300 = vmatpush.bf16.msra.mxu0 %v907
    %2301 = vmatpush.bf16.msra.mxu0 %v906
    %2302 = vmatpush.bf16.msra.mxu0 %v905
    %2303 = vmatpush.bf16.msra.mxu0 %v904
    %2304 = vmatmul.bf16.gmra.mxu0 %v2292
    %v2305 = vpop.f32.mrf.mxu0
    %v2306 = vadd.f32 0.0, %v2305
    %v2307 = vpop.f32.mrf.mxu0
    %v2308 = vadd.f32 0.0, %v2307
    %2309 = vmatmul.bf16.gmra.mxu0 %v2294
    %v2310 = vpop.f32.mrf.mxu0
    %v2311 = vadd.f32 0.0, %v2310
    %v2312 = vpop.f32.mrf.mxu0
    %v2313 = vadd.f32 0.0, %v2312
    %2314 = vdwg.mxu0
    %2315 = vmatpush.bf16.msra.mxu0 %v919
    %2316 = vmatpush.bf16.msra.mxu0 %v918
    %2317 = vmatpush.bf16.msra.mxu0 %v917
    %2318 = vmatpush.bf16.msra.mxu0 %v916
    %2319 = vmatpush.bf16.msra.mxu0 %v915
    %2320 = vmatpush.bf16.msra.mxu0 %v914
    %2321 = vmatpush.bf16.msra.mxu0 %v913
    %2322 = vmatpush.bf16.msra.mxu0 %v912
    %2323 = vmatmul.bf16.gmra.mxu0 %v2293
    %v2324 = vpop.f32.mrf.mxu0
    %v2325 = vadd.f32 %v2306, %v2324
    %v2326 = vpop.f32.mrf.mxu0
    %v2327 = vadd.f32 %v2308, %v2326
    %2328 = vmatmul.bf16.gmra.mxu0 %v2295
    %v2329 = vpop.f32.mrf.mxu0
    %v2330 = vadd.f32 %v2311, %v2329
    %v2331 = vpop.f32.mrf.mxu0
    %v2332 = vadd.f32 %v2313, %v2331
    %2333 = vdwg.mxu0
    %v2334 = vmul.f32 %v2325, %v976
    %v2335 = vmul.f32 %v2327, %v976
    %v2336 = vmul.f32 %v2330, %v976
    %v2337 = vmul.f32 %v2332, %v976
    %2338 = vmatpush.msra.mxu0 0.0
    %2339 = vmatpush.msra.mxu0 0.0
    %2340 = vmatpush.msra.mxu0 0.0
    %2341 = vmatpush.msra.mxu0 0.0
    %2342 = vmatpush.msra.mxu0 0.0
    %2343 = vmatpush.msra.mxu0 0.0
    %2344 = vmatpush.msra.mxu0 0.0
    %2345 = vmatpush.msra.mxu0 0.0
    %2346 = vmatpush.msra.mxu0 0.0
    %2347 = vmatpush.msra.mxu0 0.0
    %2348 = vmatpush.msra.mxu0 0.0
    %2349 = vmatpush.msra.mxu0 0.0
    %2350 = vmatpush.msra.mxu0 %v2243
    %2351 = vmatpush.msra.mxu0 %v2242
    %2352 = vmatpush.msra.mxu0 %v2241
    %2353 = vmatpush.msra.mxu0 %v2240
    %2354 = vmatmul.f32.gmra.mxu0 %v988
    %v2355 = vpop.f32.mrf.mxu0
    %v2356 = vadd.f32 0.0, %v2355
    %2357 = vmatmul.f32.gmra.mxu0 %v991
    %v2358 = vpop.f32.mrf.mxu0
    %v2359 = vadd.f32 0.0, %v2358
    %2360 = vmatmul.f32.gmra.mxu0 %v994
    %v2361 = vpop.f32.mrf.mxu0
    %v2362 = vadd.f32 0.0, %v2361
    %2363 = vmatmul.f32.gmra.mxu0 %v997
    %v2364 = vpop.f32.mrf.mxu0
    %v2365 = vadd.f32 0.0, %v2364
    %2366 = vdwg.mxu0
    %v2367 = vadd.f32 %v2334, %v2356
    %v2368 = vadd.f32 %v2335, %v2359
    %v2369 = vadd.f32 %v2336, %v2362
    %v2370 = vadd.f32 %v2337, %v2365
    %v2371 = vadd.f32 %v2367, %v1039
    %v2372 = vadd.f32 %v2368, %v1044
    %v2373 = vadd.f32 %v2369, %v1049
    %v2374 = vadd.f32 %v2370, %v1054
    %v2375 = vmax.f32 %v2371, 0.0
    %v2376 = vmax.f32 %v2372, 0.0
    %v2377 = vmax.f32 %v2373, 0.0
    %v2378 = vmax.f32 %v2374, 0.0
    %v2379 = vpack.c.bf16 %v2376, %v2375
    %v2380 = vpack.c.bf16 %v2378, %v2377
    %2381 = vmatpush.bf16.msra.mxu0 %v732
    %2382 = vmatpush.bf16.msra.mxu0 %v730
    %2383 = vmatpush.bf16.msra.mxu0 %v728
    %2384 = vmatpush.bf16.msra.mxu0 %v726
    %2385 = vmatpush.bf16.msra.mxu0 %v724
    %2386 = vmatpush.bf16.msra.mxu0 %v722
    %2387 = vmatpush.bf16.msra.mxu0 %v720
    %2388 = vmatpush.bf16.msra.mxu0 %v718
    %2389 = vmatmul.bf16.gmra.mxu0 %v2379
    %v2390 = vpop.f32.mrf.mxu0
    %v2391 = vadd.f32 0.0, %v2390
    %v2392 = vpop.f32.mrf.mxu0
    %v2393 = vadd.f32 0.0, %v2392
    %2394 = vmatmul.bf16.gmra.mxu0 %v2380
    %v2395 = vpop.f32.mrf.mxu0
    %v2396 = vadd.f32 0.0, %v2395
    %v2397 = vpop.f32.mrf.mxu0
    %v2398 = vadd.f32 0.0, %v2397
    %2399 = vdwg.mxu0
    %2400 = vmatpush.bf16.msra.mxu0 %v733
    %2401 = vmatpush.bf16.msra.mxu0 %v731
    %2402 = vmatpush.bf16.msra.mxu0 %v729
    %2403 = vmatpush.bf16.msra.mxu0 %v727
    %2404 = vmatpush.bf16.msra.mxu0 %v725
    %2405 = vmatpush.bf16.msra.mxu0 %v723
    %2406 = vmatpush.bf16.msra.mxu0 %v721
    %2407 = vmatpush.bf16.msra.mxu0 %v719
    %2408 = vmatmul.bf16.gmra.mxu0 %v2379
    %v2409 = vpop.f32.mrf.mxu0
    %v2410 = vadd.f32 0.0, %v2409
    %v2411 = vpop.f32.mrf.mxu0
    %v2412 = vadd.f32 0.0, %v2411
    %2413 = vmatmul.bf16.gmra.mxu0 %v2380
    %v2414 = vpop.f32.mrf.mxu0
    %v2415 = vadd.f32 0.0, %v2414
    %v2416 = vpop.f32.mrf.mxu0
    %v2417 = vadd.f32 0.0, %v2416
    %2418 = vdwg.mxu0
    %v2419 = vmul.f32 %v1104, %v2391
    %v2420 = vmul.f32 %v1105, %v2410
    %v2421 = vmul.f32 %v1106, %v2393
    %v2422 = vmul.f32 %v1107, %v2412
    %v2423 = vmul.f32 %v1108, %v2396
    %v2424 = vmul.f32 %v1109, %v2415
    %v2425 = vmul.f32 %v1110, %v2398
    %v2426 = vmul.f32 %v1111, %v2417
    %v2427 = vpack.c.bf16 %v2421, %v2419
    %v2428 = vpack.c.bf16 %v2422, %v2420
    %v2429 = vpack.c.bf16 %v2425, %v2423
    %v2430 = vpack.c.bf16 %v2426, %v2424
    %2431 = vmatpush.bf16.msra.mxu0 %v911
    %2432 = vmatpush.bf16.msra.mxu0 %v910
    %2433 = vmatpush.bf16.msra.mxu0 %v909
    %2434 = vmatpush.bf16.msra.mxu0 %v908
    %2435 = vmatpush.bf16.msra.mxu0 %v907
    %2436 = vmatpush.bf16.msra.mxu0 %v906
    %2437 = vmatpush.bf16.msra.mxu0 %v905
    %2438 = vmatpush.bf16.msra.mxu0 %v904
    %2439 = vmatmul.bf16.gmra.mxu0 %v2427
    %v2440 = vpop.f32.mrf.mxu0
    %v2441 = vadd.f32 0.0, %v2440
    %v2442 = vpop.f32.mrf.mxu0
    %v2443 = vadd.f32 0.0, %v2442
    %2444 = vmatmul.bf16.gmra.mxu0 %v2429
    %v2445 = vpop.f32.mrf.mxu0
    %v2446 = vadd.f32 0.0, %v2445
    %v2447 = vpop.f32.mrf.mxu0
    %v2448 = vadd.f32 0.0, %v2447
    %2449 = vdwg.mxu0
    %2450 = vmatpush.bf16.msra.mxu0 %v919
    %2451 = vmatpush.bf16.msra.mxu0 %v918
    %2452 = vmatpush.bf16.msra.mxu0 %v917
    %2453 = vmatpush.bf16.msra.mxu0 %v916
    %2454 = vmatpush.bf16.msra.mxu0 %v915
    %2455 = vmatpush.bf16.msra.mxu0 %v914
    %2456 = vmatpush.bf16.msra.mxu0 %v913
    %2457 = vmatpush.bf16.msra.mxu0 %v912
    %2458 = vmatmul.bf16.gmra.mxu0 %v2428
    %v2459 = vpop.f32.mrf.mxu0
    %v2460 = vadd.f32 %v2441, %v2459
    %v2461 = vpop.f32.mrf.mxu0
    %v2462 = vadd.f32 %v2443, %v2461
    %2463 = vmatmul.bf16.gmra.mxu0 %v2430
    %v2464 = vpop.f32.mrf.mxu0
    %v2465 = vadd.f32 %v2446, %v2464
    %v2466 = vpop.f32.mrf.mxu0
    %v2467 = vadd.f32 %v2448, %v2466
    %2468 = vdwg.mxu0
    %v2469 = vmul.f32 %v2460, %v976
    %v2470 = vmul.f32 %v2462, %v976
    %v2471 = vmul.f32 %v2465, %v976
    %v2472 = vmul.f32 %v2467, %v976
    %2473 = vmatpush.msra.mxu0 0.0
    %2474 = vmatpush.msra.mxu0 0.0
    %2475 = vmatpush.msra.mxu0 0.0
    %2476 = vmatpush.msra.mxu0 0.0
    %2477 = vmatpush.msra.mxu0 0.0
    %2478 = vmatpush.msra.mxu0 0.0
    %2479 = vmatpush.msra.mxu0 0.0
    %2480 = vmatpush.msra.mxu0 0.0
    %2481 = vmatpush.msra.mxu0 0.0
    %2482 = vmatpush.msra.mxu0 0.0
    %2483 = vmatpush.msra.mxu0 0.0
    %2484 = vmatpush.msra.mxu0 0.0
    %2485 = vmatpush.msra.mxu0 %v2378
    %2486 = vmatpush.msra.mxu0 %v2377
    %2487 = vmatpush.msra.mxu0 %v2376
    %2488 = vmatpush.msra.mxu0 %v2375
    %2489 = vmatmul.f32.gmra.mxu0 %v1172
    %v2490 = vpop.f32.mrf.mxu0
    %v2491 = vadd.f32 0.0, %v2490
    %2492 = vmatmul.f32.gmra.mxu0 %v1175
    %v2493 = vpop.f32.mrf.mxu0
    %v2494 = vadd.f32 0.0, %v2493
    %2495 = vmatmul.f32.gmra.mxu0 %v1178
    %v2496 = vpop.f32.mrf.mxu0
    %v2497 = vadd.f32 0.0, %v2496
    %2498 = vmatmul.f32.gmra.mxu0 %v1181
    %v2499 = vpop.f32.mrf.mxu0
    %v2500 = vadd.f32 0.0, %v2499
    %2501 = vdwg.mxu0
    %v2502 = vadd.f32 %v2469, %v2491
    %v2503 = vadd.f32 %v2470, %v2494
    %v2504 = vadd.f32 %v2471, %v2497
    %v2505 = vadd.f32 %v2472, %v2500
    %v2506 = vadd.f32 %v2502, %v1224
    %v2507 = vadd.f32 %v2503, %v1229
    %v2508 = vadd.f32 %v2504, %v1234
    %v2509 = vadd.f32 %v2505, %v1239
    %v2510 = vmax.f32 %v2506, 0.0
    %v2511 = vmax.f32 %v2507, 0.0
    %v2512 = vmax.f32 %v2508, 0.0
    %v2513 = vmax.f32 %v2509, 0.0
    %v2514 = vpack.c.bf16 %v2511, %v2510
    %v2515 = vpack.c.bf16 %v2513, %v2512
    %2516 = vmatpush.bf16.msra.mxu0 %v732
    %2517 = vmatpush.bf16.msra.mxu0 %v730
    %2518 = vmatpush.bf16.msra.mxu0 %v728
    %2519 = vmatpush.bf16.msra.mxu0 %v726
    %2520 = vmatpush.bf16.msra.mxu0 %v724
    %2521 = vmatpush.bf16.msra.mxu0 %v722
    %2522 = vmatpush.bf16.msra.mxu0 %v720
    %2523 = vmatpush.bf16.msra.mxu0 %v718
    %2524 = vmatmul.bf16.gmra.mxu0 %v2514
    %v2525 = vpop.f32.mrf.mxu0
    %v2526 = vadd.f32 0.0, %v2525
    %v2527 = vpop.f32.mrf.mxu0
    %v2528 = vadd.f32 0.0, %v2527
    %2529 = vmatmul.bf16.gmra.mxu0 %v2515
    %v2530 = vpop.f32.mrf.mxu0
    %v2531 = vadd.f32 0.0, %v2530
    %v2532 = vpop.f32.mrf.mxu0
    %v2533 = vadd.f32 0.0, %v2532
    %2534 = vdwg.mxu0
    %2535 = vmatpush.bf16.msra.mxu0 %v733
    %2536 = vmatpush.bf16.msra.mxu0 %v731
    %2537 = vmatpush.bf16.msra.mxu0 %v729
    %2538 = vmatpush.bf16.msra.mxu0 %v727
    %2539 = vmatpush.bf16.msra.mxu0 %v725
    %2540 = vmatpush.bf16.msra.mxu0 %v723
    %2541 = vmatpush.bf16.msra.mxu0 %v721
    %2542 = vmatpush.bf16.msra.mxu0 %v719
    %2543 = vmatmul.bf16.gmra.mxu0 %v2514
    %v2544 = vpop.f32.mrf.mxu0
    %v2545 = vadd.f32 0.0, %v2544
    %v2546 = vpop.f32.mrf.mxu0
    %v2547 = vadd.f32 0.0, %v2546
    %2548 = vmatmul.bf16.gmra.mxu0 %v2515
    %v2549 = vpop.f32.mrf.mxu0
    %v2550 = vadd.f32 0.0, %v2549
    %v2551 = vpop.f32.mrf.mxu0
    %v2552 = vadd.f32 0.0, %v2551
    %2553 = vdwg.mxu0
    %v2554 = vmul.f32 %v1289, %v2526
    %v2555 = vmul.f32 %v1290, %v2545
    %v2556 = vmul.f32 %v1291, %v2528
    %v2557 = vmul.f32 %v1292, %v2547
    %v2558 = vmul.f32 %v1293, %v2531
    %v2559 = vmul.f32 %v1294, %v2550
    %v2560 = vmul.f32 %v1295, %v2533
    %v2561 = vmul.f32 %v1296, %v2552
    %v2562 = vpack.c.bf16 %v2556, %v2554
    %v2563 = vpack.c.bf16 %v2557, %v2555
    %v2564 = vpack.c.bf16 %v2560, %v2558
    %v2565 = vpack.c.bf16 %v2561, %v2559
    %2566 = vmatpush.bf16.msra.mxu0 %v911
    %2567 = vmatpush.bf16.msra.mxu0 %v910
    %2568 = vmatpush.bf16.msra.mxu0 %v909
    %2569 = vmatpush.bf16.msra.mxu0 %v908
    %2570 = vmatpush.bf16.msra.mxu0 %v907
    %2571 = vmatpush.bf16.msra.mxu0 %v906
    %2572 = vmatpush.bf16.msra.mxu0 %v905
    %2573 = vmatpush.bf16.msra.mxu0 %v904
    %2574 = vmatmul.bf16.gmra.mxu0 %v2562
    %v2575 = vpop.f32.mrf.mxu0
    %v2576 = vadd.f32 0.0, %v2575
    %v2577 = vpop.f32.mrf.mxu0
    %v2578 = vadd.f32 0.0, %v2577
    %2579 = vmatmul.bf16.gmra.mxu0 %v2564
    %v2580 = vpop.f32.mrf.mxu0
    %v2581 = vadd.f32 0.0, %v2580
    %v2582 = vpop.f32.mrf.mxu0
    %v2583 = vadd.f32 0.0, %v2582
    %2584 = vdwg.mxu0
    %2585 = vmatpush.bf16.msra.mxu0 %v919
    %2586 = vmatpush.bf16.msra.mxu0 %v918
    %2587 = vmatpush.bf16.msra.mxu0 %v917
    %2588 = vmatpush.bf16.msra.mxu0 %v916
    %2589 = vmatpush.bf16.msra.mxu0 %v915
    %2590 = vmatpush.bf16.msra.mxu0 %v914
    %2591 = vmatpush.bf16.msra.mxu0 %v913
    %2592 = vmatpush.bf16.msra.mxu0 %v912
    %2593 = vmatmul.bf16.gmra.mxu0 %v2563
    %v2594 = vpop.f32.mrf.mxu0
    %v2595 = vadd.f32 %v2576, %v2594
    %v2596 = vpop.f32.mrf.mxu0
    %v2597 = vadd.f32 %v2578, %v2596
    %2598 = vmatmul.bf16.gmra.mxu0 %v2565
    %v2599 = vpop.f32.mrf.mxu0
    %v2600 = vadd.f32 %v2581, %v2599
    %v2601 = vpop.f32.mrf.mxu0
    %v2602 = vadd.f32 %v2583, %v2601
    %2603 = vdwg.mxu0
    %v2604 = vmul.f32 %v2595, %v976
    %v2605 = vmul.f32 %v2597, %v976
    %v2606 = vmul.f32 %v2600, %v976
    %v2607 = vmul.f32 %v2602, %v976
    %2608 = vmatpush.msra.mxu0 0.0
    %2609 = vmatpush.msra.mxu0 0.0
    %2610 = vmatpush.msra.mxu0 0.0
    %2611 = vmatpush.msra.mxu0 0.0
    %2612 = vmatpush.msra.mxu0 0.0
    %2613 = vmatpush.msra.mxu0 0.0
    %2614 = vmatpush.msra.mxu0 0.0
    %2615 = vmatpush.msra.mxu0 0.0
    %2616 = vmatpush.msra.mxu0 0.0
    %2617 = vmatpush.msra.mxu0 0.0
    %2618 = vmatpush.msra.mxu0 0.0
    %2619 = vmatpush.msra.mxu0 0.0
    %2620 = vmatpush.msra.mxu0 %v2513
    %2621 = vmatpush.msra.mxu0 %v2512
    %2622 = vmatpush.msra.mxu0 %v2511
    %2623 = vmatpush.msra.mxu0 %v2510
    %2624 = vmatmul.f32.gmra.mxu0 %v1357
    %v2625 = vpop.f32.mrf.mxu0
    %v2626 = vadd.f32 0.0, %v2625
    %2627 = vmatmul.f32.gmra.mxu0 %v1360
    %v2628 = vpop.f32.mrf.mxu0
    %v2629 = vadd.f32 0.0, %v2628
    %2630 = vmatmul.f32.gmra.mxu0 %v1363
    %v2631 = vpop.f32.mrf.mxu0
    %v2632 = vadd.f32 0.0, %v2631
    %2633 = vmatmul.f32.gmra.mxu0 %v1366
    %v2634 = vpop.f32.mrf.mxu0
    %v2635 = vadd.f32 0.0, %v2634
    %2636 = vdwg.mxu0
    %v2637 = vadd.f32 %v2604, %v2626
    %v2638 = vadd.f32 %v2605, %v2629
    %v2639 = vadd.f32 %v2606, %v2632
    %v2640 = vadd.f32 %v2607, %v2635
    %v2641 = vadd.f32 %v2637, %v1409
    %v2642 = vadd.f32 %v2638, %v1414
    %v2643 = vadd.f32 %v2639, %v1419
    %v2644 = vadd.f32 %v2640, %v1424
    %v2645 = vmax.f32 %v2641, 0.0
    %v2646 = vmax.f32 %v2642, 0.0
    %v2647 = vmax.f32 %v2643, 0.0
    %v2648 = vmax.f32 %v2644, 0.0
    %v2649 = vld [vmem:[%s13] sm:$0x1]
    %v2650 = vld [vmem:[#allocation3] sm:$0x1]
    %2652 = vset.pattern.permute.xlu0 0
    %2653 = vperm.xlu0 %2652, %v2650
    %v2654 = vpop.permute.xlu0 %2653
    %v2656 = vperm.slane %v2654, 0
    %v2658 = vsel %vm986, %v2649, 0
    %2660 = vmatpush.msra.mxu0 0.0
    %2661 = vmatpush.msra.mxu0 0.0
    %2662 = vmatpush.msra.mxu0 0.0
    %2663 = vmatpush.msra.mxu0 0.0
    %2664 = vmatpush.msra.mxu0 0.0
    %2665 = vmatpush.msra.mxu0 0.0
    %2666 = vmatpush.msra.mxu0 0.0
    %2667 = vmatpush.msra.mxu0 0.0
    %2668 = vmatpush.msra.mxu0 0.0
    %2669 = vmatpush.msra.mxu0 0.0
    %2670 = vmatpush.msra.mxu0 0.0
    %2671 = vmatpush.msra.mxu0 0.0
    %2672 = vmatpush.msra.mxu0 %v2648
    %2673 = vmatpush.msra.mxu0 %v2647
    %2674 = vmatpush.msra.mxu0 %v2646
    %2675 = vmatpush.msra.mxu0 %v2645
    %2676 = vmatmul.f32.gmra.mxu0 %v2658
    %v2677 = vpop.f32.mrf.mxu0
    %v2678 = vadd.f32 %v2656, %v2677
    %2679 = vdwg.mxu0
    %2680 = vst [vmem:[#allocation7] sm:$0x1] %v2678
    // Predicated region
    $region66: #{tpu_custom_call.1} parent=1 // pred_check
      _
    $region67: #{tpu_custom_call.1} parent=1 // pred_check_branch
      %2682 = sbr.rel (0) target = $region69
    $region68: #{tpu_custom_call.1} parent=1 // pred_region
      %2684 = vsyncadd [#allocation6], 0
      %s2686 = sshll.u32 [#allocation7], 4
      %s2687 = int_to_ptr.vmem [resolvable:$true] %s2686
      %s2688 = sshll.u32 %s15, 4
      %s2689 = int_to_ptr.hbm [resolvable:$true] %s2688
      %2691 = dma.vmem_to_hbm [thread:$0]  %s2687, 16, %s2689, [#allocation6]
    $region69: #{tpu_custom_call.1} parent=1 // pred_fallthru
      _
    // Predicated region
    $region70: #{tpu_custom_call.1} parent=1 // pred_check
      _
    $region71: #{tpu_custom_call.1} parent=1 // pred_check_branch
      %2693 = sbr.rel (0) target = $region73
    $region72: #{tpu_custom_call.1} parent=1 // pred_region
      %2695 = dma.done [#allocation6], 16
    $region73: #{tpu_custom_call.1} parent=1 // pred_fallthru
      _
    %2696 = vsyncpa [#allocation5], 1
    %2697 = vsyncpa [#allocation6], 1

</llo_original>
